<compile_context>
chip_gen: v5e
topology: v5e:2x2
jax: 0.10.0
libtpu: 0.0.40
codegen_flags: <defaults>
</compile_context>

<pallas_src>
import functools
import math

import jax
import jax.numpy as jnp
import numpy as np
from jax.experimental import pallas as pl
from jax.experimental.pallas import tpu as pltpu

EPS = 1e-5        # PyTorch nn.LayerNorm default eps
FEAT_DIM = 24     # tofeature: Linear(E, 24)
OUT_W = 128       # lane-dense output slab width
VPAD = 128        # combined embedding vocab padded to a full lane group


# ----------------------------------------------------------------------------
# Fused Pallas kernel
# ----------------------------------------------------------------------------
def _layernorm(v, w, b):
    mu = jnp.mean(v, axis=-1, keepdims=True)
    var = jnp.mean((v - mu) ** 2, axis=-1, keepdims=True)
    return (v - mu) * jax.lax.rsqrt(var + EPS) * w + b


def muat_fused_kernel(idx_ref, emb_ref, wqkv_ref, wu_ref, w1t_ref, w2t_ref,
                      vec_ref, b1_ref, wf_ref, wp_ref, hv_ref, out_ref, *,
                      n_layer, heads, B, T, E, BP):
    BT = B * T
    HE = heads * E
    vpad = emb_ref.shape[0]

    # ---- embedding gather + concat fused into one lane-dense one-hot matmul -
    # idx columns: [tok, pos + v_tok, ges + v_tok + v_pos, -1 filler...]
    # (indices assumed in-range, like nn.Embedding; no bounds check in-kernel)
    lane = jax.lax.broadcasted_iota(jnp.int32, (BT, vpad), 1)
    oh = ((lane == idx_ref[:, 0:1]).astype(jnp.float32)
          + (lane == idx_ref[:, 1:2]).astype(jnp.float32)
          + (lane == idx_ref[:, 2:3]).astype(jnp.float32))
    x = jnp.dot(oh, emb_ref[...], preferred_element_type=jnp.float32)   # (BT, E)

    scale = 1.0 / math.sqrt(E)

    # ---- transformer blocks (weights stacked along the leading axis) --------
    for l in range(n_layer):
        vec = vec_ref[l]                      # (8, E): bu, b2, ln1w, ln1b, ln2w, ln2b
        bu, b2 = vec[0:1, :], vec[1:2, :]
        ln1w, ln1b = vec[2:3, :], vec[3:4, :]
        ln2w, ln2b = vec[4:5, :], vec[5:6, :]
        wu_l = wu_ref[l]                      # (HE, E)

        # fused QKV projection: one 128-lane-dense matmul per layer
        qkv = jnp.dot(x, wqkv_ref[l], preferred_element_type=jnp.float32)  # (BT, 3*HE)
        q_h = [qkv[:, h * E:(h + 1) * E] for h in range(heads)]
        k_h = [qkv[:, HE + h * E: HE + (h + 1) * E] for h in range(heads)]
        v_h = [qkv[:, 2 * HE + h * E: 2 * HE + (h + 1) * E] for h in range(heads)]

        # all (b, h) score blocks, stacked along sublanes for one softmax pass
        s_blocks = []
        for b in range(B):
            r0 = b * T
            for h in range(heads):
                s = jax.lax.dot_general(
                    q_h[h][r0:r0 + T, :], k_h[h][r0:r0 + T, :],
                    (((1,), (1,)), ((), ())),
                    preferred_element_type=jnp.float32)                     # (T, T)
                s_blocks.append(s * scale)
        s_all = jnp.concatenate(s_blocks, axis=0)                           # (B*H*T, T)
        s_all = s_all - jnp.max(s_all, axis=-1, keepdims=True)
        p_all = jnp.exp(s_all)
        p_all = p_all * pl.reciprocal(jnp.sum(p_all, axis=-1, keepdims=True),
                                      approx=True)

        # per-head attention output folded into per-head unifyheads accumulation
        att_rows = []
        for b in range(B):
            r0 = b * T
            acc = None
            for h in range(heads):
                blk = (b * heads + h) * T
                o_bh = jnp.dot(p_all[blk:blk + T, :], v_h[h][r0:r0 + T, :],
                               preferred_element_type=jnp.float32)          # (T, E)
                term = jnp.dot(o_bh, wu_l[h * E:(h + 1) * E, :],
                               preferred_element_type=jnp.float32)          # (T, E)
                acc = term if acc is None else acc + term
            att_rows.append(acc)
        attended = jnp.concatenate(att_rows, axis=0) + bu                   # (BT, E)

        x1 = _layernorm(attended + x, ln1w, ln1b)
        hid = jnp.maximum(
            jnp.dot(x1, w1t_ref[l], preferred_element_type=jnp.float32) + b1_ref[l],
            0.0)
        ff = jnp.dot(hid, w2t_ref[l], preferred_element_type=jnp.float32) + b2
        x = _layernorm(ff + x1, ln2w, ln2b)

    # ---- mean-pool as a matmul against a constant pooling matrix ------------
    row_i = jax.lax.broadcasted_iota(jnp.int32, (BP, BT), 0)
    col_i = jax.lax.broadcasted_iota(jnp.int32, (BP, BT), 1)
    sel = (col_i >= row_i * T) & (col_i < (row_i + 1) * T)
    pool = sel.astype(jnp.float32) * (1.0 / T)                              # (BP, BT)
    xm = jnp.dot(pool, x, preferred_element_type=jnp.float32)               # (BP, E)

    # ---- classification head (weights pre-padded to 128 lanes) --------------
    feat = jnp.maximum(
        jnp.dot(xm, wf_ref[...], preferred_element_type=jnp.float32) + hv_ref[0:1, :],
        0.0)                                                                # (BP, 128)
    logits = (jnp.dot(feat, wp_ref[...], preferred_element_type=jnp.float32)
              + hv_ref[1:2, :])                                             # (BP, 128)
    out_ref[0] = feat
    out_ref[1] = logits


# ----------------------------------------------------------------------------
# One-time weight prep (hoisted out of the per-call path)
# ----------------------------------------------------------------------------
def prepare_params(params, *, heads):
    tok_emb = jnp.asarray(params["tok_emb"], jnp.float32)
    pos_emb = jnp.asarray(params["pos_emb"], jnp.float32)
    ges_emb = jnp.asarray(params["ges_emb"], jnp.float32)
    v_tok, e_tok = tok_emb.shape
    v_pos, e_pos = pos_emb.shape
    v_ges, e_ges = ges_emb.shape
    E = e_tok + e_pos + e_ges
    v_tot = v_tok + v_pos + v_ges
    assert v_tot <= VPAD, "combined vocab must fit in one 128-lane group"

    # Combined [token | position | ges] table laid out block-wise, padded to
    # 128 rows so the in-kernel one-hot is fully lane-dense.
    emb = jnp.zeros((VPAD, E), jnp.float32)
    emb = emb.at[:v_tok, :e_tok].set(tok_emb)
    emb = emb.at[v_tok:v_tok + v_pos, e_tok:e_tok + e_pos].set(pos_emb)
    emb = emb.at[v_tok + v_pos:v_tot, e_tok + e_pos:].set(ges_emb)

    layers = params["layers"]
    L = len(layers)
    # fused, pre-transposed QKV weight: (L, E, 3*H*E)
    wqkv = jnp.stack([jnp.concatenate(
        [layers[l]["wq"].T, layers[l]["wk"].T, layers[l]["wv"].T], axis=1)
        for l in range(L)]).astype(jnp.float32)
    wu = jnp.stack([layers[l]["wu"].T for l in range(L)]).astype(jnp.float32)   # (L, H*E, E)
    w1t = jnp.stack([layers[l]["w1"].T for l in range(L)]).astype(jnp.float32)  # (L, E, 4E)
    w2t = jnp.stack([layers[l]["w2"].T for l in range(L)]).astype(jnp.float32)  # (L, 4E, E)

    zE = jnp.zeros((E,), jnp.float32)
    vecs = jnp.stack([jnp.stack([layers[l]["bu"], layers[l]["b2"],
                                 layers[l]["ln1w"], layers[l]["ln1b"],
                                 layers[l]["ln2w"], layers[l]["ln2b"], zE, zE])
                      for l in range(L)]).astype(jnp.float32)                   # (L, 8, E)
    b1s = jnp.stack([layers[l]["b1"].reshape(1, -1)
                     for l in range(L)]).astype(jnp.float32)                    # (L, 1, 4E)

    head = params["head"]
    num_class = head["wp"].shape[0]
    assert FEAT_DIM <= OUT_W and num_class <= OUT_W
    wf = jnp.zeros((E, OUT_W), jnp.float32).at[:, :FEAT_DIM].set(head["wf"].T)
    wp = jnp.zeros((OUT_W, OUT_W), jnp.float32).at[:FEAT_DIM, :num_class].set(head["wp"].T)
    hv = jnp.zeros((8, OUT_W), jnp.float32)
    hv = hv.at[0, :FEAT_DIM].set(head["bf"]).at[1, :num_class].set(head["bp"])

    return dict(emb=emb, wqkv=wqkv, wu=wu, w1t=w1t, w2t=w2t, vecs=vecs, b1s=b1s,
                wf=wf, wp=wp, hv=hv,
                meta=dict(E=E, heads=heads, L=L, v_tok=v_tok, v_pos=v_pos,
                          num_class=num_class))


# ----------------------------------------------------------------------------
# Per-call forward: index packing + single pallas_call
# ----------------------------------------------------------------------------
def muat_position_gesf_forward(x_tokens, prepped, targets=None):
    """JAX/Pallas forward of MuAtMotifPositionGESF (inference, targets=None)."""
    m = prepped["meta"]
    B, _, T = x_tokens.shape
    BT = B * T
    BP = max(8, ((B + 7) // 8) * 8)   # output rows padded to a sublane multiple

    tok = x_tokens[:, 0, :].reshape(BT).astype(jnp.int32)
    pos = x_tokens[:, 1, :].reshape(BT).astype(jnp.int32) + m["v_tok"]
    ges = x_tokens[:, 2, :].reshape(BT).astype(jnp.int32) + m["v_tok"] + m["v_pos"]
    idx = jnp.concatenate(
        [tok[:, None], pos[:, None], ges[:, None],
         jnp.full((BT, 5), -1, jnp.int32)], axis=1)                        # (BT, 8)

    kernel = functools.partial(
        muat_fused_kernel, n_layer=m["L"], heads=m["heads"],
        B=B, T=T, E=m["E"], BP=BP)

    inputs = (idx, prepped["emb"], prepped["wqkv"], prepped["wu"], prepped["w1t"],
              prepped["w2t"], prepped["vecs"], prepped["b1s"], prepped["wf"],
              prepped["wp"], prepped["hv"])

    slab = pl.pallas_call(
        kernel,
        out_shape=jax.ShapeDtypeStruct((2, BP, OUT_W), jnp.float32),
        in_specs=[pl.BlockSpec(memory_space=pltpu.MemorySpace.VMEM)] * len(inputs),
        out_specs=pl.BlockSpec(memory_space=pltpu.MemorySpace.VMEM),
    )(*inputs)

    feature = slab[0, :B, :FEAT_DIM]
    logits = slab[1, :B, :m["num_class"]]
    logits_feats = {"first_logits": logits, "first_features": feature}
    loss = None  # TODO(synk): cross-entropy branch (targets is not None) not implemented.
    return logits_feats, loss


# ----------------------------------------------------------------------------
# Deterministic parameter init + pure-JAX reference
# ----------------------------------------------------------------------------
def init_params(key, *, motif_size, position_size, ges_size, n_embd,
                heads, n_layer, num_class):
    E = n_embd + n_embd + 4
    keys = iter(jax.random.split(key, 16 * n_layer + 16))

    def rnd(shape, scale=0.05):
        return (scale * jax.random.normal(next(keys), shape)).astype(jnp.float32)

    tok_emb = rnd((motif_size, n_embd), 1.0).at[0].set(0.0)      # padding_idx=0
    pos_emb = rnd((position_size, n_embd), 1.0).at[0].set(0.0)   # padding_idx=0
    ges_emb = rnd((ges_size + 1, 4), 1.0).at[0].set(0.0)         # padding_idx=0

    layers = []
    for _ in range(n_layer):
        layers.append(dict(
            wq=rnd((heads * E, E)), wk=rnd((heads * E, E)), wv=rnd((heads * E, E)),
            wu=rnd((E, heads * E)), bu=rnd((E,)),
            ln1w=1.0 + rnd((E,), 0.1), ln1b=rnd((E,), 0.1),
            w1=rnd((4 * E, E)), b1=rnd((4 * E,)),
            w2=rnd((E, 4 * E)), b2=rnd((E,)),
            ln2w=1.0 + rnd((E,), 0.1), ln2b=rnd((E,), 0.1),
        ))

    head = dict(
        wf=rnd((FEAT_DIM, E)), bf=rnd((FEAT_DIM,)),
        wp=rnd((num_class, FEAT_DIM)), bp=rnd((num_class,)),
    )
    return dict(tok_emb=tok_emb, pos_emb=pos_emb, ges_emb=ges_emb,
                layers=layers, head=head)


def reference_forward(x_tokens, params, heads):
    def ln(v, w, b):
        mu = v.mean(-1, keepdims=True)
        var = ((v - mu) ** 2).mean(-1, keepdims=True)
        return (v - mu) / jnp.sqrt(var + EPS) * w + b

    tok = x_tokens[:, 0, :]
    pos = x_tokens[:, 1, :]
    ges = x_tokens[:, 2, :]
    x = jnp.concatenate([params["tok_emb"][tok],
                         params["pos_emb"][pos],
                         params["ges_emb"][ges]], axis=-1)
    B, T, E = x.shape
    for p in params["layers"]:
        q = (x @ p["wq"].T).reshape(B, T, heads, E).transpose(0, 2, 1, 3)
        k = (x @ p["wk"].T).reshape(B, T, heads, E).transpose(0, 2, 1, 3)
        v = (x @ p["wv"].T).reshape(B, T, heads, E).transpose(0, 2, 1, 3)
        dot = jnp.einsum("bhte,bhse->bhts", q, k) / math.sqrt(E)
        att = jax.nn.softmax(dot, axis=-1)
        out = (jnp.einsum("bhts,bhse->bhte", att, v)
               .transpose(0, 2, 1, 3).reshape(B, T, heads * E))
        attended = out @ p["wu"].T + p["bu"]
        x1 = ln(attended + x, p["ln1w"], p["ln1b"])
        ff = jnp.maximum(x1 @ p["w1"].T + p["b1"], 0.0) @ p["w2"].T + p["b2"]
        x = ln(ff + x1, p["ln2w"], p["ln2b"])
    xm = x.mean(axis=1)
    h = params["head"]
    feature = jnp.maximum(xm @ h["wf"].T + h["bf"], 0.0)
    logits = feature @ h["wp"].T + h["bp"]
    return feature, logits


# ----------------------------------------------------------------------------
if __name__ == "__main__":
    # small config consistent with the module
    motif_size = 32        # token vocab
    position_size = 16     # position vocab
    ges_size = 4           # ges vocab = ges_size + 1
    n_embd = 14            # concat embedding dim E = 14 + 14 + 4 = 32
    n_head = 4             # heads * E = 128 (matches MXU lane width)
    n_layer = 2
    seq_len = 8            # mutation_sampling_size
    num_class = 4
    batch = 2

    key = jax.random.PRNGKey(0)
    k_par, k1, k2, k3 = jax.random.split(key, 4)
    params = init_params(k_par, motif_size=motif_size, position_size=position_size,
                         ges_size=ges_size, n_embd=n_embd, heads=n_head,
                         n_layer=n_layer, num_class=num_class)

    # input tokens: (B, 3 channels, T) -> [triplettoken, postoken, gestoken]
    triplet = jax.random.randint(k1, (batch, seq_len), 0, motif_size, dtype=jnp.int32)
    postok = jax.random.randint(k2, (batch, seq_len), 0, position_size, dtype=jnp.int32)
    gestok = jax.random.randint(k3, (batch, seq_len), 0, ges_size + 1, dtype=jnp.int32)
    x_tokens = jnp.stack([triplet, postok, gestok], axis=1)

    # weight prep hoisted out of the per-call path (do once, reuse)
    prepped = prepare_params(params, heads=n_head)

    logits_feats, loss = muat_position_gesf_forward(x_tokens, prepped)
    jax.block_until_ready(logits_feats)

    # cross-check against a pure-JAX reference
    ref_feature, ref_logits = reference_forward(x_tokens, params, n_head)
    np.testing.assert_allclose(np.asarray(logits_feats["first_features"]),
                               np.asarray(ref_feature), rtol=2e-3, atol=2e-3)
    np.testing.assert_allclose(np.asarray(logits_feats["first_logits"]),
                               np.asarray(ref_logits), rtol=2e-3, atol=2e-3)
    assert loss is None
    print("KERNEL_OK")
</pallas_src>

<mosaic_0001>
module attributes {stable_mosaic.version = 11 : i64} {
  func.func @muat_fused_kernel(%arg0: memref<16x8xi32, #tpu.memory_space<vmem>>, %arg1: memref<128x32xf32, #tpu.memory_space<vmem>>, %arg2: memref<2x32x384xf32, #tpu.memory_space<vmem>>, %arg3: memref<2x128x32xf32, #tpu.memory_space<vmem>>, %arg4: memref<2x32x128xf32, #tpu.memory_space<vmem>>, %arg5: memref<2x128x32xf32, #tpu.memory_space<vmem>>, %arg6: memref<2x8x32xf32, #tpu.memory_space<vmem>>, %arg7: memref<2x1x128xf32, #tpu.memory_space<vmem>>, %arg8: memref<32x128xf32, #tpu.memory_space<vmem>>, %arg9: memref<128x128xf32, #tpu.memory_space<vmem>>, %arg10: memref<8x128xf32, #tpu.memory_space<vmem>>, %arg11: memref<2x8x128xf32, #tpu.memory_space<vmem>>) attributes {dimension_semantics = [], scalar_prefetch = 0 : i64, scratch_operands = 0 : i64, tpu.core_type = #tpu.core_type<tc>} {
    %0 = tpu.iota {dimensions = array<i32: 1>} : vector<16x128xi32>
    %c0 = arith.constant 0 : index
    %c0_0 = arith.constant 0 : index
    %1 = vector.load %arg0[%c0, %c0_0] : memref<16x8xi32, #tpu.memory_space<vmem>>, vector<16x1xi32>
    %2 = vector.broadcast %1 : vector<16x1xi32> to vector<16x128xi32>
    %3 = arith.cmpi eq, %0, %2 : vector<16x128xi32>
    %4 = arith.extui %3 : vector<16x128xi1> to vector<16x128xi32>
    %5 = arith.sitofp %4 : vector<16x128xi32> to vector<16x128xf32>
    %c0_1 = arith.constant 0 : index
    %c1 = arith.constant 1 : index
    %6 = vector.load %arg0[%c0_1, %c1] : memref<16x8xi32, #tpu.memory_space<vmem>>, vector<16x1xi32>
    %7 = vector.broadcast %6 : vector<16x1xi32> to vector<16x128xi32>
    %8 = arith.cmpi eq, %0, %7 : vector<16x128xi32>
    %9 = arith.extui %8 : vector<16x128xi1> to vector<16x128xi32>
    %10 = arith.sitofp %9 : vector<16x128xi32> to vector<16x128xf32>
    %11 = arith.addf %5, %10 : vector<16x128xf32>
    %c0_2 = arith.constant 0 : index
    %c2 = arith.constant 2 : index
    %12 = vector.load %arg0[%c0_2, %c2] : memref<16x8xi32, #tpu.memory_space<vmem>>, vector<16x1xi32>
    %13 = vector.broadcast %12 : vector<16x1xi32> to vector<16x128xi32>
    %14 = arith.cmpi eq, %0, %13 : vector<16x128xi32>
    %15 = arith.extui %14 : vector<16x128xi1> to vector<16x128xi32>
    %16 = arith.sitofp %15 : vector<16x128xi32> to vector<16x128xf32>
    %17 = arith.addf %11, %16 : vector<16x128xf32>
    %c0_3 = arith.constant 0 : index
    %c0_4 = arith.constant 0 : index
    %18 = vector.load %arg1[%c0_3, %c0_4] : memref<128x32xf32, #tpu.memory_space<vmem>>, vector<128x32xf32>
    %cst = arith.constant dense<0.000000e+00> : vector<16x32xf32>
    %19 = tpu.matmul %17, %18, %cst {dimension_numbers = #tpu.dot_dimension_numbers<[1], [0], [0], [1], [0, 0, 1, 1], [], []>} : vector<16x128xf32>, vector<128x32xf32>, vector<16x32xf32> -> vector<16x32xf32>
    %c0_5 = arith.constant 0 : index
    %c0_6 = arith.constant 0 : index
    %c0_7 = arith.constant 0 : index
    %20 = vector.load %arg6[%c0_5, %c0_6, %c0_7] : memref<2x8x32xf32, #tpu.memory_space<vmem>>, vector<1x8x32xf32>
    %21 = vector.shape_cast %20 : vector<1x8x32xf32> to vector<8x32xf32>
    %22 = vector.extract_strided_slice %21 {offsets = [0, 0], sizes = [1, 32], strides = [1, 1]} : vector<8x32xf32> to vector<1x32xf32>
    %23 = vector.extract_strided_slice %21 {offsets = [1, 0], sizes = [1, 32], strides = [1, 1]} : vector<8x32xf32> to vector<1x32xf32>
    %24 = vector.extract_strided_slice %21 {offsets = [2, 0], sizes = [1, 32], strides = [1, 1]} : vector<8x32xf32> to vector<1x32xf32>
    %25 = vector.extract_strided_slice %21 {offsets = [3, 0], sizes = [1, 32], strides = [1, 1]} : vector<8x32xf32> to vector<1x32xf32>
    %26 = vector.extract_strided_slice %21 {offsets = [4, 0], sizes = [1, 32], strides = [1, 1]} : vector<8x32xf32> to vector<1x32xf32>
    %27 = vector.extract_strided_slice %21 {offsets = [5, 0], sizes = [1, 32], strides = [1, 1]} : vector<8x32xf32> to vector<1x32xf32>
    %c0_8 = arith.constant 0 : index
    %c0_9 = arith.constant 0 : index
    %c0_10 = arith.constant 0 : index
    %28 = vector.load %arg3[%c0_8, %c0_9, %c0_10] : memref<2x128x32xf32, #tpu.memory_space<vmem>>, vector<1x128x32xf32>
    %29 = vector.shape_cast %28 : vector<1x128x32xf32> to vector<128x32xf32>
    %c0_11 = arith.constant 0 : index
    %c0_12 = arith.constant 0 : index
    %c0_13 = arith.constant 0 : index
    %30 = vector.load %arg2[%c0_11, %c0_12, %c0_13] : memref<2x32x384xf32, #tpu.memory_space<vmem>>, vector<1x32x384xf32>
    %31 = vector.shape_cast %30 : vector<1x32x384xf32> to vector<32x384xf32>
    %cst_14 = arith.constant dense<0.000000e+00> : vector<16x384xf32>
    %32 = tpu.matmul %19, %31, %cst_14 {dimension_numbers = #tpu.dot_dimension_numbers<[1], [0], [0], [1], [0, 0, 1, 1], [], []>} : vector<16x32xf32>, vector<32x384xf32>, vector<16x384xf32> -> vector<16x384xf32>
    %33 = vector.extract_strided_slice %32 {offsets = [0, 0], sizes = [16, 32], strides = [1, 1]} : vector<16x384xf32> to vector<16x32xf32>
    %34 = vector.extract_strided_slice %32 {offsets = [0, 32], sizes = [16, 32], strides = [1, 1]} : vector<16x384xf32> to vector<16x32xf32>
    %35 = vector.extract_strided_slice %32 {offsets = [0, 64], sizes = [16, 32], strides = [1, 1]} : vector<16x384xf32> to vector<16x32xf32>
    %36 = vector.extract_strided_slice %32 {offsets = [0, 96], sizes = [16, 32], strides = [1, 1]} : vector<16x384xf32> to vector<16x32xf32>
    %37 = vector.extract_strided_slice %32 {offsets = [0, 128], sizes = [16, 32], strides = [1, 1]} : vector<16x384xf32> to vector<16x32xf32>
    %38 = vector.extract_strided_slice %32 {offsets = [0, 160], sizes = [16, 32], strides = [1, 1]} : vector<16x384xf32> to vector<16x32xf32>
    %39 = vector.extract_strided_slice %32 {offsets = [0, 192], sizes = [16, 32], strides = [1, 1]} : vector<16x384xf32> to vector<16x32xf32>
    %40 = vector.extract_strided_slice %32 {offsets = [0, 224], sizes = [16, 32], strides = [1, 1]} : vector<16x384xf32> to vector<16x32xf32>
    %41 = vector.extract_strided_slice %32 {offsets = [0, 256], sizes = [16, 32], strides = [1, 1]} : vector<16x384xf32> to vector<16x32xf32>
    %42 = vector.extract_strided_slice %32 {offsets = [0, 288], sizes = [16, 32], strides = [1, 1]} : vector<16x384xf32> to vector<16x32xf32>
    %43 = vector.extract_strided_slice %32 {offsets = [0, 320], sizes = [16, 32], strides = [1, 1]} : vector<16x384xf32> to vector<16x32xf32>
    %44 = vector.extract_strided_slice %32 {offsets = [0, 352], sizes = [16, 32], strides = [1, 1]} : vector<16x384xf32> to vector<16x32xf32>
    %45 = vector.extract_strided_slice %33 {offsets = [0, 0], sizes = [8, 32], strides = [1, 1]} : vector<16x32xf32> to vector<8x32xf32>
    %46 = vector.extract_strided_slice %37 {offsets = [0, 0], sizes = [8, 32], strides = [1, 1]} : vector<16x32xf32> to vector<8x32xf32>
    %cst_15 = arith.constant dense<0.000000e+00> : vector<8x8xf32>
    %47 = tpu.matmul %45, %46, %cst_15 {dimension_numbers = #tpu.dot_dimension_numbers<[1], [1], [0], [0], [0, 0, 1, 0], [], []>} : vector<8x32xf32>, vector<8x32xf32>, vector<8x8xf32> -> vector<8x8xf32>
    %cst_16 = arith.constant 0.176776692 : f32
    %48 = vector.broadcast %cst_16 : f32 to vector<8x8xf32>
    %49 = arith.mulf %47, %48 : vector<8x8xf32>
    %50 = vector.extract_strided_slice %34 {offsets = [0, 0], sizes = [8, 32], strides = [1, 1]} : vector<16x32xf32> to vector<8x32xf32>
    %51 = vector.extract_strided_slice %38 {offsets = [0, 0], sizes = [8, 32], strides = [1, 1]} : vector<16x32xf32> to vector<8x32xf32>
    %cst_17 = arith.constant dense<0.000000e+00> : vector<8x8xf32>
    %52 = tpu.matmul %50, %51, %cst_17 {dimension_numbers = #tpu.dot_dimension_numbers<[1], [1], [0], [0], [0, 0, 1, 0], [], []>} : vector<8x32xf32>, vector<8x32xf32>, vector<8x8xf32> -> vector<8x8xf32>
    %cst_18 = arith.constant 0.176776692 : f32
    %53 = vector.broadcast %cst_18 : f32 to vector<8x8xf32>
    %54 = arith.mulf %52, %53 : vector<8x8xf32>
    %55 = vector.extract_strided_slice %35 {offsets = [0, 0], sizes = [8, 32], strides = [1, 1]} : vector<16x32xf32> to vector<8x32xf32>
    %56 = vector.extract_strided_slice %39 {offsets = [0, 0], sizes = [8, 32], strides = [1, 1]} : vector<16x32xf32> to vector<8x32xf32>
    %cst_19 = arith.constant dense<0.000000e+00> : vector<8x8xf32>
    %57 = tpu.matmul %55, %56, %cst_19 {dimension_numbers = #tpu.dot_dimension_numbers<[1], [1], [0], [0], [0, 0, 1, 0], [], []>} : vector<8x32xf32>, vector<8x32xf32>, vector<8x8xf32> -> vector<8x8xf32>
    %cst_20 = arith.constant 0.176776692 : f32
    %58 = vector.broadcast %cst_20 : f32 to vector<8x8xf32>
    %59 = arith.mulf %57, %58 : vector<8x8xf32>
    %60 = vector.extract_strided_slice %36 {offsets = [0, 0], sizes = [8, 32], strides = [1, 1]} : vector<16x32xf32> to vector<8x32xf32>
    %61 = vector.extract_strided_slice %40 {offsets = [0, 0], sizes = [8, 32], strides = [1, 1]} : vector<16x32xf32> to vector<8x32xf32>
    %cst_21 = arith.constant dense<0.000000e+00> : vector<8x8xf32>
    %62 = tpu.matmul %60, %61, %cst_21 {dimension_numbers = #tpu.dot_dimension_numbers<[1], [1], [0], [0], [0, 0, 1, 0], [], []>} : vector<8x32xf32>, vector<8x32xf32>, vector<8x8xf32> -> vector<8x8xf32>
    %cst_22 = arith.constant 0.176776692 : f32
    %63 = vector.broadcast %cst_22 : f32 to vector<8x8xf32>
    %64 = arith.mulf %62, %63 : vector<8x8xf32>
    %65 = vector.extract_strided_slice %33 {offsets = [8, 0], sizes = [8, 32], strides = [1, 1]} : vector<16x32xf32> to vector<8x32xf32>
    %66 = vector.extract_strided_slice %37 {offsets = [8, 0], sizes = [8, 32], strides = [1, 1]} : vector<16x32xf32> to vector<8x32xf32>
    %cst_23 = arith.constant dense<0.000000e+00> : vector<8x8xf32>
    %67 = tpu.matmul %65, %66, %cst_23 {dimension_numbers = #tpu.dot_dimension_numbers<[1], [1], [0], [0], [0, 0, 1, 0], [], []>} : vector<8x32xf32>, vector<8x32xf32>, vector<8x8xf32> -> vector<8x8xf32>
    %cst_24 = arith.constant 0.176776692 : f32
    %68 = vector.broadcast %cst_24 : f32 to vector<8x8xf32>
    %69 = arith.mulf %67, %68 : vector<8x8xf32>
    %70 = vector.extract_strided_slice %34 {offsets = [8, 0], sizes = [8, 32], strides = [1, 1]} : vector<16x32xf32> to vector<8x32xf32>
    %71 = vector.extract_strided_slice %38 {offsets = [8, 0], sizes = [8, 32], strides = [1, 1]} : vector<16x32xf32> to vector<8x32xf32>
    %cst_25 = arith.constant dense<0.000000e+00> : vector<8x8xf32>
    %72 = tpu.matmul %70, %71, %cst_25 {dimension_numbers = #tpu.dot_dimension_numbers<[1], [1], [0], [0], [0, 0, 1, 0], [], []>} : vector<8x32xf32>, vector<8x32xf32>, vector<8x8xf32> -> vector<8x8xf32>
    %cst_26 = arith.constant 0.176776692 : f32
    %73 = vector.broadcast %cst_26 : f32 to vector<8x8xf32>
    %74 = arith.mulf %72, %73 : vector<8x8xf32>
    %75 = vector.extract_strided_slice %35 {offsets = [8, 0], sizes = [8, 32], strides = [1, 1]} : vector<16x32xf32> to vector<8x32xf32>
    %76 = vector.extract_strided_slice %39 {offsets = [8, 0], sizes = [8, 32], strides = [1, 1]} : vector<16x32xf32> to vector<8x32xf32>
    %cst_27 = arith.constant dense<0.000000e+00> : vector<8x8xf32>
    %77 = tpu.matmul %75, %76, %cst_27 {dimension_numbers = #tpu.dot_dimension_numbers<[1], [1], [0], [0], [0, 0, 1, 0], [], []>} : vector<8x32xf32>, vector<8x32xf32>, vector<8x8xf32> -> vector<8x8xf32>
    %cst_28 = arith.constant 0.176776692 : f32
    %78 = vector.broadcast %cst_28 : f32 to vector<8x8xf32>
    %79 = arith.mulf %77, %78 : vector<8x8xf32>
    %80 = vector.extract_strided_slice %36 {offsets = [8, 0], sizes = [8, 32], strides = [1, 1]} : vector<16x32xf32> to vector<8x32xf32>
    %81 = vector.extract_strided_slice %40 {offsets = [8, 0], sizes = [8, 32], strides = [1, 1]} : vector<16x32xf32> to vector<8x32xf32>
    %cst_29 = arith.constant dense<0.000000e+00> : vector<8x8xf32>
    %82 = tpu.matmul %80, %81, %cst_29 {dimension_numbers = #tpu.dot_dimension_numbers<[1], [1], [0], [0], [0, 0, 1, 0], [], []>} : vector<8x32xf32>, vector<8x32xf32>, vector<8x8xf32> -> vector<8x8xf32>
    %cst_30 = arith.constant 0.176776692 : f32
    %83 = vector.broadcast %cst_30 : f32 to vector<8x8xf32>
    %84 = arith.mulf %82, %83 : vector<8x8xf32>
    %85 = tpu.concatenate %49, %54, %59, %64, %69, %74, %79, %84 in 0 : vector<8x8xf32>, vector<8x8xf32>, vector<8x8xf32>, vector<8x8xf32>, vector<8x8xf32>, vector<8x8xf32>, vector<8x8xf32>, vector<8x8xf32> -> vector<64x8xf32>
    %cst_31 = arith.constant dense<0xFF800000> : vector<64xf32>
    %86 = vector.multi_reduction <maximumf>, %85, %cst_31 [1] : vector<64x8xf32> to vector<64xf32>
    %87 = vector.shape_cast %86 : vector<64xf32> to vector<64x1xf32>
    %88 = vector.broadcast %87 : vector<64x1xf32> to vector<64x8xf32>
    %89 = arith.subf %85, %88 : vector<64x8xf32>
    %90 = math.exp %89 : vector<64x8xf32>
    %cst_32 = arith.constant dense<0.000000e+00> : vector<64xf32>
    %91 = vector.multi_reduction <add>, %90, %cst_32 [1] : vector<64x8xf32> to vector<64xf32>
    %92 = vector.shape_cast %91 : vector<64xf32> to vector<64x1xf32>
    %93 = tpu.reciprocal %92 {approx = true} : vector<64x1xf32> -> vector<64x1xf32>
    %94 = vector.broadcast %93 : vector<64x1xf32> to vector<64x8xf32>
    %95 = arith.mulf %90, %94 : vector<64x8xf32>
    %96 = vector.extract_strided_slice %95 {offsets = [0, 0], sizes = [8, 8], strides = [1, 1]} : vector<64x8xf32> to vector<8x8xf32>
    %97 = vector.extract_strided_slice %41 {offsets = [0, 0], sizes = [8, 32], strides = [1, 1]} : vector<16x32xf32> to vector<8x32xf32>
    %cst_33 = arith.constant dense<0.000000e+00> : vector<8x32xf32>
    %98 = tpu.matmul %96, %97, %cst_33 {dimension_numbers = #tpu.dot_dimension_numbers<[1], [0], [0], [1], [0, 0, 1, 1], [], []>} : vector<8x8xf32>, vector<8x32xf32>, vector<8x32xf32> -> vector<8x32xf32>
    %99 = vector.extract_strided_slice %29 {offsets = [0, 0], sizes = [32, 32], strides = [1, 1]} : vector<128x32xf32> to vector<32x32xf32>
    %cst_34 = arith.constant dense<0.000000e+00> : vector<8x32xf32>
    %100 = tpu.matmul %98, %99, %cst_34 {dimension_numbers = #tpu.dot_dimension_numbers<[1], [0], [0], [1], [0, 0, 1, 1], [], []>} : vector<8x32xf32>, vector<32x32xf32>, vector<8x32xf32> -> vector<8x32xf32>
    %101 = vector.extract_strided_slice %95 {offsets = [8, 0], sizes = [8, 8], strides = [1, 1]} : vector<64x8xf32> to vector<8x8xf32>
    %102 = vector.extract_strided_slice %42 {offsets = [0, 0], sizes = [8, 32], strides = [1, 1]} : vector<16x32xf32> to vector<8x32xf32>
    %cst_35 = arith.constant dense<0.000000e+00> : vector<8x32xf32>
    %103 = tpu.matmul %101, %102, %cst_35 {dimension_numbers = #tpu.dot_dimension_numbers<[1], [0], [0], [1], [0, 0, 1, 1], [], []>} : vector<8x8xf32>, vector<8x32xf32>, vector<8x32xf32> -> vector<8x32xf32>
    %104 = vector.extract_strided_slice %29 {offsets = [32, 0], sizes = [32, 32], strides = [1, 1]} : vector<128x32xf32> to vector<32x32xf32>
    %cst_36 = arith.constant dense<0.000000e+00> : vector<8x32xf32>
    %105 = tpu.matmul %103, %104, %cst_36 {dimension_numbers = #tpu.dot_dimension_numbers<[1], [0], [0], [1], [0, 0, 1, 1], [], []>} : vector<8x32xf32>, vector<32x32xf32>, vector<8x32xf32> -> vector<8x32xf32>
    %106 = arith.addf %100, %105 : vector<8x32xf32>
    %107 = vector.extract_strided_slice %95 {offsets = [16, 0], sizes = [8, 8], strides = [1, 1]} : vector<64x8xf32> to vector<8x8xf32>
    %108 = vector.extract_strided_slice %43 {offsets = [0, 0], sizes = [8, 32], strides = [1, 1]} : vector<16x32xf32> to vector<8x32xf32>
    %cst_37 = arith.constant dense<0.000000e+00> : vector<8x32xf32>
    %109 = tpu.matmul %107, %108, %cst_37 {dimension_numbers = #tpu.dot_dimension_numbers<[1], [0], [0], [1], [0, 0, 1, 1], [], []>} : vector<8x8xf32>, vector<8x32xf32>, vector<8x32xf32> -> vector<8x32xf32>
    %110 = vector.extract_strided_slice %29 {offsets = [64, 0], sizes = [32, 32], strides = [1, 1]} : vector<128x32xf32> to vector<32x32xf32>
    %cst_38 = arith.constant dense<0.000000e+00> : vector<8x32xf32>
    %111 = tpu.matmul %109, %110, %cst_38 {dimension_numbers = #tpu.dot_dimension_numbers<[1], [0], [0], [1], [0, 0, 1, 1], [], []>} : vector<8x32xf32>, vector<32x32xf32>, vector<8x32xf32> -> vector<8x32xf32>
    %112 = arith.addf %106, %111 : vector<8x32xf32>
    %113 = vector.extract_strided_slice %95 {offsets = [24, 0], sizes = [8, 8], strides = [1, 1]} : vector<64x8xf32> to vector<8x8xf32>
    %114 = vector.extract_strided_slice %44 {offsets = [0, 0], sizes = [8, 32], strides = [1, 1]} : vector<16x32xf32> to vector<8x32xf32>
    %cst_39 = arith.constant dense<0.000000e+00> : vector<8x32xf32>
    %115 = tpu.matmul %113, %114, %cst_39 {dimension_numbers = #tpu.dot_dimension_numbers<[1], [0], [0], [1], [0, 0, 1, 1], [], []>} : vector<8x8xf32>, vector<8x32xf32>, vector<8x32xf32> -> vector<8x32xf32>
    %116 = vector.extract_strided_slice %29 {offsets = [96, 0], sizes = [32, 32], strides = [1, 1]} : vector<128x32xf32> to vector<32x32xf32>
    %cst_40 = arith.constant dense<0.000000e+00> : vector<8x32xf32>
    %117 = tpu.matmul %115, %116, %cst_40 {dimension_numbers = #tpu.dot_dimension_numbers<[1], [0], [0], [1], [0, 0, 1, 1], [], []>} : vector<8x32xf32>, vector<32x32xf32>, vector<8x32xf32> -> vector<8x32xf32>
    %118 = arith.addf %112, %117 : vector<8x32xf32>
    %119 = vector.extract_strided_slice %95 {offsets = [32, 0], sizes = [8, 8], strides = [1, 1]} : vector<64x8xf32> to vector<8x8xf32>
    %120 = vector.extract_strided_slice %41 {offsets = [8, 0], sizes = [8, 32], strides = [1, 1]} : vector<16x32xf32> to vector<8x32xf32>
    %cst_41 = arith.constant dense<0.000000e+00> : vector<8x32xf32>
    %121 = tpu.matmul %119, %120, %cst_41 {dimension_numbers = #tpu.dot_dimension_numbers<[1], [0], [0], [1], [0, 0, 1, 1], [], []>} : vector<8x8xf32>, vector<8x32xf32>, vector<8x32xf32> -> vector<8x32xf32>
    %122 = vector.extract_strided_slice %29 {offsets = [0, 0], sizes = [32, 32], strides = [1, 1]} : vector<128x32xf32> to vector<32x32xf32>
    %cst_42 = arith.constant dense<0.000000e+00> : vector<8x32xf32>
    %123 = tpu.matmul %121, %122, %cst_42 {dimension_numbers = #tpu.dot_dimension_numbers<[1], [0], [0], [1], [0, 0, 1, 1], [], []>} : vector<8x32xf32>, vector<32x32xf32>, vector<8x32xf32> -> vector<8x32xf32>
    %124 = vector.extract_strided_slice %95 {offsets = [40, 0], sizes = [8, 8], strides = [1, 1]} : vector<64x8xf32> to vector<8x8xf32>
    %125 = vector.extract_strided_slice %42 {offsets = [8, 0], sizes = [8, 32], strides = [1, 1]} : vector<16x32xf32> to vector<8x32xf32>
    %cst_43 = arith.constant dense<0.000000e+00> : vector<8x32xf32>
    %126 = tpu.matmul %124, %125, %cst_43 {dimension_numbers = #tpu.dot_dimension_numbers<[1], [0], [0], [1], [0, 0, 1, 1], [], []>} : vector<8x8xf32>, vector<8x32xf32>, vector<8x32xf32> -> vector<8x32xf32>
    %127 = vector.extract_strided_slice %29 {offsets = [32, 0], sizes = [32, 32], strides = [1, 1]} : vector<128x32xf32> to vector<32x32xf32>
    %cst_44 = arith.constant dense<0.000000e+00> : vector<8x32xf32>
    %128 = tpu.matmul %126, %127, %cst_44 {dimension_numbers = #tpu.dot_dimension_numbers<[1], [0], [0], [1], [0, 0, 1, 1], [], []>} : vector<8x32xf32>, vector<32x32xf32>, vector<8x32xf32> -> vector<8x32xf32>
    %129 = arith.addf %123, %128 : vector<8x32xf32>
    %130 = vector.extract_strided_slice %95 {offsets = [48, 0], sizes = [8, 8], strides = [1, 1]} : vector<64x8xf32> to vector<8x8xf32>
    %131 = vector.extract_strided_slice %43 {offsets = [8, 0], sizes = [8, 32], strides = [1, 1]} : vector<16x32xf32> to vector<8x32xf32>
    %cst_45 = arith.constant dense<0.000000e+00> : vector<8x32xf32>
    %132 = tpu.matmul %130, %131, %cst_45 {dimension_numbers = #tpu.dot_dimension_numbers<[1], [0], [0], [1], [0, 0, 1, 1], [], []>} : vector<8x8xf32>, vector<8x32xf32>, vector<8x32xf32> -> vector<8x32xf32>
    %133 = vector.extract_strided_slice %29 {offsets = [64, 0], sizes = [32, 32], strides = [1, 1]} : vector<128x32xf32> to vector<32x32xf32>
    %cst_46 = arith.constant dense<0.000000e+00> : vector<8x32xf32>
    %134 = tpu.matmul %132, %133, %cst_46 {dimension_numbers = #tpu.dot_dimension_numbers<[1], [0], [0], [1], [0, 0, 1, 1], [], []>} : vector<8x32xf32>, vector<32x32xf32>, vector<8x32xf32> -> vector<8x32xf32>
    %135 = arith.addf %129, %134 : vector<8x32xf32>
    %136 = vector.extract_strided_slice %95 {offsets = [56, 0], sizes = [8, 8], strides = [1, 1]} : vector<64x8xf32> to vector<8x8xf32>
    %137 = vector.extract_strided_slice %44 {offsets = [8, 0], sizes = [8, 32], strides = [1, 1]} : vector<16x32xf32> to vector<8x32xf32>
    %cst_47 = arith.constant dense<0.000000e+00> : vector<8x32xf32>
    %138 = tpu.matmul %136, %137, %cst_47 {dimension_numbers = #tpu.dot_dimension_numbers<[1], [0], [0], [1], [0, 0, 1, 1], [], []>} : vector<8x8xf32>, vector<8x32xf32>, vector<8x32xf32> -> vector<8x32xf32>
    %139 = vector.extract_strided_slice %29 {offsets = [96, 0], sizes = [32, 32], strides = [1, 1]} : vector<128x32xf32> to vector<32x32xf32>
    %cst_48 = arith.constant dense<0.000000e+00> : vector<8x32xf32>
    %140 = tpu.matmul %138, %139, %cst_48 {dimension_numbers = #tpu.dot_dimension_numbers<[1], [0], [0], [1], [0, 0, 1, 1], [], []>} : vector<8x32xf32>, vector<32x32xf32>, vector<8x32xf32> -> vector<8x32xf32>
    %141 = arith.addf %135, %140 : vector<8x32xf32>
    %142 = tpu.concatenate %118, %141 in 0 : vector<8x32xf32>, vector<8x32xf32> -> vector<16x32xf32>
    %143 = vector.broadcast %22 : vector<1x32xf32> to vector<16x32xf32>
    %144 = arith.addf %142, %143 : vector<16x32xf32>
    %145 = arith.addf %144, %19 : vector<16x32xf32>
    %cst_49 = arith.constant dense<0.000000e+00> : vector<16xf32>
    %146 = vector.multi_reduction <add>, %145, %cst_49 [1] : vector<16x32xf32> to vector<16xf32>
    %147 = vector.shape_cast %146 : vector<16xf32> to vector<16x1xf32>
    %cst_50 = arith.constant 3.200000e+01 : f32
    %148 = vector.broadcast %cst_50 : f32 to vector<16x1xf32>
    %149 = arith.divf %147, %148 : vector<16x1xf32>
    %150 = vector.broadcast %149 : vector<16x1xf32> to vector<16x32xf32>
    %151 = arith.subf %145, %150 : vector<16x32xf32>
    %152 = arith.mulf %151, %151 : vector<16x32xf32>
    %cst_51 = arith.constant dense<0.000000e+00> : vector<16xf32>
    %153 = vector.multi_reduction <add>, %152, %cst_51 [1] : vector<16x32xf32> to vector<16xf32>
    %154 = vector.shape_cast %153 : vector<16xf32> to vector<16x1xf32>
    %cst_52 = arith.constant 3.200000e+01 : f32
    %155 = vector.broadcast %cst_52 : f32 to vector<16x1xf32>
    %156 = arith.divf %154, %155 : vector<16x1xf32>
    %157 = vector.broadcast %149 : vector<16x1xf32> to vector<16x32xf32>
    %158 = arith.subf %145, %157 : vector<16x32xf32>
    %cst_53 = arith.constant 9.99999974E-6 : f32
    %159 = vector.broadcast %cst_53 : f32 to vector<16x1xf32>
    %160 = arith.addf %156, %159 : vector<16x1xf32>
    %161 = math.rsqrt %160 : vector<16x1xf32>
    %162 = vector.broadcast %161 : vector<16x1xf32> to vector<16x32xf32>
    %163 = arith.mulf %158, %162 : vector<16x32xf32>
    %164 = vector.broadcast %24 : vector<1x32xf32> to vector<16x32xf32>
    %165 = arith.mulf %163, %164 : vector<16x32xf32>
    %166 = vector.broadcast %25 : vector<1x32xf32> to vector<16x32xf32>
    %167 = arith.addf %165, %166 : vector<16x32xf32>
    %c0_54 = arith.constant 0 : index
    %c0_55 = arith.constant 0 : index
    %c0_56 = arith.constant 0 : index
    %168 = vector.load %arg4[%c0_54, %c0_55, %c0_56] : memref<2x32x128xf32, #tpu.memory_space<vmem>>, vector<1x32x128xf32>
    %169 = vector.shape_cast %168 : vector<1x32x128xf32> to vector<32x128xf32>
    %cst_57 = arith.constant dense<0.000000e+00> : vector<16x128xf32>
    %170 = tpu.matmul %167, %169, %cst_57 {dimension_numbers = #tpu.dot_dimension_numbers<[1], [0], [0], [1], [0, 0, 1, 1], [], []>} : vector<16x32xf32>, vector<32x128xf32>, vector<16x128xf32> -> vector<16x128xf32>
    %c0_58 = arith.constant 0 : index
    %c0_59 = arith.constant 0 : index
    %c0_60 = arith.constant 0 : index
    %171 = vector.load %arg7[%c0_58, %c0_59, %c0_60] : memref<2x1x128xf32, #tpu.memory_space<vmem>>, vector<1x1x128xf32>
    %172 = vector.shape_cast %171 : vector<1x1x128xf32> to vector<1x128xf32>
    %173 = vector.broadcast %172 : vector<1x128xf32> to vector<16x128xf32>
    %174 = arith.addf %170, %173 : vector<16x128xf32>
    %cst_61 = arith.constant 0.000000e+00 : f32
    %175 = vector.broadcast %cst_61 : f32 to vector<16x128xf32>
    %176 = arith.maximumf %174, %175 : vector<16x128xf32>
    %c0_62 = arith.constant 0 : index
    %c0_63 = arith.constant 0 : index
    %c0_64 = arith.constant 0 : index
    %177 = vector.load %arg5[%c0_62, %c0_63, %c0_64] : memref<2x128x32xf32, #tpu.memory_space<vmem>>, vector<1x128x32xf32>
    %178 = vector.shape_cast %177 : vector<1x128x32xf32> to vector<128x32xf32>
    %cst_65 = arith.constant dense<0.000000e+00> : vector<16x32xf32>
    %179 = tpu.matmul %176, %178, %cst_65 {dimension_numbers = #tpu.dot_dimension_numbers<[1], [0], [0], [1], [0, 0, 1, 1], [], []>} : vector<16x128xf32>, vector<128x32xf32>, vector<16x32xf32> -> vector<16x32xf32>
    %180 = vector.broadcast %23 : vector<1x32xf32> to vector<16x32xf32>
    %181 = arith.addf %179, %180 : vector<16x32xf32>
    %182 = arith.addf %181, %167 : vector<16x32xf32>
    %cst_66 = arith.constant dense<0.000000e+00> : vector<16xf32>
    %183 = vector.multi_reduction <add>, %182, %cst_66 [1] : vector<16x32xf32> to vector<16xf32>
    %184 = vector.shape_cast %183 : vector<16xf32> to vector<16x1xf32>
    %cst_67 = arith.constant 3.200000e+01 : f32
    %185 = vector.broadcast %cst_67 : f32 to vector<16x1xf32>
    %186 = arith.divf %184, %185 : vector<16x1xf32>
    %187 = vector.broadcast %186 : vector<16x1xf32> to vector<16x32xf32>
    %188 = arith.subf %182, %187 : vector<16x32xf32>
    %189 = arith.mulf %188, %188 : vector<16x32xf32>
    %cst_68 = arith.constant dense<0.000000e+00> : vector<16xf32>
    %190 = vector.multi_reduction <add>, %189, %cst_68 [1] : vector<16x32xf32> to vector<16xf32>
    %191 = vector.shape_cast %190 : vector<16xf32> to vector<16x1xf32>
    %cst_69 = arith.constant 3.200000e+01 : f32
    %192 = vector.broadcast %cst_69 : f32 to vector<16x1xf32>
    %193 = arith.divf %191, %192 : vector<16x1xf32>
    %194 = vector.broadcast %186 : vector<16x1xf32> to vector<16x32xf32>
    %195 = arith.subf %182, %194 : vector<16x32xf32>
    %cst_70 = arith.constant 9.99999974E-6 : f32
    %196 = vector.broadcast %cst_70 : f32 to vector<16x1xf32>
    %197 = arith.addf %193, %196 : vector<16x1xf32>
    %198 = math.rsqrt %197 : vector<16x1xf32>
    %199 = vector.broadcast %198 : vector<16x1xf32> to vector<16x32xf32>
    %200 = arith.mulf %195, %199 : vector<16x32xf32>
    %201 = vector.broadcast %26 : vector<1x32xf32> to vector<16x32xf32>
    %202 = arith.mulf %200, %201 : vector<16x32xf32>
    %203 = vector.broadcast %27 : vector<1x32xf32> to vector<16x32xf32>
    %204 = arith.addf %202, %203 : vector<16x32xf32>
    %c1_71 = arith.constant 1 : index
    %c0_72 = arith.constant 0 : index
    %c0_73 = arith.constant 0 : index
    %205 = vector.load %arg6[%c1_71, %c0_72, %c0_73] : memref<2x8x32xf32, #tpu.memory_space<vmem>>, vector<1x8x32xf32>
    %206 = vector.shape_cast %205 : vector<1x8x32xf32> to vector<8x32xf32>
    %207 = vector.extract_strided_slice %206 {offsets = [0, 0], sizes = [1, 32], strides = [1, 1]} : vector<8x32xf32> to vector<1x32xf32>
    %208 = vector.extract_strided_slice %206 {offsets = [1, 0], sizes = [1, 32], strides = [1, 1]} : vector<8x32xf32> to vector<1x32xf32>
    %209 = vector.extract_strided_slice %206 {offsets = [2, 0], sizes = [1, 32], strides = [1, 1]} : vector<8x32xf32> to vector<1x32xf32>
    %210 = vector.extract_strided_slice %206 {offsets = [3, 0], sizes = [1, 32], strides = [1, 1]} : vector<8x32xf32> to vector<1x32xf32>
    %211 = vector.extract_strided_slice %206 {offsets = [4, 0], sizes = [1, 32], strides = [1, 1]} : vector<8x32xf32> to vector<1x32xf32>
    %212 = vector.extract_strided_slice %206 {offsets = [5, 0], sizes = [1, 32], strides = [1, 1]} : vector<8x32xf32> to vector<1x32xf32>
    %c1_74 = arith.constant 1 : index
    %c0_75 = arith.constant 0 : index
    %c0_76 = arith.constant 0 : index
    %213 = vector.load %arg3[%c1_74, %c0_75, %c0_76] : memref<2x128x32xf32, #tpu.memory_space<vmem>>, vector<1x128x32xf32>
    %214 = vector.shape_cast %213 : vector<1x128x32xf32> to vector<128x32xf32>
    %c1_77 = arith.constant 1 : index
    %c0_78 = arith.constant 0 : index
    %c0_79 = arith.constant 0 : index
    %215 = vector.load %arg2[%c1_77, %c0_78, %c0_79] : memref<2x32x384xf32, #tpu.memory_space<vmem>>, vector<1x32x384xf32>
    %216 = vector.shape_cast %215 : vector<1x32x384xf32> to vector<32x384xf32>
    %cst_80 = arith.constant dense<0.000000e+00> : vector<16x384xf32>
    %217 = tpu.matmul %204, %216, %cst_80 {dimension_numbers = #tpu.dot_dimension_numbers<[1], [0], [0], [1], [0, 0, 1, 1], [], []>} : vector<16x32xf32>, vector<32x384xf32>, vector<16x384xf32> -> vector<16x384xf32>
    %218 = vector.extract_strided_slice %217 {offsets = [0, 0], sizes = [16, 32], strides = [1, 1]} : vector<16x384xf32> to vector<16x32xf32>
    %219 = vector.extract_strided_slice %217 {offsets = [0, 32], sizes = [16, 32], strides = [1, 1]} : vector<16x384xf32> to vector<16x32xf32>
    %220 = vector.extract_strided_slice %217 {offsets = [0, 64], sizes = [16, 32], strides = [1, 1]} : vector<16x384xf32> to vector<16x32xf32>
    %221 = vector.extract_strided_slice %217 {offsets = [0, 96], sizes = [16, 32], strides = [1, 1]} : vector<16x384xf32> to vector<16x32xf32>
    %222 = vector.extract_strided_slice %217 {offsets = [0, 128], sizes = [16, 32], strides = [1, 1]} : vector<16x384xf32> to vector<16x32xf32>
    %223 = vector.extract_strided_slice %217 {offsets = [0, 160], sizes = [16, 32], strides = [1, 1]} : vector<16x384xf32> to vector<16x32xf32>
    %224 = vector.extract_strided_slice %217 {offsets = [0, 192], sizes = [16, 32], strides = [1, 1]} : vector<16x384xf32> to vector<16x32xf32>
    %225 = vector.extract_strided_slice %217 {offsets = [0, 224], sizes = [16, 32], strides = [1, 1]} : vector<16x384xf32> to vector<16x32xf32>
    %226 = vector.extract_strided_slice %217 {offsets = [0, 256], sizes = [16, 32], strides = [1, 1]} : vector<16x384xf32> to vector<16x32xf32>
    %227 = vector.extract_strided_slice %217 {offsets = [0, 288], sizes = [16, 32], strides = [1, 1]} : vector<16x384xf32> to vector<16x32xf32>
    %228 = vector.extract_strided_slice %217 {offsets = [0, 320], sizes = [16, 32], strides = [1, 1]} : vector<16x384xf32> to vector<16x32xf32>
    %229 = vector.extract_strided_slice %217 {offsets = [0, 352], sizes = [16, 32], strides = [1, 1]} : vector<16x384xf32> to vector<16x32xf32>
    %230 = vector.extract_strided_slice %218 {offsets = [0, 0], sizes = [8, 32], strides = [1, 1]} : vector<16x32xf32> to vector<8x32xf32>
    %231 = vector.extract_strided_slice %222 {offsets = [0, 0], sizes = [8, 32], strides = [1, 1]} : vector<16x32xf32> to vector<8x32xf32>
    %cst_81 = arith.constant dense<0.000000e+00> : vector<8x8xf32>
    %232 = tpu.matmul %230, %231, %cst_81 {dimension_numbers = #tpu.dot_dimension_numbers<[1], [1], [0], [0], [0, 0, 1, 0], [], []>} : vector<8x32xf32>, vector<8x32xf32>, vector<8x8xf32> -> vector<8x8xf32>
    %cst_82 = arith.constant 0.176776692 : f32
    %233 = vector.broadcast %cst_82 : f32 to vector<8x8xf32>
    %234 = arith.mulf %232, %233 : vector<8x8xf32>
    %235 = vector.extract_strided_slice %219 {offsets = [0, 0], sizes = [8, 32], strides = [1, 1]} : vector<16x32xf32> to vector<8x32xf32>
    %236 = vector.extract_strided_slice %223 {offsets = [0, 0], sizes = [8, 32], strides = [1, 1]} : vector<16x32xf32> to vector<8x32xf32>
    %cst_83 = arith.constant dense<0.000000e+00> : vector<8x8xf32>
    %237 = tpu.matmul %235, %236, %cst_83 {dimension_numbers = #tpu.dot_dimension_numbers<[1], [1], [0], [0], [0, 0, 1, 0], [], []>} : vector<8x32xf32>, vector<8x32xf32>, vector<8x8xf32> -> vector<8x8xf32>
    %cst_84 = arith.constant 0.176776692 : f32
    %238 = vector.broadcast %cst_84 : f32 to vector<8x8xf32>
    %239 = arith.mulf %237, %238 : vector<8x8xf32>
    %240 = vector.extract_strided_slice %220 {offsets = [0, 0], sizes = [8, 32], strides = [1, 1]} : vector<16x32xf32> to vector<8x32xf32>
    %241 = vector.extract_strided_slice %224 {offsets = [0, 0], sizes = [8, 32], strides = [1, 1]} : vector<16x32xf32> to vector<8x32xf32>
    %cst_85 = arith.constant dense<0.000000e+00> : vector<8x8xf32>
    %242 = tpu.matmul %240, %241, %cst_85 {dimension_numbers = #tpu.dot_dimension_numbers<[1], [1], [0], [0], [0, 0, 1, 0], [], []>} : vector<8x32xf32>, vector<8x32xf32>, vector<8x8xf32> -> vector<8x8xf32>
    %cst_86 = arith.constant 0.176776692 : f32
    %243 = vector.broadcast %cst_86 : f32 to vector<8x8xf32>
    %244 = arith.mulf %242, %243 : vector<8x8xf32>
    %245 = vector.extract_strided_slice %221 {offsets = [0, 0], sizes = [8, 32], strides = [1, 1]} : vector<16x32xf32> to vector<8x32xf32>
    %246 = vector.extract_strided_slice %225 {offsets = [0, 0], sizes = [8, 32], strides = [1, 1]} : vector<16x32xf32> to vector<8x32xf32>
    %cst_87 = arith.constant dense<0.000000e+00> : vector<8x8xf32>
    %247 = tpu.matmul %245, %246, %cst_87 {dimension_numbers = #tpu.dot_dimension_numbers<[1], [1], [0], [0], [0, 0, 1, 0], [], []>} : vector<8x32xf32>, vector<8x32xf32>, vector<8x8xf32> -> vector<8x8xf32>
    %cst_88 = arith.constant 0.176776692 : f32
    %248 = vector.broadcast %cst_88 : f32 to vector<8x8xf32>
    %249 = arith.mulf %247, %248 : vector<8x8xf32>
    %250 = vector.extract_strided_slice %218 {offsets = [8, 0], sizes = [8, 32], strides = [1, 1]} : vector<16x32xf32> to vector<8x32xf32>
    %251 = vector.extract_strided_slice %222 {offsets = [8, 0], sizes = [8, 32], strides = [1, 1]} : vector<16x32xf32> to vector<8x32xf32>
    %cst_89 = arith.constant dense<0.000000e+00> : vector<8x8xf32>
    %252 = tpu.matmul %250, %251, %cst_89 {dimension_numbers = #tpu.dot_dimension_numbers<[1], [1], [0], [0], [0, 0, 1, 0], [], []>} : vector<8x32xf32>, vector<8x32xf32>, vector<8x8xf32> -> vector<8x8xf32>
    %cst_90 = arith.constant 0.176776692 : f32
    %253 = vector.broadcast %cst_90 : f32 to vector<8x8xf32>
    %254 = arith.mulf %252, %253 : vector<8x8xf32>
    %255 = vector.extract_strided_slice %219 {offsets = [8, 0], sizes = [8, 32], strides = [1, 1]} : vector<16x32xf32> to vector<8x32xf32>
    %256 = vector.extract_strided_slice %223 {offsets = [8, 0], sizes = [8, 32], strides = [1, 1]} : vector<16x32xf32> to vector<8x32xf32>
    %cst_91 = arith.constant dense<0.000000e+00> : vector<8x8xf32>
    %257 = tpu.matmul %255, %256, %cst_91 {dimension_numbers = #tpu.dot_dimension_numbers<[1], [1], [0], [0], [0, 0, 1, 0], [], []>} : vector<8x32xf32>, vector<8x32xf32>, vector<8x8xf32> -> vector<8x8xf32>
    %cst_92 = arith.constant 0.176776692 : f32
    %258 = vector.broadcast %cst_92 : f32 to vector<8x8xf32>
    %259 = arith.mulf %257, %258 : vector<8x8xf32>
    %260 = vector.extract_strided_slice %220 {offsets = [8, 0], sizes = [8, 32], strides = [1, 1]} : vector<16x32xf32> to vector<8x32xf32>
    %261 = vector.extract_strided_slice %224 {offsets = [8, 0], sizes = [8, 32], strides = [1, 1]} : vector<16x32xf32> to vector<8x32xf32>
    %cst_93 = arith.constant dense<0.000000e+00> : vector<8x8xf32>
    %262 = tpu.matmul %260, %261, %cst_93 {dimension_numbers = #tpu.dot_dimension_numbers<[1], [1], [0], [0], [0, 0, 1, 0], [], []>} : vector<8x32xf32>, vector<8x32xf32>, vector<8x8xf32> -> vector<8x8xf32>
    %cst_94 = arith.constant 0.176776692 : f32
    %263 = vector.broadcast %cst_94 : f32 to vector<8x8xf32>
    %264 = arith.mulf %262, %263 : vector<8x8xf32>
    %265 = vector.extract_strided_slice %221 {offsets = [8, 0], sizes = [8, 32], strides = [1, 1]} : vector<16x32xf32> to vector<8x32xf32>
    %266 = vector.extract_strided_slice %225 {offsets = [8, 0], sizes = [8, 32], strides = [1, 1]} : vector<16x32xf32> to vector<8x32xf32>
    %cst_95 = arith.constant dense<0.000000e+00> : vector<8x8xf32>
    %267 = tpu.matmul %265, %266, %cst_95 {dimension_numbers = #tpu.dot_dimension_numbers<[1], [1], [0], [0], [0, 0, 1, 0], [], []>} : vector<8x32xf32>, vector<8x32xf32>, vector<8x8xf32> -> vector<8x8xf32>
    %cst_96 = arith.constant 0.176776692 : f32
    %268 = vector.broadcast %cst_96 : f32 to vector<8x8xf32>
    %269 = arith.mulf %267, %268 : vector<8x8xf32>
    %270 = tpu.concatenate %234, %239, %244, %249, %254, %259, %264, %269 in 0 : vector<8x8xf32>, vector<8x8xf32>, vector<8x8xf32>, vector<8x8xf32>, vector<8x8xf32>, vector<8x8xf32>, vector<8x8xf32>, vector<8x8xf32> -> vector<64x8xf32>
    %cst_97 = arith.constant dense<0xFF800000> : vector<64xf32>
    %271 = vector.multi_reduction <maximumf>, %270, %cst_97 [1] : vector<64x8xf32> to vector<64xf32>
    %272 = vector.shape_cast %271 : vector<64xf32> to vector<64x1xf32>
    %273 = vector.broadcast %272 : vector<64x1xf32> to vector<64x8xf32>
    %274 = arith.subf %270, %273 : vector<64x8xf32>
    %275 = math.exp %274 : vector<64x8xf32>
    %cst_98 = arith.constant dense<0.000000e+00> : vector<64xf32>
    %276 = vector.multi_reduction <add>, %275, %cst_98 [1] : vector<64x8xf32> to vector<64xf32>
    %277 = vector.shape_cast %276 : vector<64xf32> to vector<64x1xf32>
    %278 = tpu.reciprocal %277 {approx = true} : vector<64x1xf32> -> vector<64x1xf32>
    %279 = vector.broadcast %278 : vector<64x1xf32> to vector<64x8xf32>
    %280 = arith.mulf %275, %279 : vector<64x8xf32>
    %281 = vector.extract_strided_slice %280 {offsets = [0, 0], sizes = [8, 8], strides = [1, 1]} : vector<64x8xf32> to vector<8x8xf32>
    %282 = vector.extract_strided_slice %226 {offsets = [0, 0], sizes = [8, 32], strides = [1, 1]} : vector<16x32xf32> to vector<8x32xf32>
    %cst_99 = arith.constant dense<0.000000e+00> : vector<8x32xf32>
    %283 = tpu.matmul %281, %282, %cst_99 {dimension_numbers = #tpu.dot_dimension_numbers<[1], [0], [0], [1], [0, 0, 1, 1], [], []>} : vector<8x8xf32>, vector<8x32xf32>, vector<8x32xf32> -> vector<8x32xf32>
    %284 = vector.extract_strided_slice %214 {offsets = [0, 0], sizes = [32, 32], strides = [1, 1]} : vector<128x32xf32> to vector<32x32xf32>
    %cst_100 = arith.constant dense<0.000000e+00> : vector<8x32xf32>
    %285 = tpu.matmul %283, %284, %cst_100 {dimension_numbers = #tpu.dot_dimension_numbers<[1], [0], [0], [1], [0, 0, 1, 1], [], []>} : vector<8x32xf32>, vector<32x32xf32>, vector<8x32xf32> -> vector<8x32xf32>
    %286 = vector.extract_strided_slice %280 {offsets = [8, 0], sizes = [8, 8], strides = [1, 1]} : vector<64x8xf32> to vector<8x8xf32>
    %287 = vector.extract_strided_slice %227 {offsets = [0, 0], sizes = [8, 32], strides = [1, 1]} : vector<16x32xf32> to vector<8x32xf32>
    %cst_101 = arith.constant dense<0.000000e+00> : vector<8x32xf32>
    %288 = tpu.matmul %286, %287, %cst_101 {dimension_numbers = #tpu.dot_dimension_numbers<[1], [0], [0], [1], [0, 0, 1, 1], [], []>} : vector<8x8xf32>, vector<8x32xf32>, vector<8x32xf32> -> vector<8x32xf32>
    %289 = vector.extract_strided_slice %214 {offsets = [32, 0], sizes = [32, 32], strides = [1, 1]} : vector<128x32xf32> to vector<32x32xf32>
    %cst_102 = arith.constant dense<0.000000e+00> : vector<8x32xf32>
    %290 = tpu.matmul %288, %289, %cst_102 {dimension_numbers = #tpu.dot_dimension_numbers<[1], [0], [0], [1], [0, 0, 1, 1], [], []>} : vector<8x32xf32>, vector<32x32xf32>, vector<8x32xf32> -> vector<8x32xf32>
    %291 = arith.addf %285, %290 : vector<8x32xf32>
    %292 = vector.extract_strided_slice %280 {offsets = [16, 0], sizes = [8, 8], strides = [1, 1]} : vector<64x8xf32> to vector<8x8xf32>
    %293 = vector.extract_strided_slice %228 {offsets = [0, 0], sizes = [8, 32], strides = [1, 1]} : vector<16x32xf32> to vector<8x32xf32>
    %cst_103 = arith.constant dense<0.000000e+00> : vector<8x32xf32>
    %294 = tpu.matmul %292, %293, %cst_103 {dimension_numbers = #tpu.dot_dimension_numbers<[1], [0], [0], [1], [0, 0, 1, 1], [], []>} : vector<8x8xf32>, vector<8x32xf32>, vector<8x32xf32> -> vector<8x32xf32>
    %295 = vector.extract_strided_slice %214 {offsets = [64, 0], sizes = [32, 32], strides = [1, 1]} : vector<128x32xf32> to vector<32x32xf32>
    %cst_104 = arith.constant dense<0.000000e+00> : vector<8x32xf32>
    %296 = tpu.matmul %294, %295, %cst_104 {dimension_numbers = #tpu.dot_dimension_numbers<[1], [0], [0], [1], [0, 0, 1, 1], [], []>} : vector<8x32xf32>, vector<32x32xf32>, vector<8x32xf32> -> vector<8x32xf32>
    %297 = arith.addf %291, %296 : vector<8x32xf32>
    %298 = vector.extract_strided_slice %280 {offsets = [24, 0], sizes = [8, 8], strides = [1, 1]} : vector<64x8xf32> to vector<8x8xf32>
    %299 = vector.extract_strided_slice %229 {offsets = [0, 0], sizes = [8, 32], strides = [1, 1]} : vector<16x32xf32> to vector<8x32xf32>
    %cst_105 = arith.constant dense<0.000000e+00> : vector<8x32xf32>
    %300 = tpu.matmul %298, %299, %cst_105 {dimension_numbers = #tpu.dot_dimension_numbers<[1], [0], [0], [1], [0, 0, 1, 1], [], []>} : vector<8x8xf32>, vector<8x32xf32>, vector<8x32xf32> -> vector<8x32xf32>
    %301 = vector.extract_strided_slice %214 {offsets = [96, 0], sizes = [32, 32], strides = [1, 1]} : vector<128x32xf32> to vector<32x32xf32>
    %cst_106 = arith.constant dense<0.000000e+00> : vector<8x32xf32>
    %302 = tpu.matmul %300, %301, %cst_106 {dimension_numbers = #tpu.dot_dimension_numbers<[1], [0], [0], [1], [0, 0, 1, 1], [], []>} : vector<8x32xf32>, vector<32x32xf32>, vector<8x32xf32> -> vector<8x32xf32>
    %303 = arith.addf %297, %302 : vector<8x32xf32>
    %304 = vector.extract_strided_slice %280 {offsets = [32, 0], sizes = [8, 8], strides = [1, 1]} : vector<64x8xf32> to vector<8x8xf32>
    %305 = vector.extract_strided_slice %226 {offsets = [8, 0], sizes = [8, 32], strides = [1, 1]} : vector<16x32xf32> to vector<8x32xf32>
    %cst_107 = arith.constant dense<0.000000e+00> : vector<8x32xf32>
    %306 = tpu.matmul %304, %305, %cst_107 {dimension_numbers = #tpu.dot_dimension_numbers<[1], [0], [0], [1], [0, 0, 1, 1], [], []>} : vector<8x8xf32>, vector<8x32xf32>, vector<8x32xf32> -> vector<8x32xf32>
    %307 = vector.extract_strided_slice %214 {offsets = [0, 0], sizes = [32, 32], strides = [1, 1]} : vector<128x32xf32> to vector<32x32xf32>
    %cst_108 = arith.constant dense<0.000000e+00> : vector<8x32xf32>
    %308 = tpu.matmul %306, %307, %cst_108 {dimension_numbers = #tpu.dot_dimension_numbers<[1], [0], [0], [1], [0, 0, 1, 1], [], []>} : vector<8x32xf32>, vector<32x32xf32>, vector<8x32xf32> -> vector<8x32xf32>
    %309 = vector.extract_strided_slice %280 {offsets = [40, 0], sizes = [8, 8], strides = [1, 1]} : vector<64x8xf32> to vector<8x8xf32>
    %310 = vector.extract_strided_slice %227 {offsets = [8, 0], sizes = [8, 32], strides = [1, 1]} : vector<16x32xf32> to vector<8x32xf32>
    %cst_109 = arith.constant dense<0.000000e+00> : vector<8x32xf32>
    %311 = tpu.matmul %309, %310, %cst_109 {dimension_numbers = #tpu.dot_dimension_numbers<[1], [0], [0], [1], [0, 0, 1, 1], [], []>} : vector<8x8xf32>, vector<8x32xf32>, vector<8x32xf32> -> vector<8x32xf32>
    %312 = vector.extract_strided_slice %214 {offsets = [32, 0], sizes = [32, 32], strides = [1, 1]} : vector<128x32xf32> to vector<32x32xf32>
    %cst_110 = arith.constant dense<0.000000e+00> : vector<8x32xf32>
    %313 = tpu.matmul %311, %312, %cst_110 {dimension_numbers = #tpu.dot_dimension_numbers<[1], [0], [0], [1], [0, 0, 1, 1], [], []>} : vector<8x32xf32>, vector<32x32xf32>, vector<8x32xf32> -> vector<8x32xf32>
    %314 = arith.addf %308, %313 : vector<8x32xf32>
    %315 = vector.extract_strided_slice %280 {offsets = [48, 0], sizes = [8, 8], strides = [1, 1]} : vector<64x8xf32> to vector<8x8xf32>
    %316 = vector.extract_strided_slice %228 {offsets = [8, 0], sizes = [8, 32], strides = [1, 1]} : vector<16x32xf32> to vector<8x32xf32>
    %cst_111 = arith.constant dense<0.000000e+00> : vector<8x32xf32>
    %317 = tpu.matmul %315, %316, %cst_111 {dimension_numbers = #tpu.dot_dimension_numbers<[1], [0], [0], [1], [0, 0, 1, 1], [], []>} : vector<8x8xf32>, vector<8x32xf32>, vector<8x32xf32> -> vector<8x32xf32>
    %318 = vector.extract_strided_slice %214 {offsets = [64, 0], sizes = [32, 32], strides = [1, 1]} : vector<128x32xf32> to vector<32x32xf32>
    %cst_112 = arith.constant dense<0.000000e+00> : vector<8x32xf32>
    %319 = tpu.matmul %317, %318, %cst_112 {dimension_numbers = #tpu.dot_dimension_numbers<[1], [0], [0], [1], [0, 0, 1, 1], [], []>} : vector<8x32xf32>, vector<32x32xf32>, vector<8x32xf32> -> vector<8x32xf32>
    %320 = arith.addf %314, %319 : vector<8x32xf32>
    %321 = vector.extract_strided_slice %280 {offsets = [56, 0], sizes = [8, 8], strides = [1, 1]} : vector<64x8xf32> to vector<8x8xf32>
    %322 = vector.extract_strided_slice %229 {offsets = [8, 0], sizes = [8, 32], strides = [1, 1]} : vector<16x32xf32> to vector<8x32xf32>
    %cst_113 = arith.constant dense<0.000000e+00> : vector<8x32xf32>
    %323 = tpu.matmul %321, %322, %cst_113 {dimension_numbers = #tpu.dot_dimension_numbers<[1], [0], [0], [1], [0, 0, 1, 1], [], []>} : vector<8x8xf32>, vector<8x32xf32>, vector<8x32xf32> -> vector<8x32xf32>
    %324 = vector.extract_strided_slice %214 {offsets = [96, 0], sizes = [32, 32], strides = [1, 1]} : vector<128x32xf32> to vector<32x32xf32>
    %cst_114 = arith.constant dense<0.000000e+00> : vector<8x32xf32>
    %325 = tpu.matmul %323, %324, %cst_114 {dimension_numbers = #tpu.dot_dimension_numbers<[1], [0], [0], [1], [0, 0, 1, 1], [], []>} : vector<8x32xf32>, vector<32x32xf32>, vector<8x32xf32> -> vector<8x32xf32>
    %326 = arith.addf %320, %325 : vector<8x32xf32>
    %327 = tpu.concatenate %303, %326 in 0 : vector<8x32xf32>, vector<8x32xf32> -> vector<16x32xf32>
    %328 = vector.broadcast %207 : vector<1x32xf32> to vector<16x32xf32>
    %329 = arith.addf %327, %328 : vector<16x32xf32>
    %330 = arith.addf %329, %204 : vector<16x32xf32>
    %cst_115 = arith.constant dense<0.000000e+00> : vector<16xf32>
    %331 = vector.multi_reduction <add>, %330, %cst_115 [1] : vector<16x32xf32> to vector<16xf32>
    %332 = vector.shape_cast %331 : vector<16xf32> to vector<16x1xf32>
    %cst_116 = arith.constant 3.200000e+01 : f32
    %333 = vector.broadcast %cst_116 : f32 to vector<16x1xf32>
    %334 = arith.divf %332, %333 : vector<16x1xf32>
    %335 = vector.broadcast %334 : vector<16x1xf32> to vector<16x32xf32>
    %336 = arith.subf %330, %335 : vector<16x32xf32>
    %337 = arith.mulf %336, %336 : vector<16x32xf32>
    %cst_117 = arith.constant dense<0.000000e+00> : vector<16xf32>
    %338 = vector.multi_reduction <add>, %337, %cst_117 [1] : vector<16x32xf32> to vector<16xf32>
    %339 = vector.shape_cast %338 : vector<16xf32> to vector<16x1xf32>
    %cst_118 = arith.constant 3.200000e+01 : f32
    %340 = vector.broadcast %cst_118 : f32 to vector<16x1xf32>
    %341 = arith.divf %339, %340 : vector<16x1xf32>
    %342 = vector.broadcast %334 : vector<16x1xf32> to vector<16x32xf32>
    %343 = arith.subf %330, %342 : vector<16x32xf32>
    %cst_119 = arith.constant 9.99999974E-6 : f32
    %344 = vector.broadcast %cst_119 : f32 to vector<16x1xf32>
    %345 = arith.addf %341, %344 : vector<16x1xf32>
    %346 = math.rsqrt %345 : vector<16x1xf32>
    %347 = vector.broadcast %346 : vector<16x1xf32> to vector<16x32xf32>
    %348 = arith.mulf %343, %347 : vector<16x32xf32>
    %349 = vector.broadcast %209 : vector<1x32xf32> to vector<16x32xf32>
    %350 = arith.mulf %348, %349 : vector<16x32xf32>
    %351 = vector.broadcast %210 : vector<1x32xf32> to vector<16x32xf32>
    %352 = arith.addf %350, %351 : vector<16x32xf32>
    %c1_120 = arith.constant 1 : index
    %c0_121 = arith.constant 0 : index
    %c0_122 = arith.constant 0 : index
    %353 = vector.load %arg4[%c1_120, %c0_121, %c0_122] : memref<2x32x128xf32, #tpu.memory_space<vmem>>, vector<1x32x128xf32>
    %354 = vector.shape_cast %353 : vector<1x32x128xf32> to vector<32x128xf32>
    %cst_123 = arith.constant dense<0.000000e+00> : vector<16x128xf32>
    %355 = tpu.matmul %352, %354, %cst_123 {dimension_numbers = #tpu.dot_dimension_numbers<[1], [0], [0], [1], [0, 0, 1, 1], [], []>} : vector<16x32xf32>, vector<32x128xf32>, vector<16x128xf32> -> vector<16x128xf32>
    %c1_124 = arith.constant 1 : index
    %c0_125 = arith.constant 0 : index
    %c0_126 = arith.constant 0 : index
    %356 = vector.load %arg7[%c1_124, %c0_125, %c0_126] : memref<2x1x128xf32, #tpu.memory_space<vmem>>, vector<1x1x128xf32>
    %357 = vector.shape_cast %356 : vector<1x1x128xf32> to vector<1x128xf32>
    %358 = vector.broadcast %357 : vector<1x128xf32> to vector<16x128xf32>
    %359 = arith.addf %355, %358 : vector<16x128xf32>
    %cst_127 = arith.constant 0.000000e+00 : f32
    %360 = vector.broadcast %cst_127 : f32 to vector<16x128xf32>
    %361 = arith.maximumf %359, %360 : vector<16x128xf32>
    %c1_128 = arith.constant 1 : index
    %c0_129 = arith.constant 0 : index
    %c0_130 = arith.constant 0 : index
    %362 = vector.load %arg5[%c1_128, %c0_129, %c0_130] : memref<2x128x32xf32, #tpu.memory_space<vmem>>, vector<1x128x32xf32>
    %363 = vector.shape_cast %362 : vector<1x128x32xf32> to vector<128x32xf32>
    %cst_131 = arith.constant dense<0.000000e+00> : vector<16x32xf32>
    %364 = tpu.matmul %361, %363, %cst_131 {dimension_numbers = #tpu.dot_dimension_numbers<[1], [0], [0], [1], [0, 0, 1, 1], [], []>} : vector<16x128xf32>, vector<128x32xf32>, vector<16x32xf32> -> vector<16x32xf32>
    %365 = vector.broadcast %208 : vector<1x32xf32> to vector<16x32xf32>
    %366 = arith.addf %364, %365 : vector<16x32xf32>
    %367 = arith.addf %366, %352 : vector<16x32xf32>
    %cst_132 = arith.constant dense<0.000000e+00> : vector<16xf32>
    %368 = vector.multi_reduction <add>, %367, %cst_132 [1] : vector<16x32xf32> to vector<16xf32>
    %369 = vector.shape_cast %368 : vector<16xf32> to vector<16x1xf32>
    %cst_133 = arith.constant 3.200000e+01 : f32
    %370 = vector.broadcast %cst_133 : f32 to vector<16x1xf32>
    %371 = arith.divf %369, %370 : vector<16x1xf32>
    %372 = vector.broadcast %371 : vector<16x1xf32> to vector<16x32xf32>
    %373 = arith.subf %367, %372 : vector<16x32xf32>
    %374 = arith.mulf %373, %373 : vector<16x32xf32>
    %cst_134 = arith.constant dense<0.000000e+00> : vector<16xf32>
    %375 = vector.multi_reduction <add>, %374, %cst_134 [1] : vector<16x32xf32> to vector<16xf32>
    %376 = vector.shape_cast %375 : vector<16xf32> to vector<16x1xf32>
    %cst_135 = arith.constant 3.200000e+01 : f32
    %377 = vector.broadcast %cst_135 : f32 to vector<16x1xf32>
    %378 = arith.divf %376, %377 : vector<16x1xf32>
    %379 = vector.broadcast %371 : vector<16x1xf32> to vector<16x32xf32>
    %380 = arith.subf %367, %379 : vector<16x32xf32>
    %cst_136 = arith.constant 9.99999974E-6 : f32
    %381 = vector.broadcast %cst_136 : f32 to vector<16x1xf32>
    %382 = arith.addf %378, %381 : vector<16x1xf32>
    %383 = math.rsqrt %382 : vector<16x1xf32>
    %384 = vector.broadcast %383 : vector<16x1xf32> to vector<16x32xf32>
    %385 = arith.mulf %380, %384 : vector<16x32xf32>
    %386 = vector.broadcast %211 : vector<1x32xf32> to vector<16x32xf32>
    %387 = arith.mulf %385, %386 : vector<16x32xf32>
    %388 = vector.broadcast %212 : vector<1x32xf32> to vector<16x32xf32>
    %389 = arith.addf %387, %388 : vector<16x32xf32>
    %390 = tpu.iota {dimensions = array<i32: 0>} : vector<8x16xi32>
    %391 = tpu.iota {dimensions = array<i32: 1>} : vector<8x16xi32>
    %c8_i32 = arith.constant 8 : i32
    %392 = vector.broadcast %c8_i32 : i32 to vector<8x16xi32>
    %393 = arith.muli %390, %392 : vector<8x16xi32>
    %394 = arith.cmpi sge, %391, %393 : vector<8x16xi32>
    %c1_i32 = arith.constant 1 : i32
    %395 = vector.broadcast %c1_i32 : i32 to vector<8x16xi32>
    %396 = arith.addi %390, %395 : vector<8x16xi32>
    %c8_i32_137 = arith.constant 8 : i32
    %397 = vector.broadcast %c8_i32_137 : i32 to vector<8x16xi32>
    %398 = arith.muli %396, %397 : vector<8x16xi32>
    %399 = arith.cmpi slt, %391, %398 : vector<8x16xi32>
    %400 = arith.andi %394, %399 : vector<8x16xi1>
    %401 = arith.extui %400 : vector<8x16xi1> to vector<8x16xi32>
    %402 = arith.sitofp %401 : vector<8x16xi32> to vector<8x16xf32>
    %cst_138 = arith.constant 1.250000e-01 : f32
    %403 = vector.broadcast %cst_138 : f32 to vector<8x16xf32>
    %404 = arith.mulf %402, %403 : vector<8x16xf32>
    %cst_139 = arith.constant dense<0.000000e+00> : vector<8x32xf32>
    %405 = tpu.matmul %404, %389, %cst_139 {dimension_numbers = #tpu.dot_dimension_numbers<[1], [0], [0], [1], [0, 0, 1, 1], [], []>} : vector<8x16xf32>, vector<16x32xf32>, vector<8x32xf32> -> vector<8x32xf32>
    %c0_140 = arith.constant 0 : index
    %c0_141 = arith.constant 0 : index
    %406 = vector.load %arg8[%c0_140, %c0_141] : memref<32x128xf32, #tpu.memory_space<vmem>>, vector<32x128xf32>
    %cst_142 = arith.constant dense<0.000000e+00> : vector<8x128xf32>
    %407 = tpu.matmul %405, %406, %cst_142 {dimension_numbers = #tpu.dot_dimension_numbers<[1], [0], [0], [1], [0, 0, 1, 1], [], []>} : vector<8x32xf32>, vector<32x128xf32>, vector<8x128xf32> -> vector<8x128xf32>
    %c0_143 = arith.constant 0 : index
    %c0_144 = arith.constant 0 : index
    %408 = vector.load %arg10[%c0_143, %c0_144] : memref<8x128xf32, #tpu.memory_space<vmem>>, vector<1x128xf32>
    %409 = vector.broadcast %408 : vector<1x128xf32> to vector<8x128xf32>
    %410 = arith.addf %407, %409 : vector<8x128xf32>
    %cst_145 = arith.constant 0.000000e+00 : f32
    %411 = vector.broadcast %cst_145 : f32 to vector<8x128xf32>
    %412 = arith.maximumf %410, %411 : vector<8x128xf32>
    %c0_146 = arith.constant 0 : index
    %c0_147 = arith.constant 0 : index
    %413 = vector.load %arg9[%c0_146, %c0_147] : memref<128x128xf32, #tpu.memory_space<vmem>>, vector<128x128xf32>
    %cst_148 = arith.constant dense<0.000000e+00> : vector<8x128xf32>
    %414 = tpu.matmul %412, %413, %cst_148 {dimension_numbers = #tpu.dot_dimension_numbers<[1], [0], [0], [1], [0, 0, 1, 1], [], []>} : vector<8x128xf32>, vector<128x128xf32>, vector<8x128xf32> -> vector<8x128xf32>
    %c1_149 = arith.constant 1 : index
    %c0_150 = arith.constant 0 : index
    %415 = vector.load %arg10[%c1_149, %c0_150] : memref<8x128xf32, #tpu.memory_space<vmem>>, vector<1x128xf32>
    %416 = vector.broadcast %415 : vector<1x128xf32> to vector<8x128xf32>
    %417 = arith.addf %414, %416 : vector<8x128xf32>
    %c0_151 = arith.constant 0 : index
    %c0_152 = arith.constant 0 : index
    %c0_153 = arith.constant 0 : index
    %418 = vector.load %arg11[%c0_151, %c0_152, %c0_153] : memref<2x8x128xf32, #tpu.memory_space<vmem>>, vector<1x8x128xf32>
    %419 = vector.shape_cast %418 : vector<1x8x128xf32> to vector<8x128xf32>
    %420 = vector.shape_cast %412 : vector<8x128xf32> to vector<1x8x128xf32>
    tpu.vector_store %arg11[%c0_151, %c0_152, %c0_153], %420 {strides = array<i32>} : memref<2x8x128xf32, #tpu.memory_space<vmem>>, vector<1x8x128xf32>,
    %c1_154 = arith.constant 1 : index
    %c0_155 = arith.constant 0 : index
    %c0_156 = arith.constant 0 : index
    %421 = vector.load %arg11[%c1_154, %c0_155, %c0_156] : memref<2x8x128xf32, #tpu.memory_space<vmem>>, vector<1x8x128xf32>
    %422 = vector.shape_cast %421 : vector<1x8x128xf32> to vector<8x128xf32>
    %423 = vector.shape_cast %417 : vector<8x128xf32> to vector<1x8x128xf32>
    tpu.vector_store %arg11[%c1_154, %c0_155, %c0_156], %423 {strides = array<i32>} : memref<2x8x128xf32, #tpu.memory_space<vmem>>, vector<1x8x128xf32>,
    return
  }
}

</mosaic_0001>

<llo_original>
// kernel: tpu_custom_call.1
$region0: #{tpu_custom_call.1}
  #allocation0 [shape = 'u32[]', space=smem, size = 0x4, offset = 0x4, fixed_abs, tag = 'smem constant byte address 0x4 - core index']
  #allocation1 [shape = 'u32[72,128]{1,0:T(1,128)}', space=vmem, size = 0x9000, scoped, tag = 'internal scratch']
  %s0 = inlined_call_operand.vmem [shape: s32[16,8], index: 0, kind: input, shape index: {}]
  %s1 = inlined_call_operand.vmem [shape: f32[128,32], index: 1, kind: input, shape index: {}]
  %s2 = inlined_call_operand.vmem [shape: f32[2,32,384], index: 2, kind: input, shape index: {}]
  %s3 = inlined_call_operand.vmem [shape: f32[2,128,32], index: 3, kind: input, shape index: {}]
  %s4 = inlined_call_operand.vmem [shape: f32[2,32,128], index: 4, kind: input, shape index: {}]
  %s5 = inlined_call_operand.vmem [shape: f32[2,128,32], index: 5, kind: input, shape index: {}]
  %s6 = inlined_call_operand.vmem [shape: f32[2,8,32], index: 6, kind: input, shape index: {}]
  %s7 = inlined_call_operand.vmem [shape: f32[2,1,128], index: 7, kind: input, shape index: {}]
  %s8 = inlined_call_operand.vmem [shape: f32[32,128], index: 8, kind: input, shape index: {}]
  %s9 = inlined_call_operand.vmem [shape: f32[128,128], index: 9, kind: input, shape index: {}]
  %s10 = inlined_call_operand.vmem [shape: f32[8,128], index: 10, kind: input, shape index: {}]
  %s11 = inlined_call_operand.hbm [shape: f32[2,8,128], index: 11, kind: output, shape index: {}]
  %s12 = sld [smem:[#allocation0]]
  $region54: #{tpu_custom_call.1} parent=0
    _
  %s14 = ssub.s32 1, %s12
  %s15 = scalar_select 0, %s14, %s12
  $region1: #{tpu_custom_call.1} parent=0
    #allocation2 [shape = 'u8[8192]{0}', space=vmem, size = 0x2000, scoped, tag = 'output window, operand 0, single buffered']
    #allocation3 [shape = 's32[1]{0}', space=sflag, size = 0x4, scoped, tag = 'scoped memory for tpu_custom_call.1']
    %16 = vsyncpa [#allocation3], 0
    // Predicated region
    $region2: #{tpu_custom_call.1} parent=1 // pred_check
      _
    $region3: #{tpu_custom_call.1} parent=1 // pred_check_branch
      %18 = sbr.rel (0) target = $region5
    $region4: #{tpu_custom_call.1} parent=1 // pred_region
      _
    $region5: #{tpu_custom_call.1} parent=1 // pred_fallthru
      _
    // Predicated region
    $region6: #{tpu_custom_call.1} parent=1 // pred_check
      _
    $region7: #{tpu_custom_call.1} parent=1 // pred_check_branch
      %20 = sbr.rel (0) target = $region9
    $region8: #{tpu_custom_call.1} parent=1 // pred_region
      _
    $region9: #{tpu_custom_call.1} parent=1 // pred_fallthru
      _
    // Predicated region
    $region10: #{tpu_custom_call.1} parent=1 // pred_check
      _
    $region11: #{tpu_custom_call.1} parent=1 // pred_check_branch
      %22 = sbr.rel (0) target = $region13
    $region12: #{tpu_custom_call.1} parent=1 // pred_region
      _
    $region13: #{tpu_custom_call.1} parent=1 // pred_fallthru
      _
    // Predicated region
    $region14: #{tpu_custom_call.1} parent=1 // pred_check
      _
    $region15: #{tpu_custom_call.1} parent=1 // pred_check_branch
      %24 = sbr.rel (0) target = $region17
    $region16: #{tpu_custom_call.1} parent=1 // pred_region
      _
    $region17: #{tpu_custom_call.1} parent=1 // pred_fallthru
      _
    // Predicated region
    $region18: #{tpu_custom_call.1} parent=1 // pred_check
      _
    $region19: #{tpu_custom_call.1} parent=1 // pred_check_branch
      %26 = sbr.rel (0) target = $region21
    $region20: #{tpu_custom_call.1} parent=1 // pred_region
      _
    $region21: #{tpu_custom_call.1} parent=1 // pred_fallthru
      _
    // Predicated region
    $region22: #{tpu_custom_call.1} parent=1 // pred_check
      _
    $region23: #{tpu_custom_call.1} parent=1 // pred_check_branch
      %28 = sbr.rel (0) target = $region25
    $region24: #{tpu_custom_call.1} parent=1 // pred_region
      _
    $region25: #{tpu_custom_call.1} parent=1 // pred_fallthru
      _
    // Predicated region
    $region26: #{tpu_custom_call.1} parent=1 // pred_check
      _
    $region27: #{tpu_custom_call.1} parent=1 // pred_check_branch
      %30 = sbr.rel (0) target = $region29
    $region28: #{tpu_custom_call.1} parent=1 // pred_region
      _
    $region29: #{tpu_custom_call.1} parent=1 // pred_fallthru
      _
    // Predicated region
    $region30: #{tpu_custom_call.1} parent=1 // pred_check
      _
    $region31: #{tpu_custom_call.1} parent=1 // pred_check_branch
      %32 = sbr.rel (0) target = $region33
    $region32: #{tpu_custom_call.1} parent=1 // pred_region
      _
    $region33: #{tpu_custom_call.1} parent=1 // pred_fallthru
      _
    // Predicated region
    $region34: #{tpu_custom_call.1} parent=1 // pred_check
      _
    $region35: #{tpu_custom_call.1} parent=1 // pred_check_branch
      %34 = sbr.rel (0) target = $region37
    $region36: #{tpu_custom_call.1} parent=1 // pred_region
      _
    $region37: #{tpu_custom_call.1} parent=1 // pred_fallthru
      _
    // Predicated region
    $region38: #{tpu_custom_call.1} parent=1 // pred_check
      _
    $region39: #{tpu_custom_call.1} parent=1 // pred_check_branch
      %36 = sbr.rel (0) target = $region41
    $region40: #{tpu_custom_call.1} parent=1 // pred_region
      _
    $region41: #{tpu_custom_call.1} parent=1 // pred_fallthru
      _
    // Predicated region
    $region42: #{tpu_custom_call.1} parent=1 // pred_check
      _
    $region43: #{tpu_custom_call.1} parent=1 // pred_check_branch
      %38 = sbr.rel (0) target = $region45
    $region44: #{tpu_custom_call.1} parent=1 // pred_region
      _
    $region45: #{tpu_custom_call.1} parent=1 // pred_fallthru
      _
    %v39 = vlaneseq
    %v40 = vand.u32 %v39, 127
    %v41 = vld [vmem:[%s0] sm:$0xff]
    %v42 = vld [vmem:[%s0 + $0x8] sm:$0xff]
    %43 = vset.pattern.permute.xlu0 0
    %44 = vperm.xlu0 %43, %v41
    %v45 = vpop.permute.xlu0 %44
    %46 = vset.pattern.permute.xlu0 0
    %47 = vperm.xlu0 %46, %v42
    %v48 = vpop.permute.xlu0 %47
    %vm49 = vcmp.eq.s32.totalorder %v40, %v45
    %vm50 = vcmp.eq.s32.totalorder %v40, %v48
    %v51 = vsel %vm49, 1, 0
    %v52 = vsel %vm50, 1, 0
    %v53 = vcvt.s32.f32 %v51
    %v54 = vcvt.s32.f32 %v52
    %55 = vset.pattern.permute.xlu0 1
    %56 = vperm.xlu0 %55, %v41
    %v57 = vpop.permute.xlu0 %56
    %58 = vset.pattern.permute.xlu0 1
    %59 = vperm.xlu0 %58, %v42
    %v60 = vpop.permute.xlu0 %59
    %vm61 = vcmp.eq.s32.totalorder %v40, %v57
    %vm62 = vcmp.eq.s32.totalorder %v40, %v60
    %v63 = vsel %vm61, 1, 0
    %v64 = vsel %vm62, 1, 0
    %v65 = vcvt.s32.f32 %v63
    %v66 = vcvt.s32.f32 %v64
    %v67 = vadd.f32 %v53, %v65
    %v68 = vadd.f32 %v54, %v66
    %69 = vset.pattern.permute.xlu0 2
    %70 = vperm.xlu0 %69, %v41
    %v71 = vpop.permute.xlu0 %70
    %72 = vset.pattern.permute.xlu0 2
    %73 = vperm.xlu0 %72, %v42
    %v74 = vpop.permute.xlu0 %73
    %vm75 = vcmp.eq.s32.totalorder %v40, %v71
    %vm76 = vcmp.eq.s32.totalorder %v40, %v74
    %v77 = vsel %vm75, 1, 0
    %v78 = vsel %vm76, 1, 0
    %v79 = vcvt.s32.f32 %v77
    %v80 = vcvt.s32.f32 %v78
    %v81 = vadd.f32 %v67, %v79
    %v82 = vadd.f32 %v68, %v80
    %v83 = vld [vmem:[%s1] sm:$0xff]
    %v84 = vld [vmem:[%s1 + $0x8] sm:$0xff]
    %v85 = vld [vmem:[%s1 + $0x10] sm:$0xff]
    %v86 = vld [vmem:[%s1 + $0x18] sm:$0xff]
    %v87 = vld [vmem:[%s1 + $0x20] sm:$0xff]
    %v88 = vld [vmem:[%s1 + $0x28] sm:$0xff]
    %v89 = vld [vmem:[%s1 + $0x30] sm:$0xff]
    %v90 = vld [vmem:[%s1 + $0x38] sm:$0xff]
    %v91 = vld [vmem:[%s1 + $0x40] sm:$0xff]
    %v92 = vld [vmem:[%s1 + $0x48] sm:$0xff]
    %v93 = vld [vmem:[%s1 + $0x50] sm:$0xff]
    %v94 = vld [vmem:[%s1 + $0x58] sm:$0xff]
    %v95 = vld [vmem:[%s1 + $0x60] sm:$0xff]
    %v96 = vld [vmem:[%s1 + $0x68] sm:$0xff]
    %v97 = vld [vmem:[%s1 + $0x70] sm:$0xff]
    %v98 = vld [vmem:[%s1 + $0x78] sm:$0xff]
    %99 = vmatpush.msra.mxu0 %v98
    %100 = vmatpush.msra.mxu0 %v97
    %101 = vmatpush.msra.mxu0 %v96
    %102 = vmatpush.msra.mxu0 %v95
    %103 = vmatpush.msra.mxu0 %v94
    %104 = vmatpush.msra.mxu0 %v93
    %105 = vmatpush.msra.mxu0 %v92
    %106 = vmatpush.msra.mxu0 %v91
    %107 = vmatpush.msra.mxu0 %v90
    %108 = vmatpush.msra.mxu0 %v89
    %109 = vmatpush.msra.mxu0 %v88
    %110 = vmatpush.msra.mxu0 %v87
    %111 = vmatpush.msra.mxu0 %v86
    %112 = vmatpush.msra.mxu0 %v85
    %113 = vmatpush.msra.mxu0 %v84
    %114 = vmatpush.msra.mxu0 %v83
    %115 = vmatmul.f32.gmra.mxu0 %v81
    %v116 = vpop.f32.mrf.mxu0
    %v117 = vadd.f32 0.0, %v116
    %118 = vmatmul.f32.gmra.mxu0 %v82
    %v119 = vpop.f32.mrf.mxu0
    %v120 = vadd.f32 0.0, %v119
    %121 = vdwg.mxu0
    %v122 = vld [vmem:[%s6] sm:$0xff]
    %v123 = vld [vmem:[%s3] sm:$0xff]
    %v124 = vld [vmem:[%s3 + $0x8] sm:$0xff]
    %v125 = vld [vmem:[%s3 + $0x10] sm:$0xff]
    %v126 = vld [vmem:[%s3 + $0x18] sm:$0xff]
    %v127 = vld [vmem:[%s3 + $0x20] sm:$0xff]
    %v128 = vld [vmem:[%s3 + $0x28] sm:$0xff]
    %v129 = vld [vmem:[%s3 + $0x30] sm:$0xff]
    %v130 = vld [vmem:[%s3 + $0x38] sm:$0xff]
    %v131 = vld [vmem:[%s3 + $0x40] sm:$0xff]
    %v132 = vld [vmem:[%s3 + $0x48] sm:$0xff]
    %v133 = vld [vmem:[%s3 + $0x50] sm:$0xff]
    %v134 = vld [vmem:[%s3 + $0x58] sm:$0xff]
    %v135 = vld [vmem:[%s3 + $0x60] sm:$0xff]
    %v136 = vld [vmem:[%s3 + $0x68] sm:$0xff]
    %v137 = vld [vmem:[%s3 + $0x70] sm:$0xff]
    %v138 = vld [vmem:[%s3 + $0x78] sm:$0xff]
    %v139 = vld [vmem:[%s2] sm:$0xff]
    %v140 = vld [vmem:[%s2 + $0x8] sm:$0xff]
    %v141 = vld [vmem:[%s2 + $0x10] sm:$0xff]
    %v142 = vld [vmem:[%s2 + $0x18] sm:$0xff]
    %v143 = vld [vmem:[%s2 + $0x20] sm:$0xff]
    %v144 = vld [vmem:[%s2 + $0x28] sm:$0xff]
    %v145 = vld [vmem:[%s2 + $0x30] sm:$0xff]
    %v146 = vld [vmem:[%s2 + $0x38] sm:$0xff]
    %v147 = vld [vmem:[%s2 + $0x40] sm:$0xff]
    %v148 = vld [vmem:[%s2 + $0x48] sm:$0xff]
    %v149 = vld [vmem:[%s2 + $0x50] sm:$0xff]
    %v150 = vld [vmem:[%s2 + $0x58] sm:$0xff]
    %vm151 = vcmask 261120
    %v153 = vsel %vm151, %v117, 0
    %v156 = vsel %vm151, %v120, 0
    %158 = vmatpush.msra.mxu0 0.0
    %159 = vmatpush.msra.mxu0 0.0
    %160 = vmatpush.msra.mxu0 0.0
    %161 = vmatpush.msra.mxu0 0.0
    %162 = vmatpush.msra.mxu0 0.0
    %163 = vmatpush.msra.mxu0 0.0
    %164 = vmatpush.msra.mxu0 0.0
    %165 = vmatpush.msra.mxu0 0.0
    %166 = vmatpush.msra.mxu0 0.0
    %167 = vmatpush.msra.mxu0 0.0
    %168 = vmatpush.msra.mxu0 0.0
    %169 = vmatpush.msra.mxu0 0.0
    %170 = vmatpush.msra.mxu0 %v148
    %171 = vmatpush.msra.mxu0 %v145
    %172 = vmatpush.msra.mxu0 %v142
    %173 = vmatpush.msra.mxu0 %v139
    %174 = vmatmul.f32.gmra.mxu0 %v153
    %v175 = vpop.f32.mrf.mxu0
    %v176 = vadd.f32 0.0, %v175
    %177 = vmatmul.f32.gmra.mxu0 %v156
    %v178 = vpop.f32.mrf.mxu0
    %v179 = vadd.f32 0.0, %v178
    %180 = vdwg.mxu0
    %181 = vmatpush.msra.mxu0 0.0
    %182 = vmatpush.msra.mxu0 0.0
    %183 = vmatpush.msra.mxu0 0.0
    %184 = vmatpush.msra.mxu0 0.0
    %185 = vmatpush.msra.mxu0 0.0
    %186 = vmatpush.msra.mxu0 0.0
    %187 = vmatpush.msra.mxu0 0.0
    %188 = vmatpush.msra.mxu0 0.0
    %189 = vmatpush.msra.mxu0 0.0
    %190 = vmatpush.msra.mxu0 0.0
    %191 = vmatpush.msra.mxu0 0.0
    %192 = vmatpush.msra.mxu0 0.0
    %193 = vmatpush.msra.mxu0 %v149
    %194 = vmatpush.msra.mxu0 %v146
    %195 = vmatpush.msra.mxu0 %v143
    %196 = vmatpush.msra.mxu0 %v140
    %197 = vmatmul.f32.gmra.mxu0 %v153
    %v198 = vpop.f32.mrf.mxu0
    %v199 = vadd.f32 0.0, %v198
    %200 = vmatmul.f32.gmra.mxu0 %v156
    %v201 = vpop.f32.mrf.mxu0
    %v202 = vadd.f32 0.0, %v201
    %203 = vdwg.mxu0
    %204 = vmatpush.msra.mxu0 0.0
    %205 = vmatpush.msra.mxu0 0.0
    %206 = vmatpush.msra.mxu0 0.0
    %207 = vmatpush.msra.mxu0 0.0
    %208 = vmatpush.msra.mxu0 0.0
    %209 = vmatpush.msra.mxu0 0.0
    %210 = vmatpush.msra.mxu0 0.0
    %211 = vmatpush.msra.mxu0 0.0
    %212 = vmatpush.msra.mxu0 0.0
    %213 = vmatpush.msra.mxu0 0.0
    %214 = vmatpush.msra.mxu0 0.0
    %215 = vmatpush.msra.mxu0 0.0
    %216 = vmatpush.msra.mxu0 %v150
    %217 = vmatpush.msra.mxu0 %v147
    %218 = vmatpush.msra.mxu0 %v144
    %219 = vmatpush.msra.mxu0 %v141
    %220 = vmatmul.f32.gmra.mxu0 %v153
    %v221 = vpop.f32.mrf.mxu0
    %v222 = vadd.f32 0.0, %v221
    %223 = vmatmul.f32.gmra.mxu0 %v156
    %v224 = vpop.f32.mrf.mxu0
    %v225 = vadd.f32 0.0, %v224
    %226 = vdwg.mxu0
    %v228 = vsel %vm151, %v176, 0
    %v231 = vsel %vm151, %v199, 0
    %233 = vmatpush.xpose.msra.mxu0 0.0
    %234 = vmatpush.xpose.msra.mxu0 0.0
    %235 = vmatpush.xpose.msra.mxu0 0.0
    %236 = vmatpush.xpose.msra.mxu0 0.0
    %237 = vmatpush.xpose.msra.mxu0 0.0
    %238 = vmatpush.xpose.msra.mxu0 0.0
    %239 = vmatpush.xpose.msra.mxu0 0.0
    %240 = vmatpush.xpose.msra.mxu0 0.0
    %241 = vmatpush.xpose.msra.mxu0 0.0
    %242 = vmatpush.xpose.msra.mxu0 0.0
    %243 = vmatpush.xpose.msra.mxu0 0.0
    %244 = vmatpush.xpose.msra.mxu0 0.0
    %245 = vmatpush.xpose.msra.mxu0 0.0
    %246 = vmatpush.xpose.msra.mxu0 0.0
    %247 = vmatpush.xpose.msra.mxu0 0.0
    %248 = vmatpush.xpose.msra.mxu0 %v231
    %249 = vmatmul.f32.gmra.mxu0 %v228
    %v250 = vpop.f32.mrf.mxu0
    %v251 = vadd.f32 0.0, %v250
    %252 = vdwg.mxu0
    %v253 = vmul.f32 %v251, 0.17677669
    %254 = vrot.lane.b32.xlu0 %v176, 96
    %v255 = vpop.permute.xlu0 %254
    %256 = vrot.lane.b32.xlu0 %v199, 96
    %v257 = vpop.permute.xlu0 %256
    %v258 = vsel %vm151, %v255, 0
    %v260 = vsel %vm151, %v257, 0
    %262 = vmatpush.xpose.msra.mxu0 0.0
    %263 = vmatpush.xpose.msra.mxu0 0.0
    %264 = vmatpush.xpose.msra.mxu0 0.0
    %265 = vmatpush.xpose.msra.mxu0 0.0
    %266 = vmatpush.xpose.msra.mxu0 0.0
    %267 = vmatpush.xpose.msra.mxu0 0.0
    %268 = vmatpush.xpose.msra.mxu0 0.0
    %269 = vmatpush.xpose.msra.mxu0 0.0
    %270 = vmatpush.xpose.msra.mxu0 0.0
    %271 = vmatpush.xpose.msra.mxu0 0.0
    %272 = vmatpush.xpose.msra.mxu0 0.0
    %273 = vmatpush.xpose.msra.mxu0 0.0
    %274 = vmatpush.xpose.msra.mxu0 0.0
    %275 = vmatpush.xpose.msra.mxu0 0.0
    %276 = vmatpush.xpose.msra.mxu0 0.0
    %277 = vmatpush.xpose.msra.mxu0 %v260
    %278 = vmatmul.f32.gmra.mxu0 %v258
    %v279 = vpop.f32.mrf.mxu0
    %v280 = vadd.f32 0.0, %v279
    %281 = vdwg.mxu0
    %v282 = vmul.f32 %v280, 0.17677669
    %283 = vrot.lane.b32.xlu0 %v176, 64
    %v284 = vpop.permute.xlu0 %283
    %285 = vrot.lane.b32.xlu0 %v199, 64
    %v286 = vpop.permute.xlu0 %285
    %v287 = vsel %vm151, %v284, 0
    %v289 = vsel %vm151, %v286, 0
    %291 = vmatpush.xpose.msra.mxu0 0.0
    %292 = vmatpush.xpose.msra.mxu0 0.0
    %293 = vmatpush.xpose.msra.mxu0 0.0
    %294 = vmatpush.xpose.msra.mxu0 0.0
    %295 = vmatpush.xpose.msra.mxu0 0.0
    %296 = vmatpush.xpose.msra.mxu0 0.0
    %297 = vmatpush.xpose.msra.mxu0 0.0
    %298 = vmatpush.xpose.msra.mxu0 0.0
    %299 = vmatpush.xpose.msra.mxu0 0.0
    %300 = vmatpush.xpose.msra.mxu0 0.0
    %301 = vmatpush.xpose.msra.mxu0 0.0
    %302 = vmatpush.xpose.msra.mxu0 0.0
    %303 = vmatpush.xpose.msra.mxu0 0.0
    %304 = vmatpush.xpose.msra.mxu0 0.0
    %305 = vmatpush.xpose.msra.mxu0 0.0
    %306 = vmatpush.xpose.msra.mxu0 %v289
    %307 = vmatmul.f32.gmra.mxu0 %v287
    %v308 = vpop.f32.mrf.mxu0
    %v309 = vadd.f32 0.0, %v308
    %310 = vdwg.mxu0
    %v311 = vmul.f32 %v309, 0.17677669
    %312 = vrot.lane.b32.xlu0 %v176, 32
    %v313 = vpop.permute.xlu0 %312
    %314 = vrot.lane.b32.xlu0 %v199, 32
    %v315 = vpop.permute.xlu0 %314
    %v316 = vsel %vm151, %v313, 0
    %v318 = vsel %vm151, %v315, 0
    %320 = vmatpush.xpose.msra.mxu0 0.0
    %321 = vmatpush.xpose.msra.mxu0 0.0
    %322 = vmatpush.xpose.msra.mxu0 0.0
    %323 = vmatpush.xpose.msra.mxu0 0.0
    %324 = vmatpush.xpose.msra.mxu0 0.0
    %325 = vmatpush.xpose.msra.mxu0 0.0
    %326 = vmatpush.xpose.msra.mxu0 0.0
    %327 = vmatpush.xpose.msra.mxu0 0.0
    %328 = vmatpush.xpose.msra.mxu0 0.0
    %329 = vmatpush.xpose.msra.mxu0 0.0
    %330 = vmatpush.xpose.msra.mxu0 0.0
    %331 = vmatpush.xpose.msra.mxu0 0.0
    %332 = vmatpush.xpose.msra.mxu0 0.0
    %333 = vmatpush.xpose.msra.mxu0 0.0
    %334 = vmatpush.xpose.msra.mxu0 0.0
    %335 = vmatpush.xpose.msra.mxu0 %v318
    %336 = vmatmul.f32.gmra.mxu0 %v316
    %v337 = vpop.f32.mrf.mxu0
    %v338 = vadd.f32 0.0, %v337
    %339 = vdwg.mxu0
    %v340 = vmul.f32 %v338, 0.17677669
    %v342 = vsel %vm151, %v179, 0
    %v345 = vsel %vm151, %v202, 0
    %347 = vmatpush.xpose.msra.mxu0 0.0
    %348 = vmatpush.xpose.msra.mxu0 0.0
    %349 = vmatpush.xpose.msra.mxu0 0.0
    %350 = vmatpush.xpose.msra.mxu0 0.0
    %351 = vmatpush.xpose.msra.mxu0 0.0
    %352 = vmatpush.xpose.msra.mxu0 0.0
    %353 = vmatpush.xpose.msra.mxu0 0.0
    %354 = vmatpush.xpose.msra.mxu0 0.0
    %355 = vmatpush.xpose.msra.mxu0 0.0
    %356 = vmatpush.xpose.msra.mxu0 0.0
    %357 = vmatpush.xpose.msra.mxu0 0.0
    %358 = vmatpush.xpose.msra.mxu0 0.0
    %359 = vmatpush.xpose.msra.mxu0 0.0
    %360 = vmatpush.xpose.msra.mxu0 0.0
    %361 = vmatpush.xpose.msra.mxu0 0.0
    %362 = vmatpush.xpose.msra.mxu0 %v345
    %363 = vmatmul.f32.gmra.mxu0 %v342
    %v364 = vpop.f32.mrf.mxu0
    %v365 = vadd.f32 0.0, %v364
    %366 = vdwg.mxu0
    %v367 = vmul.f32 %v365, 0.17677669
    %368 = vrot.lane.b32.xlu0 %v179, 96
    %v369 = vpop.permute.xlu0 %368
    %370 = vrot.lane.b32.xlu0 %v202, 96
    %v371 = vpop.permute.xlu0 %370
    %v372 = vsel %vm151, %v369, 0
    %v374 = vsel %vm151, %v371, 0
    %376 = vmatpush.xpose.msra.mxu0 0.0
    %377 = vmatpush.xpose.msra.mxu0 0.0
    %378 = vmatpush.xpose.msra.mxu0 0.0
    %379 = vmatpush.xpose.msra.mxu0 0.0
    %380 = vmatpush.xpose.msra.mxu0 0.0
    %381 = vmatpush.xpose.msra.mxu0 0.0
    %382 = vmatpush.xpose.msra.mxu0 0.0
    %383 = vmatpush.xpose.msra.mxu0 0.0
    %384 = vmatpush.xpose.msra.mxu0 0.0
    %385 = vmatpush.xpose.msra.mxu0 0.0
    %386 = vmatpush.xpose.msra.mxu0 0.0
    %387 = vmatpush.xpose.msra.mxu0 0.0
    %388 = vmatpush.xpose.msra.mxu0 0.0
    %389 = vmatpush.xpose.msra.mxu0 0.0
    %390 = vmatpush.xpose.msra.mxu0 0.0
    %391 = vmatpush.xpose.msra.mxu0 %v374
    %392 = vmatmul.f32.gmra.mxu0 %v372
    %v393 = vpop.f32.mrf.mxu0
    %v394 = vadd.f32 0.0, %v393
    %395 = vdwg.mxu0
    %v396 = vmul.f32 %v394, 0.17677669
    %397 = vrot.lane.b32.xlu0 %v179, 64
    %v398 = vpop.permute.xlu0 %397
    %399 = vrot.lane.b32.xlu0 %v202, 64
    %v400 = vpop.permute.xlu0 %399
    %v401 = vsel %vm151, %v398, 0
    %v403 = vsel %vm151, %v400, 0
    %405 = vmatpush.xpose.msra.mxu0 0.0
    %406 = vmatpush.xpose.msra.mxu0 0.0
    %407 = vmatpush.xpose.msra.mxu0 0.0
    %408 = vmatpush.xpose.msra.mxu0 0.0
    %409 = vmatpush.xpose.msra.mxu0 0.0
    %410 = vmatpush.xpose.msra.mxu0 0.0
    %411 = vmatpush.xpose.msra.mxu0 0.0
    %412 = vmatpush.xpose.msra.mxu0 0.0
    %413 = vmatpush.xpose.msra.mxu0 0.0
    %414 = vmatpush.xpose.msra.mxu0 0.0
    %415 = vmatpush.xpose.msra.mxu0 0.0
    %416 = vmatpush.xpose.msra.mxu0 0.0
    %417 = vmatpush.xpose.msra.mxu0 0.0
    %418 = vmatpush.xpose.msra.mxu0 0.0
    %419 = vmatpush.xpose.msra.mxu0 0.0
    %420 = vmatpush.xpose.msra.mxu0 %v403
    %421 = vmatmul.f32.gmra.mxu0 %v401
    %v422 = vpop.f32.mrf.mxu0
    %v423 = vadd.f32 0.0, %v422
    %424 = vdwg.mxu0
    %v425 = vmul.f32 %v423, 0.17677669
    %426 = vrot.lane.b32.xlu0 %v179, 32
    %v427 = vpop.permute.xlu0 %426
    %428 = vrot.lane.b32.xlu0 %v202, 32
    %v429 = vpop.permute.xlu0 %428
    %v430 = vsel %vm151, %v427, 0
    %v432 = vsel %vm151, %v429, 0
    %434 = vmatpush.xpose.msra.mxu0 0.0
    %435 = vmatpush.xpose.msra.mxu0 0.0
    %436 = vmatpush.xpose.msra.mxu0 0.0
    %437 = vmatpush.xpose.msra.mxu0 0.0
    %438 = vmatpush.xpose.msra.mxu0 0.0
    %439 = vmatpush.xpose.msra.mxu0 0.0
    %440 = vmatpush.xpose.msra.mxu0 0.0
    %441 = vmatpush.xpose.msra.mxu0 0.0
    %442 = vmatpush.xpose.msra.mxu0 0.0
    %443 = vmatpush.xpose.msra.mxu0 0.0
    %444 = vmatpush.xpose.msra.mxu0 0.0
    %445 = vmatpush.xpose.msra.mxu0 0.0
    %446 = vmatpush.xpose.msra.mxu0 0.0
    %447 = vmatpush.xpose.msra.mxu0 0.0
    %448 = vmatpush.xpose.msra.mxu0 0.0
    %449 = vmatpush.xpose.msra.mxu0 %v432
    %450 = vmatmul.f32.gmra.mxu0 %v430
    %v451 = vpop.f32.mrf.mxu0
    %v452 = vadd.f32 0.0, %v451
    %453 = vdwg.mxu0
    %v454 = vmul.f32 %v452, 0.17677669
    %vm455 = vcmask 64512
    %v456 = vsel %vm455, %v253, -inf
    %457 = vmax.xlane.f32.xlu0 %v456
    %v458 = vpop.xlane.xlu0 %457
    %v459 = vsel %vm455, %v282, -inf
    %460 = vmax.xlane.f32.xlu0 %v459
    %v461 = vpop.xlane.xlu0 %460
    %v462 = vsel %vm455, %v311, -inf
    %463 = vmax.xlane.f32.xlu0 %v462
    %v464 = vpop.xlane.xlu0 %463
    %v465 = vsel %vm455, %v340, -inf
    %466 = vmax.xlane.f32.xlu0 %v465
    %v467 = vpop.xlane.xlu0 %466
    %v468 = vsel %vm455, %v367, -inf
    %469 = vmax.xlane.f32.xlu0 %v468
    %v470 = vpop.xlane.xlu0 %469
    %v471 = vsel %vm455, %v396, -inf
    %472 = vmax.xlane.f32.xlu0 %v471
    %v473 = vpop.xlane.xlu0 %472
    %v474 = vsel %vm455, %v425, -inf
    %475 = vmax.xlane.f32.xlu0 %v474
    %v476 = vpop.xlane.xlu0 %475
    %v477 = vsel %vm455, %v454, -inf
    %478 = vmax.xlane.f32.xlu0 %v477
    %v479 = vpop.xlane.xlu0 %478
    %v480 = vsub.f32 %v253, %v458
    %v481 = vsub.f32 %v282, %v461
    %v482 = vsub.f32 %v311, %v464
    %v483 = vsub.f32 %v340, %v467
    %v484 = vsub.f32 %v367, %v470
    %v485 = vsub.f32 %v396, %v473
    %v486 = vsub.f32 %v425, %v476
    %v487 = vsub.f32 %v454, %v479
    %v488 = vmul.f32 %v480, 1.442695
    %v489 = vpow.pop %v488
    %v490 = vmul.f32 %v481, 1.442695
    %v491 = vpow.pop %v490
    %v492 = vmul.f32 %v482, 1.442695
    %v493 = vpow.pop %v492
    %v494 = vmul.f32 %v483, 1.442695
    %v495 = vpow.pop %v494
    %v496 = vmul.f32 %v484, 1.442695
    %v497 = vpow.pop %v496
    %v498 = vmul.f32 %v485, 1.442695
    %v499 = vpow.pop %v498
    %v500 = vmul.f32 %v486, 1.442695
    %v501 = vpow.pop %v500
    %v502 = vmul.f32 %v487, 1.442695
    %v503 = vpow.pop %v502
    %v504 = vsel %vm455, %v489, 0.0
    %505 = vadd.xlane.f32.xlu0 %v504
    %v506 = vpop.xlane.xlu0 %505
    %v507 = vsel %vm455, %v491, 0.0
    %508 = vadd.xlane.f32.xlu0 %v507
    %v509 = vpop.xlane.xlu0 %508
    %v510 = vsel %vm455, %v493, 0.0
    %511 = vadd.xlane.f32.xlu0 %v510
    %v512 = vpop.xlane.xlu0 %511
    %v513 = vsel %vm455, %v495, 0.0
    %514 = vadd.xlane.f32.xlu0 %v513
    %v515 = vpop.xlane.xlu0 %514
    %v516 = vsel %vm455, %v497, 0.0
    %517 = vadd.xlane.f32.xlu0 %v516
    %v518 = vpop.xlane.xlu0 %517
    %v519 = vsel %vm455, %v499, 0.0
    %520 = vadd.xlane.f32.xlu0 %v519
    %v521 = vpop.xlane.xlu0 %520
    %v522 = vsel %vm455, %v501, 0.0
    %523 = vadd.xlane.f32.xlu0 %v522
    %v524 = vpop.xlane.xlu0 %523
    %v525 = vsel %vm455, %v503, 0.0
    %526 = vadd.xlane.f32.xlu0 %v525
    %v527 = vpop.xlane.xlu0 %526
    %v528 = vrcp.pop %v506
    %v529 = vrcp.pop %v509
    %v530 = vrcp.pop %v512
    %v531 = vrcp.pop %v515
    %v532 = vrcp.pop %v518
    %v533 = vrcp.pop %v521
    %v534 = vrcp.pop %v524
    %v535 = vrcp.pop %v527
    %v536 = vmul.f32 %v489, %v528
    %v537 = vmul.f32 %v491, %v529
    %v538 = vmul.f32 %v493, %v530
    %v539 = vmul.f32 %v495, %v531
    %v540 = vmul.f32 %v497, %v532
    %v541 = vmul.f32 %v499, %v533
    %v542 = vmul.f32 %v501, %v534
    %v543 = vmul.f32 %v503, %v535
    %v545 = vsel %vm455, %v536, 0
    %547 = vmatpush.msra.mxu0 0.0
    %548 = vmatpush.msra.mxu0 0.0
    %549 = vmatpush.msra.mxu0 0.0
    %550 = vmatpush.msra.mxu0 0.0
    %551 = vmatpush.msra.mxu0 0.0
    %552 = vmatpush.msra.mxu0 0.0
    %553 = vmatpush.msra.mxu0 0.0
    %554 = vmatpush.msra.mxu0 0.0
    %555 = vmatpush.msra.mxu0 0.0
    %556 = vmatpush.msra.mxu0 0.0
    %557 = vmatpush.msra.mxu0 0.0
    %558 = vmatpush.msra.mxu0 0.0
    %559 = vmatpush.msra.mxu0 0.0
    %560 = vmatpush.msra.mxu0 0.0
    %561 = vmatpush.msra.mxu0 0.0
    %562 = vmatpush.msra.mxu0 %v222
    %563 = vmatmul.f32.gmra.mxu0 %v545
    %v564 = vpop.f32.mrf.mxu0
    %v565 = vadd.f32 0.0, %v564
    %566 = vdwg.mxu0
    %568 = vrot.lane.b32.xlu0 %v222, 96
    %v569 = vpop.permute.xlu0 %568
    %v572 = vsel %vm455, %v537, 0
    %574 = vmatpush.msra.mxu0 0.0
    %575 = vmatpush.msra.mxu0 0.0
    %576 = vmatpush.msra.mxu0 0.0
    %577 = vmatpush.msra.mxu0 0.0
    %578 = vmatpush.msra.mxu0 0.0
    %579 = vmatpush.msra.mxu0 0.0
    %580 = vmatpush.msra.mxu0 0.0
    %581 = vmatpush.msra.mxu0 0.0
    %582 = vmatpush.msra.mxu0 0.0
    %583 = vmatpush.msra.mxu0 0.0
    %584 = vmatpush.msra.mxu0 0.0
    %585 = vmatpush.msra.mxu0 0.0
    %586 = vmatpush.msra.mxu0 0.0
    %587 = vmatpush.msra.mxu0 0.0
    %588 = vmatpush.msra.mxu0 0.0
    %589 = vmatpush.msra.mxu0 %v569
    %590 = vmatmul.f32.gmra.mxu0 %v572
    %v591 = vpop.f32.mrf.mxu0
    %v592 = vadd.f32 0.0, %v591
    %593 = vdwg.mxu0
    %v595 = vsel %vm151, %v592, 0
    %597 = vmatpush.msra.mxu0 0.0
    %598 = vmatpush.msra.mxu0 0.0
    %599 = vmatpush.msra.mxu0 0.0
    %600 = vmatpush.msra.mxu0 0.0
    %601 = vmatpush.msra.mxu0 0.0
    %602 = vmatpush.msra.mxu0 0.0
    %603 = vmatpush.msra.mxu0 0.0
    %604 = vmatpush.msra.mxu0 0.0
    %605 = vmatpush.msra.mxu0 0.0
    %606 = vmatpush.msra.mxu0 0.0
    %607 = vmatpush.msra.mxu0 0.0
    %608 = vmatpush.msra.mxu0 0.0
    %609 = vmatpush.msra.mxu0 %v130
    %610 = vmatpush.msra.mxu0 %v129
    %611 = vmatpush.msra.mxu0 %v128
    %612 = vmatpush.msra.mxu0 %v127
    %613 = vmatmul.f32.gmra.mxu0 %v595
    %v614 = vpop.f32.mrf.mxu0
    %v615 = vadd.f32 0.0, %v614
    %616 = vdwg.mxu0
    %v618 = vsel %vm151, %v565, 0
    %620 = vmatpush.msra.mxu0 0.0
    %621 = vmatpush.msra.mxu0 0.0
    %622 = vmatpush.msra.mxu0 0.0
    %623 = vmatpush.msra.mxu0 0.0
    %624 = vmatpush.msra.mxu0 0.0
    %625 = vmatpush.msra.mxu0 0.0
    %626 = vmatpush.msra.mxu0 0.0
    %627 = vmatpush.msra.mxu0 0.0
    %628 = vmatpush.msra.mxu0 0.0
    %629 = vmatpush.msra.mxu0 0.0
    %630 = vmatpush.msra.mxu0 0.0
    %631 = vmatpush.msra.mxu0 0.0
    %632 = vmatpush.msra.mxu0 %v126
    %633 = vmatpush.msra.mxu0 %v125
    %634 = vmatpush.msra.mxu0 %v124
    %635 = vmatpush.msra.mxu0 %v123
    %636 = vmatmul.f32.gmra.mxu0 %v618
    %v637 = vpop.f32.mrf.mxu0
    %v638 = vadd.f32 %v615, %v637
    %639 = vdwg.mxu0
    %640 = vrot.lane.b32.xlu0 %v222, 64
    %v641 = vpop.permute.xlu0 %640
    %v644 = vsel %vm455, %v538, 0
    %646 = vmatpush.msra.mxu0 0.0
    %647 = vmatpush.msra.mxu0 0.0
    %648 = vmatpush.msra.mxu0 0.0
    %649 = vmatpush.msra.mxu0 0.0
    %650 = vmatpush.msra.mxu0 0.0
    %651 = vmatpush.msra.mxu0 0.0
    %652 = vmatpush.msra.mxu0 0.0
    %653 = vmatpush.msra.mxu0 0.0
    %654 = vmatpush.msra.mxu0 0.0
    %655 = vmatpush.msra.mxu0 0.0
    %656 = vmatpush.msra.mxu0 0.0
    %657 = vmatpush.msra.mxu0 0.0
    %658 = vmatpush.msra.mxu0 0.0
    %659 = vmatpush.msra.mxu0 0.0
    %660 = vmatpush.msra.mxu0 0.0
    %661 = vmatpush.msra.mxu0 %v641
    %662 = vmatmul.f32.gmra.mxu0 %v644
    %v663 = vpop.f32.mrf.mxu0
    %v664 = vadd.f32 0.0, %v663
    %665 = vdwg.mxu0
    %v667 = vsel %vm151, %v664, 0
    %669 = vmatpush.msra.mxu0 0.0
    %670 = vmatpush.msra.mxu0 0.0
    %671 = vmatpush.msra.mxu0 0.0
    %672 = vmatpush.msra.mxu0 0.0
    %673 = vmatpush.msra.mxu0 0.0
    %674 = vmatpush.msra.mxu0 0.0
    %675 = vmatpush.msra.mxu0 0.0
    %676 = vmatpush.msra.mxu0 0.0
    %677 = vmatpush.msra.mxu0 0.0
    %678 = vmatpush.msra.mxu0 0.0
    %679 = vmatpush.msra.mxu0 0.0
    %680 = vmatpush.msra.mxu0 0.0
    %681 = vmatpush.msra.mxu0 %v134
    %682 = vmatpush.msra.mxu0 %v133
    %683 = vmatpush.msra.mxu0 %v132
    %684 = vmatpush.msra.mxu0 %v131
    %685 = vmatmul.f32.gmra.mxu0 %v667
    %v686 = vpop.f32.mrf.mxu0
    %v687 = vadd.f32 0.0, %v686
    %688 = vdwg.mxu0
    %v689 = vadd.f32 %v638, %v687
    %690 = vrot.lane.b32.xlu0 %v222, 32
    %v691 = vpop.permute.xlu0 %690
    %v694 = vsel %vm455, %v539, 0
    %696 = vmatpush.msra.mxu0 0.0
    %697 = vmatpush.msra.mxu0 0.0
    %698 = vmatpush.msra.mxu0 0.0
    %699 = vmatpush.msra.mxu0 0.0
    %700 = vmatpush.msra.mxu0 0.0
    %701 = vmatpush.msra.mxu0 0.0
    %702 = vmatpush.msra.mxu0 0.0
    %703 = vmatpush.msra.mxu0 0.0
    %704 = vmatpush.msra.mxu0 0.0
    %705 = vmatpush.msra.mxu0 0.0
    %706 = vmatpush.msra.mxu0 0.0
    %707 = vmatpush.msra.mxu0 0.0
    %708 = vmatpush.msra.mxu0 0.0
    %709 = vmatpush.msra.mxu0 0.0
    %710 = vmatpush.msra.mxu0 0.0
    %711 = vmatpush.msra.mxu0 %v691
    %712 = vmatmul.f32.gmra.mxu0 %v694
    %v713 = vpop.f32.mrf.mxu0
    %v714 = vadd.f32 0.0, %v713
    %715 = vdwg.mxu0
    %v717 = vsel %vm151, %v714, 0
    %719 = vmatpush.msra.mxu0 0.0
    %720 = vmatpush.msra.mxu0 0.0
    %721 = vmatpush.msra.mxu0 0.0
    %722 = vmatpush.msra.mxu0 0.0
    %723 = vmatpush.msra.mxu0 0.0
    %724 = vmatpush.msra.mxu0 0.0
    %725 = vmatpush.msra.mxu0 0.0
    %726 = vmatpush.msra.mxu0 0.0
    %727 = vmatpush.msra.mxu0 0.0
    %728 = vmatpush.msra.mxu0 0.0
    %729 = vmatpush.msra.mxu0 0.0
    %730 = vmatpush.msra.mxu0 0.0
    %731 = vmatpush.msra.mxu0 %v138
    %732 = vmatpush.msra.mxu0 %v137
    %733 = vmatpush.msra.mxu0 %v136
    %734 = vmatpush.msra.mxu0 %v135
    %735 = vmatmul.f32.gmra.mxu0 %v717
    %v736 = vpop.f32.mrf.mxu0
    %v737 = vadd.f32 0.0, %v736
    %738 = vdwg.mxu0
    %v739 = vadd.f32 %v689, %v737
    %v741 = vsel %vm455, %v540, 0
    %743 = vmatpush.msra.mxu0 0.0
    %744 = vmatpush.msra.mxu0 0.0
    %745 = vmatpush.msra.mxu0 0.0
    %746 = vmatpush.msra.mxu0 0.0
    %747 = vmatpush.msra.mxu0 0.0
    %748 = vmatpush.msra.mxu0 0.0
    %749 = vmatpush.msra.mxu0 0.0
    %750 = vmatpush.msra.mxu0 0.0
    %751 = vmatpush.msra.mxu0 0.0
    %752 = vmatpush.msra.mxu0 0.0
    %753 = vmatpush.msra.mxu0 0.0
    %754 = vmatpush.msra.mxu0 0.0
    %755 = vmatpush.msra.mxu0 0.0
    %756 = vmatpush.msra.mxu0 0.0
    %757 = vmatpush.msra.mxu0 0.0
    %758 = vmatpush.msra.mxu0 %v225
    %759 = vmatmul.f32.gmra.mxu0 %v741
    %v760 = vpop.f32.mrf.mxu0
    %v761 = vadd.f32 0.0, %v760
    %762 = vdwg.mxu0
    %764 = vrot.lane.b32.xlu0 %v225, 96
    %v765 = vpop.permute.xlu0 %764
    %v768 = vsel %vm455, %v541, 0
    %770 = vmatpush.msra.mxu0 0.0
    %771 = vmatpush.msra.mxu0 0.0
    %772 = vmatpush.msra.mxu0 0.0
    %773 = vmatpush.msra.mxu0 0.0
    %774 = vmatpush.msra.mxu0 0.0
    %775 = vmatpush.msra.mxu0 0.0
    %776 = vmatpush.msra.mxu0 0.0
    %777 = vmatpush.msra.mxu0 0.0
    %778 = vmatpush.msra.mxu0 0.0
    %779 = vmatpush.msra.mxu0 0.0
    %780 = vmatpush.msra.mxu0 0.0
    %781 = vmatpush.msra.mxu0 0.0
    %782 = vmatpush.msra.mxu0 0.0
    %783 = vmatpush.msra.mxu0 0.0
    %784 = vmatpush.msra.mxu0 0.0
    %785 = vmatpush.msra.mxu0 %v765
    %786 = vmatmul.f32.gmra.mxu0 %v768
    %v787 = vpop.f32.mrf.mxu0
    %v788 = vadd.f32 0.0, %v787
    %789 = vdwg.mxu0
    %v791 = vsel %vm151, %v788, 0
    %793 = vmatpush.msra.mxu0 0.0
    %794 = vmatpush.msra.mxu0 0.0
    %795 = vmatpush.msra.mxu0 0.0
    %796 = vmatpush.msra.mxu0 0.0
    %797 = vmatpush.msra.mxu0 0.0
    %798 = vmatpush.msra.mxu0 0.0
    %799 = vmatpush.msra.mxu0 0.0
    %800 = vmatpush.msra.mxu0 0.0
    %801 = vmatpush.msra.mxu0 0.0
    %802 = vmatpush.msra.mxu0 0.0
    %803 = vmatpush.msra.mxu0 0.0
    %804 = vmatpush.msra.mxu0 0.0
    %805 = vmatpush.msra.mxu0 %v130
    %806 = vmatpush.msra.mxu0 %v129
    %807 = vmatpush.msra.mxu0 %v128
    %808 = vmatpush.msra.mxu0 %v127
    %809 = vmatmul.f32.gmra.mxu0 %v791
    %v810 = vpop.f32.mrf.mxu0
    %v811 = vadd.f32 0.0, %v810
    %812 = vdwg.mxu0
    %v814 = vsel %vm151, %v761, 0
    %816 = vmatpush.msra.mxu0 0.0
    %817 = vmatpush.msra.mxu0 0.0
    %818 = vmatpush.msra.mxu0 0.0
    %819 = vmatpush.msra.mxu0 0.0
    %820 = vmatpush.msra.mxu0 0.0
    %821 = vmatpush.msra.mxu0 0.0
    %822 = vmatpush.msra.mxu0 0.0
    %823 = vmatpush.msra.mxu0 0.0
    %824 = vmatpush.msra.mxu0 0.0
    %825 = vmatpush.msra.mxu0 0.0
    %826 = vmatpush.msra.mxu0 0.0
    %827 = vmatpush.msra.mxu0 0.0
    %828 = vmatpush.msra.mxu0 %v126
    %829 = vmatpush.msra.mxu0 %v125
    %830 = vmatpush.msra.mxu0 %v124
    %831 = vmatpush.msra.mxu0 %v123
    %832 = vmatmul.f32.gmra.mxu0 %v814
    %v833 = vpop.f32.mrf.mxu0
    %v834 = vadd.f32 %v811, %v833
    %835 = vdwg.mxu0
    %836 = vrot.lane.b32.xlu0 %v225, 64
    %v837 = vpop.permute.xlu0 %836
    %v840 = vsel %vm455, %v542, 0
    %842 = vmatpush.msra.mxu0 0.0
    %843 = vmatpush.msra.mxu0 0.0
    %844 = vmatpush.msra.mxu0 0.0
    %845 = vmatpush.msra.mxu0 0.0
    %846 = vmatpush.msra.mxu0 0.0
    %847 = vmatpush.msra.mxu0 0.0
    %848 = vmatpush.msra.mxu0 0.0
    %849 = vmatpush.msra.mxu0 0.0
    %850 = vmatpush.msra.mxu0 0.0
    %851 = vmatpush.msra.mxu0 0.0
    %852 = vmatpush.msra.mxu0 0.0
    %853 = vmatpush.msra.mxu0 0.0
    %854 = vmatpush.msra.mxu0 0.0
    %855 = vmatpush.msra.mxu0 0.0
    %856 = vmatpush.msra.mxu0 0.0
    %857 = vmatpush.msra.mxu0 %v837
    %858 = vmatmul.f32.gmra.mxu0 %v840
    %v859 = vpop.f32.mrf.mxu0
    %v860 = vadd.f32 0.0, %v859
    %861 = vdwg.mxu0
    %v863 = vsel %vm151, %v860, 0
    %865 = vmatpush.msra.mxu0 0.0
    %866 = vmatpush.msra.mxu0 0.0
    %867 = vmatpush.msra.mxu0 0.0
    %868 = vmatpush.msra.mxu0 0.0
    %869 = vmatpush.msra.mxu0 0.0
    %870 = vmatpush.msra.mxu0 0.0
    %871 = vmatpush.msra.mxu0 0.0
    %872 = vmatpush.msra.mxu0 0.0
    %873 = vmatpush.msra.mxu0 0.0
    %874 = vmatpush.msra.mxu0 0.0
    %875 = vmatpush.msra.mxu0 0.0
    %876 = vmatpush.msra.mxu0 0.0
    %877 = vmatpush.msra.mxu0 %v134
    %878 = vmatpush.msra.mxu0 %v133
    %879 = vmatpush.msra.mxu0 %v132
    %880 = vmatpush.msra.mxu0 %v131
    %881 = vmatmul.f32.gmra.mxu0 %v863
    %v882 = vpop.f32.mrf.mxu0
    %v883 = vadd.f32 0.0, %v882
    %884 = vdwg.mxu0
    %v885 = vadd.f32 %v834, %v883
    %886 = vrot.lane.b32.xlu0 %v225, 32
    %v887 = vpop.permute.xlu0 %886
    %v890 = vsel %vm455, %v543, 0
    %892 = vmatpush.msra.mxu0 0.0
    %893 = vmatpush.msra.mxu0 0.0
    %894 = vmatpush.msra.mxu0 0.0
    %895 = vmatpush.msra.mxu0 0.0
    %896 = vmatpush.msra.mxu0 0.0
    %897 = vmatpush.msra.mxu0 0.0
    %898 = vmatpush.msra.mxu0 0.0
    %899 = vmatpush.msra.mxu0 0.0
    %900 = vmatpush.msra.mxu0 0.0
    %901 = vmatpush.msra.mxu0 0.0
    %902 = vmatpush.msra.mxu0 0.0
    %903 = vmatpush.msra.mxu0 0.0
    %904 = vmatpush.msra.mxu0 0.0
    %905 = vmatpush.msra.mxu0 0.0
    %906 = vmatpush.msra.mxu0 0.0
    %907 = vmatpush.msra.mxu0 %v887
    %908 = vmatmul.f32.gmra.mxu0 %v890
    %v909 = vpop.f32.mrf.mxu0
    %v910 = vadd.f32 0.0, %v909
    %911 = vdwg.mxu0
    %v913 = vsel %vm151, %v910, 0
    %915 = vmatpush.msra.mxu0 0.0
    %916 = vmatpush.msra.mxu0 0.0
    %917 = vmatpush.msra.mxu0 0.0
    %918 = vmatpush.msra.mxu0 0.0
    %919 = vmatpush.msra.mxu0 0.0
    %920 = vmatpush.msra.mxu0 0.0
    %921 = vmatpush.msra.mxu0 0.0
    %922 = vmatpush.msra.mxu0 0.0
    %923 = vmatpush.msra.mxu0 0.0
    %924 = vmatpush.msra.mxu0 0.0
    %925 = vmatpush.msra.mxu0 0.0
    %926 = vmatpush.msra.mxu0 0.0
    %927 = vmatpush.msra.mxu0 %v138
    %928 = vmatpush.msra.mxu0 %v137
    %929 = vmatpush.msra.mxu0 %v136
    %930 = vmatpush.msra.mxu0 %v135
    %931 = vmatmul.f32.gmra.mxu0 %v913
    %v932 = vpop.f32.mrf.mxu0
    %v933 = vadd.f32 0.0, %v932
    %934 = vdwg.mxu0
    %v935 = vadd.f32 %v885, %v933
    %v936 = vperm.slane %v122, 0
    %v937 = vadd.f32 %v739, %v936
    %v938 = vadd.f32 %v935, %v936
    %v939 = vadd.f32 %v937, %v117
    %v940 = vadd.f32 %v938, %v120
    %v941 = vsel %vm151, %v939, 0.0
    %942 = vadd.xlane.f32.xlu0 %v941
    %v943 = vpop.xlane.xlu0 %942
    %v944 = vsel %vm151, %v940, 0.0
    %945 = vadd.xlane.f32.xlu0 %v944
    %v946 = vpop.xlane.xlu0 %945
    %v947 = vrcp.pop 32.0
    %v948 = vmul.f32 32.0, %v947
    %v949 = vsub.f32 1.0, %v948
    %v950 = vmul.f32 %v947, %v949
    %v951 = vadd.f32 %v947, %v950
    %vm952 = vweird.f32 %v947
    %v953 = vsel %vm952, %v947, %v951
    %v954 = vmul.f32 %v943, %v953
    %v955 = vmul.f32 %v946, %v953
    %v956 = vsub.f32 %v939, %v954
    %v957 = vsub.f32 %v940, %v955
    %v958 = vmul.f32 %v956, %v956
    %v959 = vmul.f32 %v957, %v957
    %v960 = vsel %vm151, %v958, 0.0
    %961 = vadd.xlane.f32.xlu0 %v960
    %v962 = vpop.xlane.xlu0 %961
    %v963 = vsel %vm151, %v959, 0.0
    %964 = vadd.xlane.f32.xlu0 %v963
    %v965 = vpop.xlane.xlu0 %964
    %v966 = vmul.f32 %v962, %v953
    %v967 = vmul.f32 %v965, %v953
    %v968 = vadd.f32 %v966, 1e-05
    %v969 = vadd.f32 %v967, 1e-05
    %v970 = vrsqrt.pop %v968
    %v971 = vmul.f32 %v970, %v968
    %v972 = vmul.f32 %v971, %v970
    %v973 = vmul.f32 0.5, %v972
    %v974 = vsub.f32 1.5, %v973
    %v975 = vmul.f32 %v970, %v974
    %vm976 = vweird.f32 %v968
    %vm977 = vweird.f32 %v970
    %vm978 = vmor %vm976, %vm977
    %v979 = vsel %vm978, %v970, %v975
    %v980 = vrsqrt.pop %v969
    %v981 = vmul.f32 %v980, %v969
    %v982 = vmul.f32 %v981, %v980
    %v983 = vmul.f32 0.5, %v982
    %v984 = vsub.f32 1.5, %v983
    %v985 = vmul.f32 %v980, %v984
    %vm986 = vweird.f32 %v969
    %vm987 = vweird.f32 %v980
    %vm988 = vmor %vm986, %vm987
    %v989 = vsel %vm988, %v980, %v985
    %v990 = vmul.f32 %v956, %v979
    %v991 = vmul.f32 %v957, %v989
    %v992 = vperm.slane %v122, 2
    %v993 = vmul.f32 %v990, %v992
    %v994 = vmul.f32 %v991, %v992
    %v995 = vperm.slane %v122, 3
    %v996 = vadd.f32 %v993, %v995
    %v997 = vadd.f32 %v994, %v995
    %v998 = vld [vmem:[%s4] sm:$0xff]
    %v999 = vld [vmem:[%s4 + $0x8] sm:$0xff]
    %v1000 = vld [vmem:[%s4 + $0x10] sm:$0xff]
    %v1001 = vld [vmem:[%s4 + $0x18] sm:$0xff]
    %v1002 = vld [vmem:[%s7] sm:$0x1]
    %v1004 = vperm.slane %v1002, 0
    %v1007 = vsel %vm151, %v996, 0
    %v1010 = vsel %vm151, %v997, 0
    %1012 = vmatpush.msra.mxu0 0.0
    %1013 = vmatpush.msra.mxu0 0.0
    %1014 = vmatpush.msra.mxu0 0.0
    %1015 = vmatpush.msra.mxu0 0.0
    %1016 = vmatpush.msra.mxu0 0.0
    %1017 = vmatpush.msra.mxu0 0.0
    %1018 = vmatpush.msra.mxu0 0.0
    %1019 = vmatpush.msra.mxu0 0.0
    %1020 = vmatpush.msra.mxu0 0.0
    %1021 = vmatpush.msra.mxu0 0.0
    %1022 = vmatpush.msra.mxu0 0.0
    %1023 = vmatpush.msra.mxu0 0.0
    %1024 = vmatpush.msra.mxu0 %v1001
    %1025 = vmatpush.msra.mxu0 %v1000
    %1026 = vmatpush.msra.mxu0 %v999
    %1027 = vmatpush.msra.mxu0 %v998
    %1028 = vmatmul.f32.gmra.mxu0 %v1007
    %v1029 = vpop.f32.mrf.mxu0
    %v1030 = vadd.f32 %v1004, %v1029
    %1031 = vmatmul.f32.gmra.mxu0 %v1010
    %v1032 = vpop.f32.mrf.mxu0
    %v1033 = vadd.f32 %v1004, %v1032
    %1034 = vdwg.mxu0
    %v1035 = vmax.f32 %v1030, 0.0
    %v1036 = vmax.f32 %v1033, 0.0
    %v1037 = vld [vmem:[%s5] sm:$0xff]
    %v1038 = vld [vmem:[%s5 + $0x8] sm:$0xff]
    %v1039 = vld [vmem:[%s5 + $0x10] sm:$0xff]
    %v1040 = vld [vmem:[%s5 + $0x18] sm:$0xff]
    %v1041 = vld [vmem:[%s5 + $0x20] sm:$0xff]
    %v1042 = vld [vmem:[%s5 + $0x28] sm:$0xff]
    %v1043 = vld [vmem:[%s5 + $0x30] sm:$0xff]
    %v1044 = vld [vmem:[%s5 + $0x38] sm:$0xff]
    %v1045 = vld [vmem:[%s5 + $0x40] sm:$0xff]
    %v1046 = vld [vmem:[%s5 + $0x48] sm:$0xff]
    %v1047 = vld [vmem:[%s5 + $0x50] sm:$0xff]
    %v1048 = vld [vmem:[%s5 + $0x58] sm:$0xff]
    %v1049 = vld [vmem:[%s5 + $0x60] sm:$0xff]
    %v1050 = vld [vmem:[%s5 + $0x68] sm:$0xff]
    %v1051 = vld [vmem:[%s5 + $0x70] sm:$0xff]
    %v1052 = vld [vmem:[%s5 + $0x78] sm:$0xff]
    %v1053 = vperm.slane %v122, 1
    %1054 = vmatpush.msra.mxu0 %v1052
    %1055 = vmatpush.msra.mxu0 %v1051
    %1056 = vmatpush.msra.mxu0 %v1050
    %1057 = vmatpush.msra.mxu0 %v1049
    %1058 = vmatpush.msra.mxu0 %v1048
    %1059 = vmatpush.msra.mxu0 %v1047
    %1060 = vmatpush.msra.mxu0 %v1046
    %1061 = vmatpush.msra.mxu0 %v1045
    %1062 = vmatpush.msra.mxu0 %v1044
    %1063 = vmatpush.msra.mxu0 %v1043
    %1064 = vmatpush.msra.mxu0 %v1042
    %1065 = vmatpush.msra.mxu0 %v1041
    %1066 = vmatpush.msra.mxu0 %v1040
    %1067 = vmatpush.msra.mxu0 %v1039
    %1068 = vmatpush.msra.mxu0 %v1038
    %1069 = vmatpush.msra.mxu0 %v1037
    %1070 = vmatmul.f32.gmra.mxu0 %v1035
    %v1071 = vpop.f32.mrf.mxu0
    %v1072 = vadd.f32 %v1053, %v1071
    %1073 = vmatmul.f32.gmra.mxu0 %v1036
    %v1074 = vpop.f32.mrf.mxu0
    %v1075 = vadd.f32 %v1053, %v1074
    %1076 = vdwg.mxu0
    %v1077 = vadd.f32 %v1072, %v996
    %v1078 = vadd.f32 %v1075, %v997
    %v1079 = vsel %vm151, %v1077, 0.0
    %1080 = vadd.xlane.f32.xlu0 %v1079
    %v1081 = vpop.xlane.xlu0 %1080
    %v1082 = vsel %vm151, %v1078, 0.0
    %1083 = vadd.xlane.f32.xlu0 %v1082
    %v1084 = vpop.xlane.xlu0 %1083
    %v1085 = vmul.f32 %v1081, %v953
    %v1086 = vmul.f32 %v1084, %v953
    %v1087 = vsub.f32 %v1077, %v1085
    %v1088 = vsub.f32 %v1078, %v1086
    %v1089 = vmul.f32 %v1087, %v1087
    %v1090 = vmul.f32 %v1088, %v1088
    %v1091 = vsel %vm151, %v1089, 0.0
    %1092 = vadd.xlane.f32.xlu0 %v1091
    %v1093 = vpop.xlane.xlu0 %1092
    %v1094 = vsel %vm151, %v1090, 0.0
    %1095 = vadd.xlane.f32.xlu0 %v1094
    %v1096 = vpop.xlane.xlu0 %1095
    %v1097 = vmul.f32 %v1093, %v953
    %v1098 = vmul.f32 %v1096, %v953
    %v1099 = vadd.f32 %v1097, 1e-05
    %v1100 = vadd.f32 %v1098, 1e-05
    %v1101 = vrsqrt.pop %v1099
    %v1102 = vmul.f32 %v1101, %v1099
    %v1103 = vmul.f32 %v1102, %v1101
    %v1104 = vmul.f32 0.5, %v1103
    %v1105 = vsub.f32 1.5, %v1104
    %v1106 = vmul.f32 %v1101, %v1105
    %vm1107 = vweird.f32 %v1099
    %vm1108 = vweird.f32 %v1101
    %vm1109 = vmor %vm1107, %vm1108
    %v1110 = vsel %vm1109, %v1101, %v1106
    %v1111 = vrsqrt.pop %v1100
    %v1112 = vmul.f32 %v1111, %v1100
    %v1113 = vmul.f32 %v1112, %v1111
    %v1114 = vmul.f32 0.5, %v1113
    %v1115 = vsub.f32 1.5, %v1114
    %v1116 = vmul.f32 %v1111, %v1115
    %vm1117 = vweird.f32 %v1100
    %vm1118 = vweird.f32 %v1111
    %vm1119 = vmor %vm1117, %vm1118
    %v1120 = vsel %vm1119, %v1111, %v1116
    %v1121 = vmul.f32 %v1087, %v1110
    %v1122 = vmul.f32 %v1088, %v1120
    %v1123 = vperm.slane %v122, 4
    %v1124 = vmul.f32 %v1121, %v1123
    %v1125 = vmul.f32 %v1122, %v1123
    %v1126 = vperm.slane %v122, 5
    %v1127 = vadd.f32 %v1124, %v1126
    %v1128 = vadd.f32 %v1125, %v1126
    %s1129 = scalar_lea.vmem %s6, 8
    %v1130 = vld [vmem:[%s1129] sm:$0xff]
    %s1131 = scalar_lea.vmem %s3, 128
    %v1132 = vld [vmem:[%s1131] sm:$0xff]
    %v1133 = vld [vmem:[%s1131 + $0x8] sm:$0xff]
    %v1134 = vld [vmem:[%s1131 + $0x10] sm:$0xff]
    %v1135 = vld [vmem:[%s1131 + $0x18] sm:$0xff]
    %v1136 = vld [vmem:[%s1131 + $0x20] sm:$0xff]
    %v1137 = vld [vmem:[%s1131 + $0x28] sm:$0xff]
    %v1138 = vld [vmem:[%s1131 + $0x30] sm:$0xff]
    %v1139 = vld [vmem:[%s1131 + $0x38] sm:$0xff]
    %v1140 = vld [vmem:[%s1131 + $0x40] sm:$0xff]
    %v1141 = vld [vmem:[%s1131 + $0x48] sm:$0xff]
    %v1142 = vld [vmem:[%s1131 + $0x50] sm:$0xff]
    %v1143 = vld [vmem:[%s1131 + $0x58] sm:$0xff]
    %v1144 = vld [vmem:[%s1131 + $0x60] sm:$0xff]
    %v1145 = vld [vmem:[%s1131 + $0x68] sm:$0xff]
    %v1146 = vld [vmem:[%s1131 + $0x70] sm:$0xff]
    %v1147 = vld [vmem:[%s1131 + $0x78] sm:$0xff]
    %s1148 = scalar_lea.vmem %s2, 96
    %v1149 = vld [vmem:[%s1148] sm:$0xff]
    %v1150 = vld [vmem:[%s1148 + $0x8] sm:$0xff]
    %v1151 = vld [vmem:[%s1148 + $0x10] sm:$0xff]
    %v1152 = vld [vmem:[%s1148 + $0x18] sm:$0xff]
    %v1153 = vld [vmem:[%s1148 + $0x20] sm:$0xff]
    %v1154 = vld [vmem:[%s1148 + $0x28] sm:$0xff]
    %v1155 = vld [vmem:[%s1148 + $0x30] sm:$0xff]
    %v1156 = vld [vmem:[%s1148 + $0x38] sm:$0xff]
    %v1157 = vld [vmem:[%s1148 + $0x40] sm:$0xff]
    %v1158 = vld [vmem:[%s1148 + $0x48] sm:$0xff]
    %v1159 = vld [vmem:[%s1148 + $0x50] sm:$0xff]
    %v1160 = vld [vmem:[%s1148 + $0x58] sm:$0xff]
    %v1162 = vsel %vm151, %v1127, 0
    %v1165 = vsel %vm151, %v1128, 0
    %1167 = vmatpush.msra.mxu0 0.0
    %1168 = vmatpush.msra.mxu0 0.0
    %1169 = vmatpush.msra.mxu0 0.0
    %1170 = vmatpush.msra.mxu0 0.0
    %1171 = vmatpush.msra.mxu0 0.0
    %1172 = vmatpush.msra.mxu0 0.0
    %1173 = vmatpush.msra.mxu0 0.0
    %1174 = vmatpush.msra.mxu0 0.0
    %1175 = vmatpush.msra.mxu0 0.0
    %1176 = vmatpush.msra.mxu0 0.0
    %1177 = vmatpush.msra.mxu0 0.0
    %1178 = vmatpush.msra.mxu0 0.0
    %1179 = vmatpush.msra.mxu0 %v1158
    %1180 = vmatpush.msra.mxu0 %v1155
    %1181 = vmatpush.msra.mxu0 %v1152
    %1182 = vmatpush.msra.mxu0 %v1149
    %1183 = vmatmul.f32.gmra.mxu0 %v1162
    %v1184 = vpop.f32.mrf.mxu0
    %v1185 = vadd.f32 0.0, %v1184
    %1186 = vmatmul.f32.gmra.mxu0 %v1165
    %v1187 = vpop.f32.mrf.mxu0
    %v1188 = vadd.f32 0.0, %v1187
    %1189 = vdwg.mxu0
    %1190 = vmatpush.msra.mxu0 0.0
    %1191 = vmatpush.msra.mxu0 0.0
    %1192 = vmatpush.msra.mxu0 0.0
    %1193 = vmatpush.msra.mxu0 0.0
    %1194 = vmatpush.msra.mxu0 0.0
    %1195 = vmatpush.msra.mxu0 0.0
    %1196 = vmatpush.msra.mxu0 0.0
    %1197 = vmatpush.msra.mxu0 0.0
    %1198 = vmatpush.msra.mxu0 0.0
    %1199 = vmatpush.msra.mxu0 0.0
    %1200 = vmatpush.msra.mxu0 0.0
    %1201 = vmatpush.msra.mxu0 0.0
    %1202 = vmatpush.msra.mxu0 %v1159
    %1203 = vmatpush.msra.mxu0 %v1156
    %1204 = vmatpush.msra.mxu0 %v1153
    %1205 = vmatpush.msra.mxu0 %v1150
    %1206 = vmatmul.f32.gmra.mxu0 %v1162
    %v1207 = vpop.f32.mrf.mxu0
    %v1208 = vadd.f32 0.0, %v1207
    %1209 = vmatmul.f32.gmra.mxu0 %v1165
    %v1210 = vpop.f32.mrf.mxu0
    %v1211 = vadd.f32 0.0, %v1210
    %1212 = vdwg.mxu0
    %1213 = vmatpush.msra.mxu0 0.0
    %1214 = vmatpush.msra.mxu0 0.0
    %1215 = vmatpush.msra.mxu0 0.0
    %1216 = vmatpush.msra.mxu0 0.0
    %1217 = vmatpush.msra.mxu0 0.0
    %1218 = vmatpush.msra.mxu0 0.0
    %1219 = vmatpush.msra.mxu0 0.0
    %1220 = vmatpush.msra.mxu0 0.0
    %1221 = vmatpush.msra.mxu0 0.0
    %1222 = vmatpush.msra.mxu0 0.0
    %1223 = vmatpush.msra.mxu0 0.0
    %1224 = vmatpush.msra.mxu0 0.0
    %1225 = vmatpush.msra.mxu0 %v1160
    %1226 = vmatpush.msra.mxu0 %v1157
    %1227 = vmatpush.msra.mxu0 %v1154
    %1228 = vmatpush.msra.mxu0 %v1151
    %1229 = vmatmul.f32.gmra.mxu0 %v1162
    %v1230 = vpop.f32.mrf.mxu0
    %v1231 = vadd.f32 0.0, %v1230
    %1232 = vmatmul.f32.gmra.mxu0 %v1165
    %v1233 = vpop.f32.mrf.mxu0
    %v1234 = vadd.f32 0.0, %v1233
    %1235 = vdwg.mxu0
    %v1237 = vsel %vm151, %v1185, 0
    %v1240 = vsel %vm151, %v1208, 0
    %1242 = vmatpush.xpose.msra.mxu0 0.0
    %1243 = vmatpush.xpose.msra.mxu0 0.0
    %1244 = vmatpush.xpose.msra.mxu0 0.0
    %1245 = vmatpush.xpose.msra.mxu0 0.0
    %1246 = vmatpush.xpose.msra.mxu0 0.0
    %1247 = vmatpush.xpose.msra.mxu0 0.0
    %1248 = vmatpush.xpose.msra.mxu0 0.0
    %1249 = vmatpush.xpose.msra.mxu0 0.0
    %1250 = vmatpush.xpose.msra.mxu0 0.0
    %1251 = vmatpush.xpose.msra.mxu0 0.0
    %1252 = vmatpush.xpose.msra.mxu0 0.0
    %1253 = vmatpush.xpose.msra.mxu0 0.0
    %1254 = vmatpush.xpose.msra.mxu0 0.0
    %1255 = vmatpush.xpose.msra.mxu0 0.0
    %1256 = vmatpush.xpose.msra.mxu0 0.0
    %1257 = vmatpush.xpose.msra.mxu0 %v1240
    %1258 = vmatmul.f32.gmra.mxu0 %v1237
    %v1259 = vpop.f32.mrf.mxu0
    %v1260 = vadd.f32 0.0, %v1259
    %1261 = vdwg.mxu0
    %v1262 = vmul.f32 %v1260, 0.17677669
    %1263 = vrot.lane.b32.xlu0 %v1185, 96
    %v1264 = vpop.permute.xlu0 %1263
    %1265 = vrot.lane.b32.xlu0 %v1208, 96
    %v1266 = vpop.permute.xlu0 %1265
    %v1267 = vsel %vm151, %v1264, 0
    %v1269 = vsel %vm151, %v1266, 0
    %1271 = vmatpush.xpose.msra.mxu0 0.0
    %1272 = vmatpush.xpose.msra.mxu0 0.0
    %1273 = vmatpush.xpose.msra.mxu0 0.0
    %1274 = vmatpush.xpose.msra.mxu0 0.0
    %1275 = vmatpush.xpose.msra.mxu0 0.0
    %1276 = vmatpush.xpose.msra.mxu0 0.0
    %1277 = vmatpush.xpose.msra.mxu0 0.0
    %1278 = vmatpush.xpose.msra.mxu0 0.0
    %1279 = vmatpush.xpose.msra.mxu0 0.0
    %1280 = vmatpush.xpose.msra.mxu0 0.0
    %1281 = vmatpush.xpose.msra.mxu0 0.0
    %1282 = vmatpush.xpose.msra.mxu0 0.0
    %1283 = vmatpush.xpose.msra.mxu0 0.0
    %1284 = vmatpush.xpose.msra.mxu0 0.0
    %1285 = vmatpush.xpose.msra.mxu0 0.0
    %1286 = vmatpush.xpose.msra.mxu0 %v1269
    %1287 = vmatmul.f32.gmra.mxu0 %v1267
    %v1288 = vpop.f32.mrf.mxu0
    %v1289 = vadd.f32 0.0, %v1288
    %1290 = vdwg.mxu0
    %v1291 = vmul.f32 %v1289, 0.17677669
    %1292 = vrot.lane.b32.xlu0 %v1185, 64
    %v1293 = vpop.permute.xlu0 %1292
    %1294 = vrot.lane.b32.xlu0 %v1208, 64
    %v1295 = vpop.permute.xlu0 %1294
    %v1296 = vsel %vm151, %v1293, 0
    %v1298 = vsel %vm151, %v1295, 0
    %1300 = vmatpush.xpose.msra.mxu0 0.0
    %1301 = vmatpush.xpose.msra.mxu0 0.0
    %1302 = vmatpush.xpose.msra.mxu0 0.0
    %1303 = vmatpush.xpose.msra.mxu0 0.0
    %1304 = vmatpush.xpose.msra.mxu0 0.0
    %1305 = vmatpush.xpose.msra.mxu0 0.0
    %1306 = vmatpush.xpose.msra.mxu0 0.0
    %1307 = vmatpush.xpose.msra.mxu0 0.0
    %1308 = vmatpush.xpose.msra.mxu0 0.0
    %1309 = vmatpush.xpose.msra.mxu0 0.0
    %1310 = vmatpush.xpose.msra.mxu0 0.0
    %1311 = vmatpush.xpose.msra.mxu0 0.0
    %1312 = vmatpush.xpose.msra.mxu0 0.0
    %1313 = vmatpush.xpose.msra.mxu0 0.0
    %1314 = vmatpush.xpose.msra.mxu0 0.0
    %1315 = vmatpush.xpose.msra.mxu0 %v1298
    %1316 = vmatmul.f32.gmra.mxu0 %v1296
    %v1317 = vpop.f32.mrf.mxu0
    %v1318 = vadd.f32 0.0, %v1317
    %1319 = vdwg.mxu0
    %v1320 = vmul.f32 %v1318, 0.17677669
    %1321 = vrot.lane.b32.xlu0 %v1185, 32
    %v1322 = vpop.permute.xlu0 %1321
    %1323 = vrot.lane.b32.xlu0 %v1208, 32
    %v1324 = vpop.permute.xlu0 %1323
    %v1325 = vsel %vm151, %v1322, 0
    %v1327 = vsel %vm151, %v1324, 0
    %1329 = vmatpush.xpose.msra.mxu0 0.0
    %1330 = vmatpush.xpose.msra.mxu0 0.0
    %1331 = vmatpush.xpose.msra.mxu0 0.0
    %1332 = vmatpush.xpose.msra.mxu0 0.0
    %1333 = vmatpush.xpose.msra.mxu0 0.0
    %1334 = vmatpush.xpose.msra.mxu0 0.0
    %1335 = vmatpush.xpose.msra.mxu0 0.0
    %1336 = vmatpush.xpose.msra.mxu0 0.0
    %1337 = vmatpush.xpose.msra.mxu0 0.0
    %1338 = vmatpush.xpose.msra.mxu0 0.0
    %1339 = vmatpush.xpose.msra.mxu0 0.0
    %1340 = vmatpush.xpose.msra.mxu0 0.0
    %1341 = vmatpush.xpose.msra.mxu0 0.0
    %1342 = vmatpush.xpose.msra.mxu0 0.0
    %1343 = vmatpush.xpose.msra.mxu0 0.0
    %1344 = vmatpush.xpose.msra.mxu0 %v1327
    %1345 = vmatmul.f32.gmra.mxu0 %v1325
    %v1346 = vpop.f32.mrf.mxu0
    %v1347 = vadd.f32 0.0, %v1346
    %1348 = vdwg.mxu0
    %v1349 = vmul.f32 %v1347, 0.17677669
    %v1351 = vsel %vm151, %v1188, 0
    %v1354 = vsel %vm151, %v1211, 0
    %1356 = vmatpush.xpose.msra.mxu0 0.0
    %1357 = vmatpush.xpose.msra.mxu0 0.0
    %1358 = vmatpush.xpose.msra.mxu0 0.0
    %1359 = vmatpush.xpose.msra.mxu0 0.0
    %1360 = vmatpush.xpose.msra.mxu0 0.0
    %1361 = vmatpush.xpose.msra.mxu0 0.0
    %1362 = vmatpush.xpose.msra.mxu0 0.0
    %1363 = vmatpush.xpose.msra.mxu0 0.0
    %1364 = vmatpush.xpose.msra.mxu0 0.0
    %1365 = vmatpush.xpose.msra.mxu0 0.0
    %1366 = vmatpush.xpose.msra.mxu0 0.0
    %1367 = vmatpush.xpose.msra.mxu0 0.0
    %1368 = vmatpush.xpose.msra.mxu0 0.0
    %1369 = vmatpush.xpose.msra.mxu0 0.0
    %1370 = vmatpush.xpose.msra.mxu0 0.0
    %1371 = vmatpush.xpose.msra.mxu0 %v1354
    %1372 = vmatmul.f32.gmra.mxu0 %v1351
    %v1373 = vpop.f32.mrf.mxu0
    %v1374 = vadd.f32 0.0, %v1373
    %1375 = vdwg.mxu0
    %v1376 = vmul.f32 %v1374, 0.17677669
    %1377 = vrot.lane.b32.xlu0 %v1188, 96
    %v1378 = vpop.permute.xlu0 %1377
    %1379 = vrot.lane.b32.xlu0 %v1211, 96
    %v1380 = vpop.permute.xlu0 %1379
    %v1381 = vsel %vm151, %v1378, 0
    %v1383 = vsel %vm151, %v1380, 0
    %1385 = vmatpush.xpose.msra.mxu0 0.0
    %1386 = vmatpush.xpose.msra.mxu0 0.0
    %1387 = vmatpush.xpose.msra.mxu0 0.0
    %1388 = vmatpush.xpose.msra.mxu0 0.0
    %1389 = vmatpush.xpose.msra.mxu0 0.0
    %1390 = vmatpush.xpose.msra.mxu0 0.0
    %1391 = vmatpush.xpose.msra.mxu0 0.0
    %1392 = vmatpush.xpose.msra.mxu0 0.0
    %1393 = vmatpush.xpose.msra.mxu0 0.0
    %1394 = vmatpush.xpose.msra.mxu0 0.0
    %1395 = vmatpush.xpose.msra.mxu0 0.0
    %1396 = vmatpush.xpose.msra.mxu0 0.0
    %1397 = vmatpush.xpose.msra.mxu0 0.0
    %1398 = vmatpush.xpose.msra.mxu0 0.0
    %1399 = vmatpush.xpose.msra.mxu0 0.0
    %1400 = vmatpush.xpose.msra.mxu0 %v1383
    %1401 = vmatmul.f32.gmra.mxu0 %v1381
    %v1402 = vpop.f32.mrf.mxu0
    %v1403 = vadd.f32 0.0, %v1402
    %1404 = vdwg.mxu0
    %v1405 = vmul.f32 %v1403, 0.17677669
    %1406 = vrot.lane.b32.xlu0 %v1188, 64
    %v1407 = vpop.permute.xlu0 %1406
    %1408 = vrot.lane.b32.xlu0 %v1211, 64
    %v1409 = vpop.permute.xlu0 %1408
    %v1410 = vsel %vm151, %v1407, 0
    %v1412 = vsel %vm151, %v1409, 0
    %1414 = vmatpush.xpose.msra.mxu0 0.0
    %1415 = vmatpush.xpose.msra.mxu0 0.0
    %1416 = vmatpush.xpose.msra.mxu0 0.0
    %1417 = vmatpush.xpose.msra.mxu0 0.0
    %1418 = vmatpush.xpose.msra.mxu0 0.0
    %1419 = vmatpush.xpose.msra.mxu0 0.0
    %1420 = vmatpush.xpose.msra.mxu0 0.0
    %1421 = vmatpush.xpose.msra.mxu0 0.0
    %1422 = vmatpush.xpose.msra.mxu0 0.0
    %1423 = vmatpush.xpose.msra.mxu0 0.0
    %1424 = vmatpush.xpose.msra.mxu0 0.0
    %1425 = vmatpush.xpose.msra.mxu0 0.0
    %1426 = vmatpush.xpose.msra.mxu0 0.0
    %1427 = vmatpush.xpose.msra.mxu0 0.0
    %1428 = vmatpush.xpose.msra.mxu0 0.0
    %1429 = vmatpush.xpose.msra.mxu0 %v1412
    %1430 = vmatmul.f32.gmra.mxu0 %v1410
    %v1431 = vpop.f32.mrf.mxu0
    %v1432 = vadd.f32 0.0, %v1431
    %1433 = vdwg.mxu0
    %v1434 = vmul.f32 %v1432, 0.17677669
    %1435 = vrot.lane.b32.xlu0 %v1188, 32
    %v1436 = vpop.permute.xlu0 %1435
    %1437 = vrot.lane.b32.xlu0 %v1211, 32
    %v1438 = vpop.permute.xlu0 %1437
    %v1439 = vsel %vm151, %v1436, 0
    %v1441 = vsel %vm151, %v1438, 0
    %1443 = vmatpush.xpose.msra.mxu0 0.0
    %1444 = vmatpush.xpose.msra.mxu0 0.0
    %1445 = vmatpush.xpose.msra.mxu0 0.0
    %1446 = vmatpush.xpose.msra.mxu0 0.0
    %1447 = vmatpush.xpose.msra.mxu0 0.0
    %1448 = vmatpush.xpose.msra.mxu0 0.0
    %1449 = vmatpush.xpose.msra.mxu0 0.0
    %1450 = vmatpush.xpose.msra.mxu0 0.0
    %1451 = vmatpush.xpose.msra.mxu0 0.0
    %1452 = vmatpush.xpose.msra.mxu0 0.0
    %1453 = vmatpush.xpose.msra.mxu0 0.0
    %1454 = vmatpush.xpose.msra.mxu0 0.0
    %1455 = vmatpush.xpose.msra.mxu0 0.0
    %1456 = vmatpush.xpose.msra.mxu0 0.0
    %1457 = vmatpush.xpose.msra.mxu0 0.0
    %1458 = vmatpush.xpose.msra.mxu0 %v1441
    %1459 = vmatmul.f32.gmra.mxu0 %v1439
    %v1460 = vpop.f32.mrf.mxu0
    %v1461 = vadd.f32 0.0, %v1460
    %1462 = vdwg.mxu0
    %v1463 = vmul.f32 %v1461, 0.17677669
    %v1464 = vsel %vm455, %v1262, -inf
    %1465 = vmax.xlane.f32.xlu0 %v1464
    %v1466 = vpop.xlane.xlu0 %1465
    %v1467 = vsel %vm455, %v1291, -inf
    %1468 = vmax.xlane.f32.xlu0 %v1467
    %v1469 = vpop.xlane.xlu0 %1468
    %v1470 = vsel %vm455, %v1320, -inf
    %1471 = vmax.xlane.f32.xlu0 %v1470
    %v1472 = vpop.xlane.xlu0 %1471
    %v1473 = vsel %vm455, %v1349, -inf
    %1474 = vmax.xlane.f32.xlu0 %v1473
    %v1475 = vpop.xlane.xlu0 %1474
    %v1476 = vsel %vm455, %v1376, -inf
    %1477 = vmax.xlane.f32.xlu0 %v1476
    %v1478 = vpop.xlane.xlu0 %1477
    %v1479 = vsel %vm455, %v1405, -inf
    %1480 = vmax.xlane.f32.xlu0 %v1479
    %v1481 = vpop.xlane.xlu0 %1480
    %v1482 = vsel %vm455, %v1434, -inf
    %1483 = vmax.xlane.f32.xlu0 %v1482
    %v1484 = vpop.xlane.xlu0 %1483
    %v1485 = vsel %vm455, %v1463, -inf
    %1486 = vmax.xlane.f32.xlu0 %v1485
    %v1487 = vpop.xlane.xlu0 %1486
    %v1488 = vsub.f32 %v1262, %v1466
    %v1489 = vsub.f32 %v1291, %v1469
    %v1490 = vsub.f32 %v1320, %v1472
    %v1491 = vsub.f32 %v1349, %v1475
    %v1492 = vsub.f32 %v1376, %v1478
    %v1493 = vsub.f32 %v1405, %v1481
    %v1494 = vsub.f32 %v1434, %v1484
    %v1495 = vsub.f32 %v1463, %v1487
    %v1496 = vmul.f32 %v1488, 1.442695
    %v1497 = vpow.pop %v1496
    %v1498 = vmul.f32 %v1489, 1.442695
    %v1499 = vpow.pop %v1498
    %v1500 = vmul.f32 %v1490, 1.442695
    %v1501 = vpow.pop %v1500
    %v1502 = vmul.f32 %v1491, 1.442695
    %v1503 = vpow.pop %v1502
    %v1504 = vmul.f32 %v1492, 1.442695
    %v1505 = vpow.pop %v1504
    %v1506 = vmul.f32 %v1493, 1.442695
    %v1507 = vpow.pop %v1506
    %v1508 = vmul.f32 %v1494, 1.442695
    %v1509 = vpow.pop %v1508
    %v1510 = vmul.f32 %v1495, 1.442695
    %v1511 = vpow.pop %v1510
    %v1512 = vsel %vm455, %v1497, 0.0
    %1513 = vadd.xlane.f32.xlu0 %v1512
    %v1514 = vpop.xlane.xlu0 %1513
    %v1515 = vsel %vm455, %v1499, 0.0
    %1516 = vadd.xlane.f32.xlu0 %v1515
    %v1517 = vpop.xlane.xlu0 %1516
    %v1518 = vsel %vm455, %v1501, 0.0
    %1519 = vadd.xlane.f32.xlu0 %v1518
    %v1520 = vpop.xlane.xlu0 %1519
    %v1521 = vsel %vm455, %v1503, 0.0
    %1522 = vadd.xlane.f32.xlu0 %v1521
    %v1523 = vpop.xlane.xlu0 %1522
    %v1524 = vsel %vm455, %v1505, 0.0
    %1525 = vadd.xlane.f32.xlu0 %v1524
    %v1526 = vpop.xlane.xlu0 %1525
    %v1527 = vsel %vm455, %v1507, 0.0
    %1528 = vadd.xlane.f32.xlu0 %v1527
    %v1529 = vpop.xlane.xlu0 %1528
    %v1530 = vsel %vm455, %v1509, 0.0
    %1531 = vadd.xlane.f32.xlu0 %v1530
    %v1532 = vpop.xlane.xlu0 %1531
    %v1533 = vsel %vm455, %v1511, 0.0
    %1534 = vadd.xlane.f32.xlu0 %v1533
    %v1535 = vpop.xlane.xlu0 %1534
    %v1536 = vrcp.pop %v1514
    %v1537 = vrcp.pop %v1517
    %v1538 = vrcp.pop %v1520
    %v1539 = vrcp.pop %v1523
    %v1540 = vrcp.pop %v1526
    %v1541 = vrcp.pop %v1529
    %v1542 = vrcp.pop %v1532
    %v1543 = vrcp.pop %v1535
    %v1544 = vmul.f32 %v1497, %v1536
    %v1545 = vmul.f32 %v1499, %v1537
    %v1546 = vmul.f32 %v1501, %v1538
    %v1547 = vmul.f32 %v1503, %v1539
    %v1548 = vmul.f32 %v1505, %v1540
    %v1549 = vmul.f32 %v1507, %v1541
    %v1550 = vmul.f32 %v1509, %v1542
    %v1551 = vmul.f32 %v1511, %v1543
    %v1553 = vsel %vm455, %v1544, 0
    %1555 = vmatpush.msra.mxu0 0.0
    %1556 = vmatpush.msra.mxu0 0.0
    %1557 = vmatpush.msra.mxu0 0.0
    %1558 = vmatpush.msra.mxu0 0.0
    %1559 = vmatpush.msra.mxu0 0.0
    %1560 = vmatpush.msra.mxu0 0.0
    %1561 = vmatpush.msra.mxu0 0.0
    %1562 = vmatpush.msra.mxu0 0.0
    %1563 = vmatpush.msra.mxu0 0.0
    %1564 = vmatpush.msra.mxu0 0.0
    %1565 = vmatpush.msra.mxu0 0.0
    %1566 = vmatpush.msra.mxu0 0.0
    %1567 = vmatpush.msra.mxu0 0.0
    %1568 = vmatpush.msra.mxu0 0.0
    %1569 = vmatpush.msra.mxu0 0.0
    %1570 = vmatpush.msra.mxu0 %v1231
    %1571 = vmatmul.f32.gmra.mxu0 %v1553
    %v1572 = vpop.f32.mrf.mxu0
    %v1573 = vadd.f32 0.0, %v1572
    %1574 = vdwg.mxu0
    %1576 = vrot.lane.b32.xlu0 %v1231, 96
    %v1577 = vpop.permute.xlu0 %1576
    %v1580 = vsel %vm455, %v1545, 0
    %1582 = vmatpush.msra.mxu0 0.0
    %1583 = vmatpush.msra.mxu0 0.0
    %1584 = vmatpush.msra.mxu0 0.0
    %1585 = vmatpush.msra.mxu0 0.0
    %1586 = vmatpush.msra.mxu0 0.0
    %1587 = vmatpush.msra.mxu0 0.0
    %1588 = vmatpush.msra.mxu0 0.0
    %1589 = vmatpush.msra.mxu0 0.0
    %1590 = vmatpush.msra.mxu0 0.0
    %1591 = vmatpush.msra.mxu0 0.0
    %1592 = vmatpush.msra.mxu0 0.0
    %1593 = vmatpush.msra.mxu0 0.0
    %1594 = vmatpush.msra.mxu0 0.0
    %1595 = vmatpush.msra.mxu0 0.0
    %1596 = vmatpush.msra.mxu0 0.0
    %1597 = vmatpush.msra.mxu0 %v1577
    %1598 = vmatmul.f32.gmra.mxu0 %v1580
    %v1599 = vpop.f32.mrf.mxu0
    %v1600 = vadd.f32 0.0, %v1599
    %1601 = vdwg.mxu0
    %v1603 = vsel %vm151, %v1600, 0
    %1605 = vmatpush.msra.mxu0 0.0
    %1606 = vmatpush.msra.mxu0 0.0
    %1607 = vmatpush.msra.mxu0 0.0
    %1608 = vmatpush.msra.mxu0 0.0
    %1609 = vmatpush.msra.mxu0 0.0
    %1610 = vmatpush.msra.mxu0 0.0
    %1611 = vmatpush.msra.mxu0 0.0
    %1612 = vmatpush.msra.mxu0 0.0
    %1613 = vmatpush.msra.mxu0 0.0
    %1614 = vmatpush.msra.mxu0 0.0
    %1615 = vmatpush.msra.mxu0 0.0
    %1616 = vmatpush.msra.mxu0 0.0
    %1617 = vmatpush.msra.mxu0 %v1139
    %1618 = vmatpush.msra.mxu0 %v1138
    %1619 = vmatpush.msra.mxu0 %v1137
    %1620 = vmatpush.msra.mxu0 %v1136
    %1621 = vmatmul.f32.gmra.mxu0 %v1603
    %v1622 = vpop.f32.mrf.mxu0
    %v1623 = vadd.f32 0.0, %v1622
    %1624 = vdwg.mxu0
    %v1626 = vsel %vm151, %v1573, 0
    %1628 = vmatpush.msra.mxu0 0.0
    %1629 = vmatpush.msra.mxu0 0.0
    %1630 = vmatpush.msra.mxu0 0.0
    %1631 = vmatpush.msra.mxu0 0.0
    %1632 = vmatpush.msra.mxu0 0.0
    %1633 = vmatpush.msra.mxu0 0.0
    %1634 = vmatpush.msra.mxu0 0.0
    %1635 = vmatpush.msra.mxu0 0.0
    %1636 = vmatpush.msra.mxu0 0.0
    %1637 = vmatpush.msra.mxu0 0.0
    %1638 = vmatpush.msra.mxu0 0.0
    %1639 = vmatpush.msra.mxu0 0.0
    %1640 = vmatpush.msra.mxu0 %v1135
    %1641 = vmatpush.msra.mxu0 %v1134
    %1642 = vmatpush.msra.mxu0 %v1133
    %1643 = vmatpush.msra.mxu0 %v1132
    %1644 = vmatmul.f32.gmra.mxu0 %v1626
    %v1645 = vpop.f32.mrf.mxu0
    %v1646 = vadd.f32 %v1623, %v1645
    %1647 = vdwg.mxu0
    %1648 = vrot.lane.b32.xlu0 %v1231, 64
    %v1649 = vpop.permute.xlu0 %1648
    %v1652 = vsel %vm455, %v1546, 0
    %1654 = vmatpush.msra.mxu0 0.0
    %1655 = vmatpush.msra.mxu0 0.0
    %1656 = vmatpush.msra.mxu0 0.0
    %1657 = vmatpush.msra.mxu0 0.0
    %1658 = vmatpush.msra.mxu0 0.0
    %1659 = vmatpush.msra.mxu0 0.0
    %1660 = vmatpush.msra.mxu0 0.0
    %1661 = vmatpush.msra.mxu0 0.0
    %1662 = vmatpush.msra.mxu0 0.0
    %1663 = vmatpush.msra.mxu0 0.0
    %1664 = vmatpush.msra.mxu0 0.0
    %1665 = vmatpush.msra.mxu0 0.0
    %1666 = vmatpush.msra.mxu0 0.0
    %1667 = vmatpush.msra.mxu0 0.0
    %1668 = vmatpush.msra.mxu0 0.0
    %1669 = vmatpush.msra.mxu0 %v1649
    %1670 = vmatmul.f32.gmra.mxu0 %v1652
    %v1671 = vpop.f32.mrf.mxu0
    %v1672 = vadd.f32 0.0, %v1671
    %1673 = vdwg.mxu0
    %v1675 = vsel %vm151, %v1672, 0
    %1677 = vmatpush.msra.mxu0 0.0
    %1678 = vmatpush.msra.mxu0 0.0
    %1679 = vmatpush.msra.mxu0 0.0
    %1680 = vmatpush.msra.mxu0 0.0
    %1681 = vmatpush.msra.mxu0 0.0
    %1682 = vmatpush.msra.mxu0 0.0
    %1683 = vmatpush.msra.mxu0 0.0
    %1684 = vmatpush.msra.mxu0 0.0
    %1685 = vmatpush.msra.mxu0 0.0
    %1686 = vmatpush.msra.mxu0 0.0
    %1687 = vmatpush.msra.mxu0 0.0
    %1688 = vmatpush.msra.mxu0 0.0
    %1689 = vmatpush.msra.mxu0 %v1143
    %1690 = vmatpush.msra.mxu0 %v1142
    %1691 = vmatpush.msra.mxu0 %v1141
    %1692 = vmatpush.msra.mxu0 %v1140
    %1693 = vmatmul.f32.gmra.mxu0 %v1675
    %v1694 = vpop.f32.mrf.mxu0
    %v1695 = vadd.f32 0.0, %v1694
    %1696 = vdwg.mxu0
    %v1697 = vadd.f32 %v1646, %v1695
    %1698 = vrot.lane.b32.xlu0 %v1231, 32
    %v1699 = vpop.permute.xlu0 %1698
    %v1702 = vsel %vm455, %v1547, 0
    %1704 = vmatpush.msra.mxu0 0.0
    %1705 = vmatpush.msra.mxu0 0.0
    %1706 = vmatpush.msra.mxu0 0.0
    %1707 = vmatpush.msra.mxu0 0.0
    %1708 = vmatpush.msra.mxu0 0.0
    %1709 = vmatpush.msra.mxu0 0.0
    %1710 = vmatpush.msra.mxu0 0.0
    %1711 = vmatpush.msra.mxu0 0.0
    %1712 = vmatpush.msra.mxu0 0.0
    %1713 = vmatpush.msra.mxu0 0.0
    %1714 = vmatpush.msra.mxu0 0.0
    %1715 = vmatpush.msra.mxu0 0.0
    %1716 = vmatpush.msra.mxu0 0.0
    %1717 = vmatpush.msra.mxu0 0.0
    %1718 = vmatpush.msra.mxu0 0.0
    %1719 = vmatpush.msra.mxu0 %v1699
    %1720 = vmatmul.f32.gmra.mxu0 %v1702
    %v1721 = vpop.f32.mrf.mxu0
    %v1722 = vadd.f32 0.0, %v1721
    %1723 = vdwg.mxu0
    %v1725 = vsel %vm151, %v1722, 0
    %1727 = vmatpush.msra.mxu0 0.0
    %1728 = vmatpush.msra.mxu0 0.0
    %1729 = vmatpush.msra.mxu0 0.0
    %1730 = vmatpush.msra.mxu0 0.0
    %1731 = vmatpush.msra.mxu0 0.0
    %1732 = vmatpush.msra.mxu0 0.0
    %1733 = vmatpush.msra.mxu0 0.0
    %1734 = vmatpush.msra.mxu0 0.0
    %1735 = vmatpush.msra.mxu0 0.0
    %1736 = vmatpush.msra.mxu0 0.0
    %1737 = vmatpush.msra.mxu0 0.0
    %1738 = vmatpush.msra.mxu0 0.0
    %1739 = vmatpush.msra.mxu0 %v1147
    %1740 = vmatpush.msra.mxu0 %v1146
    %1741 = vmatpush.msra.mxu0 %v1145
    %1742 = vmatpush.msra.mxu0 %v1144
    %1743 = vmatmul.f32.gmra.mxu0 %v1725
    %v1744 = vpop.f32.mrf.mxu0
    %v1745 = vadd.f32 0.0, %v1744
    %1746 = vdwg.mxu0
    %v1747 = vadd.f32 %v1697, %v1745
    %v1749 = vsel %vm455, %v1548, 0
    %1751 = vmatpush.msra.mxu0 0.0
    %1752 = vmatpush.msra.mxu0 0.0
    %1753 = vmatpush.msra.mxu0 0.0
    %1754 = vmatpush.msra.mxu0 0.0
    %1755 = vmatpush.msra.mxu0 0.0
    %1756 = vmatpush.msra.mxu0 0.0
    %1757 = vmatpush.msra.mxu0 0.0
    %1758 = vmatpush.msra.mxu0 0.0
    %1759 = vmatpush.msra.mxu0 0.0
    %1760 = vmatpush.msra.mxu0 0.0
    %1761 = vmatpush.msra.mxu0 0.0
    %1762 = vmatpush.msra.mxu0 0.0
    %1763 = vmatpush.msra.mxu0 0.0
    %1764 = vmatpush.msra.mxu0 0.0
    %1765 = vmatpush.msra.mxu0 0.0
    %1766 = vmatpush.msra.mxu0 %v1234
    %1767 = vmatmul.f32.gmra.mxu0 %v1749
    %v1768 = vpop.f32.mrf.mxu0
    %v1769 = vadd.f32 0.0, %v1768
    %1770 = vdwg.mxu0
    %1772 = vrot.lane.b32.xlu0 %v1234, 96
    %v1773 = vpop.permute.xlu0 %1772
    %v1776 = vsel %vm455, %v1549, 0
    %1778 = vmatpush.msra.mxu0 0.0
    %1779 = vmatpush.msra.mxu0 0.0
    %1780 = vmatpush.msra.mxu0 0.0
    %1781 = vmatpush.msra.mxu0 0.0
    %1782 = vmatpush.msra.mxu0 0.0
    %1783 = vmatpush.msra.mxu0 0.0
    %1784 = vmatpush.msra.mxu0 0.0
    %1785 = vmatpush.msra.mxu0 0.0
    %1786 = vmatpush.msra.mxu0 0.0
    %1787 = vmatpush.msra.mxu0 0.0
    %1788 = vmatpush.msra.mxu0 0.0
    %1789 = vmatpush.msra.mxu0 0.0
    %1790 = vmatpush.msra.mxu0 0.0
    %1791 = vmatpush.msra.mxu0 0.0
    %1792 = vmatpush.msra.mxu0 0.0
    %1793 = vmatpush.msra.mxu0 %v1773
    %1794 = vmatmul.f32.gmra.mxu0 %v1776
    %v1795 = vpop.f32.mrf.mxu0
    %v1796 = vadd.f32 0.0, %v1795
    %1797 = vdwg.mxu0
    %v1799 = vsel %vm151, %v1796, 0
    %1801 = vmatpush.msra.mxu0 0.0
    %1802 = vmatpush.msra.mxu0 0.0
    %1803 = vmatpush.msra.mxu0 0.0
    %1804 = vmatpush.msra.mxu0 0.0
    %1805 = vmatpush.msra.mxu0 0.0
    %1806 = vmatpush.msra.mxu0 0.0
    %1807 = vmatpush.msra.mxu0 0.0
    %1808 = vmatpush.msra.mxu0 0.0
    %1809 = vmatpush.msra.mxu0 0.0
    %1810 = vmatpush.msra.mxu0 0.0
    %1811 = vmatpush.msra.mxu0 0.0
    %1812 = vmatpush.msra.mxu0 0.0
    %1813 = vmatpush.msra.mxu0 %v1139
    %1814 = vmatpush.msra.mxu0 %v1138
    %1815 = vmatpush.msra.mxu0 %v1137
    %1816 = vmatpush.msra.mxu0 %v1136
    %1817 = vmatmul.f32.gmra.mxu0 %v1799
    %v1818 = vpop.f32.mrf.mxu0
    %v1819 = vadd.f32 0.0, %v1818
    %1820 = vdwg.mxu0
    %v1822 = vsel %vm151, %v1769, 0
    %1824 = vmatpush.msra.mxu0 0.0
    %1825 = vmatpush.msra.mxu0 0.0
    %1826 = vmatpush.msra.mxu0 0.0
    %1827 = vmatpush.msra.mxu0 0.0
    %1828 = vmatpush.msra.mxu0 0.0
    %1829 = vmatpush.msra.mxu0 0.0
    %1830 = vmatpush.msra.mxu0 0.0
    %1831 = vmatpush.msra.mxu0 0.0
    %1832 = vmatpush.msra.mxu0 0.0
    %1833 = vmatpush.msra.mxu0 0.0
    %1834 = vmatpush.msra.mxu0 0.0
    %1835 = vmatpush.msra.mxu0 0.0
    %1836 = vmatpush.msra.mxu0 %v1135
    %1837 = vmatpush.msra.mxu0 %v1134
    %1838 = vmatpush.msra.mxu0 %v1133
    %1839 = vmatpush.msra.mxu0 %v1132
    %1840 = vmatmul.f32.gmra.mxu0 %v1822
    %v1841 = vpop.f32.mrf.mxu0
    %v1842 = vadd.f32 %v1819, %v1841
    %1843 = vdwg.mxu0
    %1844 = vrot.lane.b32.xlu0 %v1234, 64
    %v1845 = vpop.permute.xlu0 %1844
    %v1848 = vsel %vm455, %v1550, 0
    %1850 = vmatpush.msra.mxu0 0.0
    %1851 = vmatpush.msra.mxu0 0.0
    %1852 = vmatpush.msra.mxu0 0.0
    %1853 = vmatpush.msra.mxu0 0.0
    %1854 = vmatpush.msra.mxu0 0.0
    %1855 = vmatpush.msra.mxu0 0.0
    %1856 = vmatpush.msra.mxu0 0.0
    %1857 = vmatpush.msra.mxu0 0.0
    %1858 = vmatpush.msra.mxu0 0.0
    %1859 = vmatpush.msra.mxu0 0.0
    %1860 = vmatpush.msra.mxu0 0.0
    %1861 = vmatpush.msra.mxu0 0.0
    %1862 = vmatpush.msra.mxu0 0.0
    %1863 = vmatpush.msra.mxu0 0.0
    %1864 = vmatpush.msra.mxu0 0.0
    %1865 = vmatpush.msra.mxu0 %v1845
    %1866 = vmatmul.f32.gmra.mxu0 %v1848
    %v1867 = vpop.f32.mrf.mxu0
    %v1868 = vadd.f32 0.0, %v1867
    %1869 = vdwg.mxu0
    %v1871 = vsel %vm151, %v1868, 0
    %1873 = vmatpush.msra.mxu0 0.0
    %1874 = vmatpush.msra.mxu0 0.0
    %1875 = vmatpush.msra.mxu0 0.0
    %1876 = vmatpush.msra.mxu0 0.0
    %1877 = vmatpush.msra.mxu0 0.0
    %1878 = vmatpush.msra.mxu0 0.0
    %1879 = vmatpush.msra.mxu0 0.0
    %1880 = vmatpush.msra.mxu0 0.0
    %1881 = vmatpush.msra.mxu0 0.0
    %1882 = vmatpush.msra.mxu0 0.0
    %1883 = vmatpush.msra.mxu0 0.0
    %1884 = vmatpush.msra.mxu0 0.0
    %1885 = vmatpush.msra.mxu0 %v1143
    %1886 = vmatpush.msra.mxu0 %v1142
    %1887 = vmatpush.msra.mxu0 %v1141
    %1888 = vmatpush.msra.mxu0 %v1140
    %1889 = vmatmul.f32.gmra.mxu0 %v1871
    %v1890 = vpop.f32.mrf.mxu0
    %v1891 = vadd.f32 0.0, %v1890
    %1892 = vdwg.mxu0
    %v1893 = vadd.f32 %v1842, %v1891
    %1894 = vrot.lane.b32.xlu0 %v1234, 32
    %v1895 = vpop.permute.xlu0 %1894
    %v1898 = vsel %vm455, %v1551, 0
    %1900 = vmatpush.msra.mxu0 0.0
    %1901 = vmatpush.msra.mxu0 0.0
    %1902 = vmatpush.msra.mxu0 0.0
    %1903 = vmatpush.msra.mxu0 0.0
    %1904 = vmatpush.msra.mxu0 0.0
    %1905 = vmatpush.msra.mxu0 0.0
    %1906 = vmatpush.msra.mxu0 0.0
    %1907 = vmatpush.msra.mxu0 0.0
    %1908 = vmatpush.msra.mxu0 0.0
    %1909 = vmatpush.msra.mxu0 0.0
    %1910 = vmatpush.msra.mxu0 0.0
    %1911 = vmatpush.msra.mxu0 0.0
    %1912 = vmatpush.msra.mxu0 0.0
    %1913 = vmatpush.msra.mxu0 0.0
    %1914 = vmatpush.msra.mxu0 0.0
    %1915 = vmatpush.msra.mxu0 %v1895
    %1916 = vmatmul.f32.gmra.mxu0 %v1898
    %v1917 = vpop.f32.mrf.mxu0
    %v1918 = vadd.f32 0.0, %v1917
    %1919 = vdwg.mxu0
    %v1921 = vsel %vm151, %v1918, 0
    %1923 = vmatpush.msra.mxu0 0.0
    %1924 = vmatpush.msra.mxu0 0.0
    %1925 = vmatpush.msra.mxu0 0.0
    %1926 = vmatpush.msra.mxu0 0.0
    %1927 = vmatpush.msra.mxu0 0.0
    %1928 = vmatpush.msra.mxu0 0.0
    %1929 = vmatpush.msra.mxu0 0.0
    %1930 = vmatpush.msra.mxu0 0.0
    %1931 = vmatpush.msra.mxu0 0.0
    %1932 = vmatpush.msra.mxu0 0.0
    %1933 = vmatpush.msra.mxu0 0.0
    %1934 = vmatpush.msra.mxu0 0.0
    %1935 = vmatpush.msra.mxu0 %v1147
    %1936 = vmatpush.msra.mxu0 %v1146
    %1937 = vmatpush.msra.mxu0 %v1145
    %1938 = vmatpush.msra.mxu0 %v1144
    %1939 = vmatmul.f32.gmra.mxu0 %v1921
    %v1940 = vpop.f32.mrf.mxu0
    %v1941 = vadd.f32 0.0, %v1940
    %1942 = vdwg.mxu0
    %v1943 = vadd.f32 %v1893, %v1941
    %v1944 = vperm.slane %v1130, 0
    %v1945 = vadd.f32 %v1747, %v1944
    %v1946 = vadd.f32 %v1943, %v1944
    %v1947 = vadd.f32 %v1945, %v1127
    %v1948 = vadd.f32 %v1946, %v1128
    %v1949 = vsel %vm151, %v1947, 0.0
    %1950 = vadd.xlane.f32.xlu0 %v1949
    %v1951 = vpop.xlane.xlu0 %1950
    %v1952 = vsel %vm151, %v1948, 0.0
    %1953 = vadd.xlane.f32.xlu0 %v1952
    %v1954 = vpop.xlane.xlu0 %1953
    %v1955 = vmul.f32 %v1951, %v953
    %v1956 = vmul.f32 %v1954, %v953
    %v1957 = vsub.f32 %v1947, %v1955
    %v1958 = vsub.f32 %v1948, %v1956
    %v1959 = vmul.f32 %v1957, %v1957
    %v1960 = vmul.f32 %v1958, %v1958
    %v1961 = vsel %vm151, %v1959, 0.0
    %1962 = vadd.xlane.f32.xlu0 %v1961
    %v1963 = vpop.xlane.xlu0 %1962
    %v1964 = vsel %vm151, %v1960, 0.0
    %1965 = vadd.xlane.f32.xlu0 %v1964
    %v1966 = vpop.xlane.xlu0 %1965
    %v1967 = vmul.f32 %v1963, %v953
    %v1968 = vmul.f32 %v1966, %v953
    %v1969 = vadd.f32 %v1967, 1e-05
    %v1970 = vadd.f32 %v1968, 1e-05
    %v1971 = vrsqrt.pop %v1969
    %v1972 = vmul.f32 %v1971, %v1969
    %v1973 = vmul.f32 %v1972, %v1971
    %v1974 = vmul.f32 0.5, %v1973
    %v1975 = vsub.f32 1.5, %v1974
    %v1976 = vmul.f32 %v1971, %v1975
    %vm1977 = vweird.f32 %v1969
    %vm1978 = vweird.f32 %v1971
    %vm1979 = vmor %vm1977, %vm1978
    %v1980 = vsel %vm1979, %v1971, %v1976
    %v1981 = vrsqrt.pop %v1970
    %v1982 = vmul.f32 %v1981, %v1970
    %v1983 = vmul.f32 %v1982, %v1981
    %v1984 = vmul.f32 0.5, %v1983
    %v1985 = vsub.f32 1.5, %v1984
    %v1986 = vmul.f32 %v1981, %v1985
    %vm1987 = vweird.f32 %v1970
    %vm1988 = vweird.f32 %v1981
    %vm1989 = vmor %vm1987, %vm1988
    %v1990 = vsel %vm1989, %v1981, %v1986
    %v1991 = vmul.f32 %v1957, %v1980
    %v1992 = vmul.f32 %v1958, %v1990
    %v1993 = vperm.slane %v1130, 2
    %v1994 = vmul.f32 %v1991, %v1993
    %v1995 = vmul.f32 %v1992, %v1993
    %v1996 = vperm.slane %v1130, 3
    %v1997 = vadd.f32 %v1994, %v1996
    %v1998 = vadd.f32 %v1995, %v1996
    %s1999 = scalar_lea.vmem %s4, 32
    %v2000 = vld [vmem:[%s1999] sm:$0xff]
    %v2001 = vld [vmem:[%s1999 + $0x8] sm:$0xff]
    %v2002 = vld [vmem:[%s1999 + $0x10] sm:$0xff]
    %v2003 = vld [vmem:[%s1999 + $0x18] sm:$0xff]
    %s2004 = scalar_lea.vmem %s7, 1
    %v2005 = vld [vmem:[%s2004] sm:$0x1]
    %v2007 = vperm.slane %v2005, 0
    %v2010 = vsel %vm151, %v1997, 0
    %v2013 = vsel %vm151, %v1998, 0
    %2015 = vmatpush.msra.mxu0 0.0
    %2016 = vmatpush.msra.mxu0 0.0
    %2017 = vmatpush.msra.mxu0 0.0
    %2018 = vmatpush.msra.mxu0 0.0
    %2019 = vmatpush.msra.mxu0 0.0
    %2020 = vmatpush.msra.mxu0 0.0
    %2021 = vmatpush.msra.mxu0 0.0
    %2022 = vmatpush.msra.mxu0 0.0
    %2023 = vmatpush.msra.mxu0 0.0
    %2024 = vmatpush.msra.mxu0 0.0
    %2025 = vmatpush.msra.mxu0 0.0
    %2026 = vmatpush.msra.mxu0 0.0
    %2027 = vmatpush.msra.mxu0 %v2003
    %2028 = vmatpush.msra.mxu0 %v2002
    %2029 = vmatpush.msra.mxu0 %v2001
    %2030 = vmatpush.msra.mxu0 %v2000
    %2031 = vmatmul.f32.gmra.mxu0 %v2010
    %v2032 = vpop.f32.mrf.mxu0
    %v2033 = vadd.f32 %v2007, %v2032
    %2034 = vmatmul.f32.gmra.mxu0 %v2013
    %v2035 = vpop.f32.mrf.mxu0
    %v2036 = vadd.f32 %v2007, %v2035
    %2037 = vdwg.mxu0
    %v2038 = vmax.f32 %v2033, 0.0
    %v2039 = vmax.f32 %v2036, 0.0
    %s2040 = scalar_lea.vmem %s5, 128
    %v2041 = vld [vmem:[%s2040] sm:$0xff]
    %v2042 = vld [vmem:[%s2040 + $0x8] sm:$0xff]
    %v2043 = vld [vmem:[%s2040 + $0x10] sm:$0xff]
    %v2044 = vld [vmem:[%s2040 + $0x18] sm:$0xff]
    %v2045 = vld [vmem:[%s2040 + $0x20] sm:$0xff]
    %v2046 = vld [vmem:[%s2040 + $0x28] sm:$0xff]
    %v2047 = vld [vmem:[%s2040 + $0x30] sm:$0xff]
    %v2048 = vld [vmem:[%s2040 + $0x38] sm:$0xff]
    %v2049 = vld [vmem:[%s2040 + $0x40] sm:$0xff]
    %v2050 = vld [vmem:[%s2040 + $0x48] sm:$0xff]
    %v2051 = vld [vmem:[%s2040 + $0x50] sm:$0xff]
    %v2052 = vld [vmem:[%s2040 + $0x58] sm:$0xff]
    %v2053 = vld [vmem:[%s2040 + $0x60] sm:$0xff]
    %v2054 = vld [vmem:[%s2040 + $0x68] sm:$0xff]
    %v2055 = vld [vmem:[%s2040 + $0x70] sm:$0xff]
    %v2056 = vld [vmem:[%s2040 + $0x78] sm:$0xff]
    %v2057 = vperm.slane %v1130, 1
    %2058 = vmatpush.msra.mxu0 %v2056
    %2059 = vmatpush.msra.mxu0 %v2055
    %2060 = vmatpush.msra.mxu0 %v2054
    %2061 = vmatpush.msra.mxu0 %v2053
    %2062 = vmatpush.msra.mxu0 %v2052
    %2063 = vmatpush.msra.mxu0 %v2051
    %2064 = vmatpush.msra.mxu0 %v2050
    %2065 = vmatpush.msra.mxu0 %v2049
    %2066 = vmatpush.msra.mxu0 %v2048
    %2067 = vmatpush.msra.mxu0 %v2047
    %2068 = vmatpush.msra.mxu0 %v2046
    %2069 = vmatpush.msra.mxu0 %v2045
    %2070 = vmatpush.msra.mxu0 %v2044
    %2071 = vmatpush.msra.mxu0 %v2043
    %2072 = vmatpush.msra.mxu0 %v2042
    %2073 = vmatpush.msra.mxu0 %v2041
    %2074 = vmatmul.f32.gmra.mxu0 %v2038
    %v2075 = vpop.f32.mrf.mxu0
    %v2076 = vadd.f32 %v2057, %v2075
    %2077 = vmatmul.f32.gmra.mxu0 %v2039
    %v2078 = vpop.f32.mrf.mxu0
    %v2079 = vadd.f32 %v2057, %v2078
    %2080 = vdwg.mxu0
    %v2081 = vadd.f32 %v2076, %v1997
    %v2082 = vadd.f32 %v2079, %v1998
    %v2083 = vsel %vm151, %v2081, 0.0
    %2084 = vadd.xlane.f32.xlu0 %v2083
    %v2085 = vpop.xlane.xlu0 %2084
    %v2086 = vsel %vm151, %v2082, 0.0
    %2087 = vadd.xlane.f32.xlu0 %v2086
    %v2088 = vpop.xlane.xlu0 %2087
    %v2089 = vmul.f32 %v2085, %v953
    %v2090 = vmul.f32 %v2088, %v953
    %v2091 = vsub.f32 %v2081, %v2089
    %v2092 = vsub.f32 %v2082, %v2090
    %v2093 = vmul.f32 %v2091, %v2091
    %v2094 = vmul.f32 %v2092, %v2092
    %v2095 = vsel %vm151, %v2093, 0.0
    %2096 = vadd.xlane.f32.xlu0 %v2095
    %v2097 = vpop.xlane.xlu0 %2096
    %v2098 = vsel %vm151, %v2094, 0.0
    %2099 = vadd.xlane.f32.xlu0 %v2098
    %v2100 = vpop.xlane.xlu0 %2099
    %v2101 = vmul.f32 %v2097, %v953
    %v2102 = vmul.f32 %v2100, %v953
    %v2103 = vadd.f32 %v2101, 1e-05
    %v2104 = vadd.f32 %v2102, 1e-05
    %v2105 = vrsqrt.pop %v2103
    %v2106 = vmul.f32 %v2105, %v2103
    %v2107 = vmul.f32 %v2106, %v2105
    %v2108 = vmul.f32 0.5, %v2107
    %v2109 = vsub.f32 1.5, %v2108
    %v2110 = vmul.f32 %v2105, %v2109
    %vm2111 = vweird.f32 %v2103
    %vm2112 = vweird.f32 %v2105
    %vm2113 = vmor %vm2111, %vm2112
    %v2114 = vsel %vm2113, %v2105, %v2110
    %v2115 = vrsqrt.pop %v2104
    %v2116 = vmul.f32 %v2115, %v2104
    %v2117 = vmul.f32 %v2116, %v2115
    %v2118 = vmul.f32 0.5, %v2117
    %v2119 = vsub.f32 1.5, %v2118
    %v2120 = vmul.f32 %v2115, %v2119
    %vm2121 = vweird.f32 %v2104
    %vm2122 = vweird.f32 %v2115
    %vm2123 = vmor %vm2121, %vm2122
    %v2124 = vsel %vm2123, %v2115, %v2120
    %v2125 = vmul.f32 %v2091, %v2114
    %v2126 = vmul.f32 %v2092, %v2124
    %v2127 = vperm.slane %v1130, 4
    %v2128 = vmul.f32 %v2125, %v2127
    %v2129 = vmul.f32 %v2126, %v2127
    %v2130 = vperm.slane %v1130, 5
    %v2131 = vadd.f32 %v2128, %v2130
    %v2132 = vadd.f32 %v2129, %v2130
    %v2133 = vlaneseq
    %v2134 = vshrl.u32 %v2133, 7
    %v2135 = vmul.u32 %v2134, 8
    %vm2136 = vcmp.ge.s32.totalorder %v40, %v2135
    %v2137 = vadd.s32 %v2134, 1
    %v2138 = vmul.u32 %v2137, 8
    %vm2139 = vcmp.lt.s32.totalorder %v40, %v2138
    %vm2140 = vmand %vm2136, %vm2139
    %v2141 = vsel %vm2140, 1, 0
    %v2142 = vcvt.s32.f32 %v2141
    %v2143 = vmul.f32 %v2142, 0.125
    %vm2144 = vcmask 130048
    %v2146 = vsel %vm2144, %v2143, 0
    %2148 = vmatpush.msra.mxu0 0.0
    %2149 = vmatpush.msra.mxu0 0.0
    %2150 = vmatpush.msra.mxu0 0.0
    %2151 = vmatpush.msra.mxu0 0.0
    %2152 = vmatpush.msra.mxu0 0.0
    %2153 = vmatpush.msra.mxu0 0.0
    %2154 = vmatpush.msra.mxu0 0.0
    %2155 = vmatpush.msra.mxu0 0.0
    %2156 = vmatpush.msra.mxu0 0.0
    %2157 = vmatpush.msra.mxu0 0.0
    %2158 = vmatpush.msra.mxu0 0.0
    %2159 = vmatpush.msra.mxu0 0.0
    %2160 = vmatpush.msra.mxu0 0.0
    %2161 = vmatpush.msra.mxu0 0.0
    %2162 = vmatpush.msra.mxu0 %v2132
    %2163 = vmatpush.msra.mxu0 %v2131
    %2164 = vmatmul.f32.gmra.mxu0 %v2146
    %v2165 = vpop.f32.mrf.mxu0
    %v2166 = vadd.f32 0.0, %v2165
    %2167 = vdwg.mxu0
    %v2168 = vld [vmem:[%s8] sm:$0xff]
    %v2169 = vld [vmem:[%s8 + $0x8] sm:$0xff]
    %v2170 = vld [vmem:[%s8 + $0x10] sm:$0xff]
    %v2171 = vld [vmem:[%s8 + $0x18] sm:$0xff]
    %v2172 = vld [vmem:[%s10] sm:$0x1]
    %v2173 = vperm.slane %v2172, 0
    %v2175 = vsel %vm151, %v2166, 0
    %2177 = vmatpush.msra.mxu0 0.0
    %2178 = vmatpush.msra.mxu0 0.0
    %2179 = vmatpush.msra.mxu0 0.0
    %2180 = vmatpush.msra.mxu0 0.0
    %2181 = vmatpush.msra.mxu0 0.0
    %2182 = vmatpush.msra.mxu0 0.0
    %2183 = vmatpush.msra.mxu0 0.0
    %2184 = vmatpush.msra.mxu0 0.0
    %2185 = vmatpush.msra.mxu0 0.0
    %2186 = vmatpush.msra.mxu0 0.0
    %2187 = vmatpush.msra.mxu0 0.0
    %2188 = vmatpush.msra.mxu0 0.0
    %2189 = vmatpush.msra.mxu0 %v2171
    %2190 = vmatpush.msra.mxu0 %v2170
    %2191 = vmatpush.msra.mxu0 %v2169
    %2192 = vmatpush.msra.mxu0 %v2168
    %2193 = vmatmul.f32.gmra.mxu0 %v2175
    %v2194 = vpop.f32.mrf.mxu0
    %v2195 = vadd.f32 %v2173, %v2194
    %2196 = vdwg.mxu0
    %v2197 = vmax.f32 %v2195, 0.0
    %v2198 = vld [vmem:[%s9] sm:$0xff]
    %v2199 = vld [vmem:[%s9 + $0x8] sm:$0xff]
    %v2200 = vld [vmem:[%s9 + $0x10] sm:$0xff]
    %v2201 = vld [vmem:[%s9 + $0x18] sm:$0xff]
    %v2202 = vld [vmem:[%s9 + $0x20] sm:$0xff]
    %v2203 = vld [vmem:[%s9 + $0x28] sm:$0xff]
    %v2204 = vld [vmem:[%s9 + $0x30] sm:$0xff]
    %v2205 = vld [vmem:[%s9 + $0x38] sm:$0xff]
    %v2206 = vld [vmem:[%s9 + $0x40] sm:$0xff]
    %v2207 = vld [vmem:[%s9 + $0x48] sm:$0xff]
    %v2208 = vld [vmem:[%s9 + $0x50] sm:$0xff]
    %v2209 = vld [vmem:[%s9 + $0x58] sm:$0xff]
    %v2210 = vld [vmem:[%s9 + $0x60] sm:$0xff]
    %v2211 = vld [vmem:[%s9 + $0x68] sm:$0xff]
    %v2212 = vld [vmem:[%s9 + $0x70] sm:$0xff]
    %v2213 = vld [vmem:[%s9 + $0x78] sm:$0xff]
    %v2214 = vld [vmem:[%s10 + $0x1] sm:$0x1]
    %v2215 = vperm.slane %v2214, 0
    %2216 = vmatpush.msra.mxu0 %v2213
    %2217 = vmatpush.msra.mxu0 %v2212
    %2218 = vmatpush.msra.mxu0 %v2211
    %2219 = vmatpush.msra.mxu0 %v2210
    %2220 = vmatpush.msra.mxu0 %v2209
    %2221 = vmatpush.msra.mxu0 %v2208
    %2222 = vmatpush.msra.mxu0 %v2207
    %2223 = vmatpush.msra.mxu0 %v2206
    %2224 = vmatpush.msra.mxu0 %v2205
    %2225 = vmatpush.msra.mxu0 %v2204
    %2226 = vmatpush.msra.mxu0 %v2203
    %2227 = vmatpush.msra.mxu0 %v2202
    %2228 = vmatpush.msra.mxu0 %v2201
    %2229 = vmatpush.msra.mxu0 %v2200
    %2230 = vmatpush.msra.mxu0 %v2199
    %2231 = vmatpush.msra.mxu0 %v2198
    %2232 = vmatmul.f32.gmra.mxu0 %v2197
    %v2233 = vpop.f32.mrf.mxu0
    %v2234 = vadd.f32 %v2215, %v2233
    %2235 = vdwg.mxu0
    %2236 = vst [vmem:[#allocation2] sm:$0xff] %v2197
    %s2237 = scalar_lea.vmem [#allocation2], 8
    %2238 = vst [vmem:[%s2237] sm:$0xff] %v2234
    // Predicated region
    $region46: #{tpu_custom_call.1} parent=1 // pred_check
      _
    $region47: #{tpu_custom_call.1} parent=1 // pred_check_branch
      %2240 = sbr.rel (0) target = $region49
    $region48: #{tpu_custom_call.1} parent=1 // pred_region
      %2242 = vsyncadd [#allocation3], 0
      %s2243 = sshll.u32 [#allocation2], 4
      %s2244 = int_to_ptr.vmem [resolvable:$true] %s2243
      %s2245 = sshll.u32 %s11, 4
      %s2246 = int_to_ptr.hbm [resolvable:$true] %s2245
      %2251 = dma.vmem_to_hbm [thread:$0]  %s2244, 256, %s2246, [#allocation3], 128, 128, 8
    $region49: #{tpu_custom_call.1} parent=1 // pred_fallthru
      _
    // Predicated region
    $region50: #{tpu_custom_call.1} parent=1 // pred_check
      _
    $region51: #{tpu_custom_call.1} parent=1 // pred_check_branch
      %2253 = sbr.rel (0) target = $region53
    $region52: #{tpu_custom_call.1} parent=1 // pred_region
      %2255 = dma.done [#allocation3], 256
    $region53: #{tpu_custom_call.1} parent=1 // pred_fallthru
      _
    %2256 = vsyncpa [#allocation3], 1

</llo_original>
